<compile_context>
chip_gen: v7x
topology: tpu7x:2x2x1
jax: 0.10.0
libtpu: 0.0.40
codegen_flags: <defaults>
</compile_context>

<pallas_src>
import functools

import jax
import jax.numpy as jnp
from jax import lax
from jax.experimental import pallas as pl
from jax.experimental.pallas import tpu as pltpu


BB = 8                         # batch rows per grid block (one sublane tile)
HP = 128                       # padded hidden dim  -> 4*HP = 512 gate columns
ATT = 256                      # attention_dim (already a multiple of 128)
D_IN = 256 + 96 + 96 + 96      # 544 = LSTM layer-0 input width
VMEM_LIMIT = 48 * 1024 * 1024  # explicit scoped-VMEM budget (safe on v5e/v6e/v7x)


def _round_up(x, m):
    return (x + m - 1) // m * m


# ----------------------------------------------------------------------------
# Kernel 1: single-layer LSTM over the full sequence, one batch block per grid
# step (time-major inside the kernel; input projection hoisted out of the loop).
# ----------------------------------------------------------------------------
def lstm_kernel(x_ref, wih_ref, whh_ref, b_ref, out_ref, gx_sc, h_sc, c_sc,
                *, unroll):
    # x_ref  : [T, BB, D]    bf16   (time-major input block, already tanh'd)
    # wih_ref: [D, 4*HP]     bf16   (gate-padded, order i,f,g,o)
    # whh_ref: [HP, 4*HP]    bf16
    # b_ref  : [1, 4*HP]     f32    (b_ih + b_hh, gate-padded)
    # out_ref: [T, BB, HP]   bf16
    # gx_sc  : [T, BB, 4*HP] f32 scratch (hoisted input projection)
    # h_sc/c_sc: [BB, HP]    f32 scratch (hidden / cell state)
    T = x_ref.shape[0]

    # --- hoisted input projection: one big MXU matmul over all timesteps ---
    gx_sc[...] = (
        jnp.einsum("tbd,dg->tbg", x_ref[...], wih_ref[...],
                   preferred_element_type=jnp.float32)
        + b_ref[...]
    )

    h_sc[...] = jnp.zeros_like(h_sc)
    c_sc[...] = jnp.zeros_like(c_sc)
    whh = whh_ref[...]

    def step(t, carry):
        gates = gx_sc[t] + jnp.dot(
            h_sc[...].astype(jnp.bfloat16), whh,
            preferred_element_type=jnp.float32)                # [BB, 4*HP]
        i = jax.nn.sigmoid(gates[:, 0 * HP:1 * HP])            # lane-aligned
        f = jax.nn.sigmoid(gates[:, 1 * HP:2 * HP])
        g = jnp.tanh(gates[:, 2 * HP:3 * HP])
        o = jax.nn.sigmoid(gates[:, 3 * HP:4 * HP])
        c = f * c_sc[...] + i * g
        h = o * jnp.tanh(c)
        c_sc[...] = c
        h_sc[...] = h
        out_ref[t] = h.astype(out_ref.dtype)
        return carry

    lax.fori_loop(0, T, step, 0, unroll=unroll)


def run_lstm(x_tm, w_ih, w_hh, b):
    # x_tm: [T, B_pad, D] bf16 (time-major)  ->  [T, B_pad, HP] bf16
    T, B_pad, D = x_tm.shape
    assert B_pad % BB == 0
    nb = B_pad // BB
    if T <= 32:
        unroll = True
    elif T % 8 == 0:
        unroll = 8
    else:
        unroll = 1
    # TODO(synk): for very long sequences, additionally tile the time axis
    # (carry h/c in scratch across grid steps) instead of holding the whole
    # [T, BB, D] block in VMEM.
    return pl.pallas_call(
        functools.partial(lstm_kernel, unroll=unroll),
        out_shape=jax.ShapeDtypeStruct((T, B_pad, HP), jnp.bfloat16),
        grid=(nb,),
        in_specs=[
            pl.BlockSpec((T, BB, D), lambda j: (0, j, 0)),       # x block
            pl.BlockSpec((D, 4 * HP), lambda j: (0, 0)),         # W_ih
            pl.BlockSpec((HP, 4 * HP), lambda j: (0, 0)),        # W_hh
            pl.BlockSpec((1, 4 * HP), lambda j: (0, 0)),         # bias
        ],
        out_specs=pl.BlockSpec((T, BB, HP), lambda j: (0, j, 0)),
        scratch_shapes=[
            pltpu.VMEM((T, BB, 4 * HP), jnp.float32),            # gx
            pltpu.VMEM((BB, HP), jnp.float32),                   # h
            pltpu.VMEM((BB, HP), jnp.float32),                   # c
        ],
        compiler_params=pltpu.CompilerParams(
            dimension_semantics=("parallel",),
            vmem_limit_bytes=VMEM_LIMIT,
        ),
    )(x_tm, w_ih, w_hh, b)


# ----------------------------------------------------------------------------
# Kernel 2: attention module + final fc + sigmoid, one batch block per grid
# step.  Consumes the LSTM's time-major layout directly (relayout in VMEM).
# ----------------------------------------------------------------------------
def attn_fc_kernel(h_ref, wm_ref, bm_ref, ws_ref, wc_ref, wh_ref, bfc_ref,
                   res_ref):
    # h_ref : [T, BB, HP] bf16 (lstm output block, time-major)
    # wm_ref: [HP, ATT] bf16   bm_ref: [1, ATT] f32   ws_ref: [1, ATT] f32
    # wc_ref: [HP, OP]  bf16   (fc rows multiplying the cum-attention part)
    # wh_ref: [HP, OP]  bf16   (fc rows multiplying the lstm-output part)
    # bfc_ref:[1, OP]   f32
    # res_ref:[BB, T, OP] f32
    h = jnp.transpose(h_ref[...], (1, 0, 2))                 # [BB, T, HP] bf16
    T = h.shape[1]

    att = jnp.tanh(
        jnp.einsum("bth,ha->bta", h, wm_ref[...],
                   preferred_element_type=jnp.float32) + bm_ref[...])
    s = jnp.sum(att * ws_ref[...], axis=-1, keepdims=True)   # [BB, T, 1]

    # softmax over the time axis (dim=1)
    m = jnp.max(s, axis=1, keepdims=True)
    e = jnp.exp(s - m)
    alphas = e / jnp.sum(e, axis=1, keepdims=True)           # [BB, T, 1]

    attn = (alphas * h.astype(jnp.float32)).astype(jnp.bfloat16)   # [BB, T, HP]

    # cumsum(dim=1) - self  ==  strict-lower-triangular matmul over time.
    # Mask generated in-kernel (no [T,T] HBM input).
    ti = lax.broadcasted_iota(jnp.int32, (T, T), 0)
    tj = lax.broadcasted_iota(jnp.int32, (T, T), 1)
    tri = (ti > tj).astype(jnp.bfloat16)                     # tri[t, s] = (s < t)

    cum1 = jnp.einsum("ts,bsh->bth", tri, attn,
                      preferred_element_type=jnp.float32)    # [BB, T, HP]

    # final = concat([cum1, h], -1) @ W_fc + b_fc  (W_fc split to avoid concat)
    logits = (
        jnp.einsum("bth,ho->bto", cum1.astype(jnp.bfloat16), wc_ref[...],
                   preferred_element_type=jnp.float32)
        + jnp.einsum("bth,ho->bto", h, wh_ref[...],
                     preferred_element_type=jnp.float32)
        + bfc_ref[...]
    )
    res_ref[...] = jax.nn.sigmoid(logits)


def run_attn_fc(h_tm, wm, bm, ws, wc, wh, bfc):
    # h_tm: [T, B_pad, HP] bf16 (time-major)  ->  [B_pad, T, OP] f32
    T, B_pad, _ = h_tm.shape
    assert B_pad % BB == 0
    nb = B_pad // BB
    OP = wc.shape[1]
    return pl.pallas_call(
        attn_fc_kernel,
        out_shape=jax.ShapeDtypeStruct((B_pad, T, OP), jnp.float32),
        grid=(nb,),
        in_specs=[
            pl.BlockSpec((T, BB, HP), lambda j: (0, j, 0)),
            pl.BlockSpec((HP, ATT), lambda j: (0, 0)),
            pl.BlockSpec((1, ATT), lambda j: (0, 0)),
            pl.BlockSpec((1, ATT), lambda j: (0, 0)),
            pl.BlockSpec((HP, OP), lambda j: (0, 0)),
            pl.BlockSpec((HP, OP), lambda j: (0, 0)),
            pl.BlockSpec((1, OP), lambda j: (0, 0)),
        ],
        out_specs=pl.BlockSpec((BB, T, OP), lambda j: (j, 0, 0)),
        compiler_params=pltpu.CompilerParams(
            dimension_semantics=("parallel",),
            vmem_limit_bytes=VMEM_LIMIT,
        ),
    )(h_tm, wm, bm, ws, wc, wh, bfc)


# ----------------------------------------------------------------------------
# Parameters: generated pre-padded (lane-aligned gates, zero padding) so the
# padded lanes stay exactly zero through the whole network.
# ----------------------------------------------------------------------------
def init_params(key, input_dim, hidden_dim, layer_dim, output_dim,
                attention_dim=ATT):
    H = hidden_dim
    OP = _round_up(max(output_dim, 1), 128)
    ks = jax.random.split(key, 16)
    s = 0.1

    def n(k, shape):
        return (s * jax.random.normal(k, shape)).astype(jnp.float32)

    def pad_gate_cols(w, h):                 # [d, 4h] -> [d, 4*HP]
        out = jnp.zeros((w.shape[0], 4 * HP), jnp.float32)
        for g in range(4):
            out = out.at[:, g * HP:g * HP + h].set(w[:, g * h:(g + 1) * h])
        return out

    def pad_rows(w, rows):                   # [r, c] -> [rows, c]
        return jnp.zeros((rows, w.shape[1]), w.dtype).at[:w.shape[0], :].set(w)

    p = {}
    # embeddings (last row zeroed, as in the PyTorch __init__)
    p["skill_emb"] = n(ks[0], (input_dim + 1, 256)).at[-1].set(0.0)
    p["ans_emb"] = n(ks[1], (2, 96)).at[-1].set(0.0)
    p["diff_emb"] = n(ks[2], (12, 96)).at[-1].set(0.0)
    p["abili_emb"] = n(ks[3], (9, 96)).at[-1].set(0.0)

    # LSTM layers (PyTorch gate order i,f,g,o); padded to lane-aligned gates.
    p["lstm"] = []
    for layer in range(layer_dim):
        kk = jax.random.split(ks[4 + layer], 3)
        d = D_IN if layer == 0 else H
        d_pad = D_IN if layer == 0 else HP
        w_ih = pad_rows(pad_gate_cols(n(kk[0], (d, 4 * H)), H), d_pad)
        w_hh = pad_rows(pad_gate_cols(n(kk[1], (H, 4 * H)), H), HP)
        bias = pad_gate_cols(n(kk[2], (1, 4 * H)), H)   # b_ih + b_hh combined
        p["lstm"].append({
            "w_ih": w_ih.astype(jnp.bfloat16),
            "w_hh": w_hh.astype(jnp.bfloat16),
            "b": bias,                                   # f32
        })

    # attention + output head (zero rows beyond H, zero cols beyond output_dim)
    p["mlp_w"] = pad_rows(n(ks[10], (H, attention_dim)), HP).astype(jnp.bfloat16)
    p["mlp_b"] = n(ks[11], (1, attention_dim))
    p["sim_w"] = n(ks[12], (1, attention_dim))           # Linear(A, 1, bias=False)
    fc_w = n(ks[13], (2 * H, output_dim))
    fc_b = n(ks[14], (1, output_dim))
    wc = jnp.zeros((HP, OP), jnp.float32).at[:H, :output_dim].set(fc_w[:H])
    wh = jnp.zeros((HP, OP), jnp.float32).at[:H, :output_dim].set(fc_w[H:])
    p["fc_wc"] = wc.astype(jnp.bfloat16)
    p["fc_wh"] = wh.astype(jnp.bfloat16)
    p["fc_b"] = jnp.zeros((1, OP), jnp.float32).at[:, :output_dim].set(fc_b)
    return p


# ----------------------------------------------------------------------------
# Forward: embedding glue in JAX, hot path in the two Pallas kernels.
# ----------------------------------------------------------------------------
def eernn_forward(params, x, input_dim, hidden_dim, layer_dim, output_dim):
    # x: [B, T, input_dim + 4] float; last 4 cols: [ans, skill, abili, dif]
    del input_dim, hidden_dim  # baked into the (padded) parameters
    B, T, _ = x.shape

    ans = x[:, :, -4].astype(jnp.int32)
    skill = x[:, :, -3].astype(jnp.int32)
    abili = x[:, :, -2].astype(jnp.int32)
    dif = x[:, :, -1].astype(jnp.int32)

    skill_e = jnp.take(params["skill_emb"], skill, axis=0)   # [B,T,256]
    ans_e = jnp.take(params["ans_emb"], ans, axis=0)         # [B,T,96]
    diff_e = jnp.take(params["diff_emb"], dif, axis=0)       # [B,T,96]
    abili_e = jnp.take(params["abili_emb"], abili, axis=0)   # [B,T,96]

    skill_answer = jnp.concatenate([skill_e, ans_e], axis=2)
    answer_skill = jnp.concatenate([ans_e, skill_e], axis=2)
    answer = jnp.broadcast_to(ans[:, :, None], skill_answer.shape)
    skill_answer_emb = jnp.where(answer == 1, skill_answer, answer_skill)
    new_x = jnp.concatenate([skill_answer_emb, diff_e, abili_e], axis=2)  # [B,T,544]
    new_x = jnp.tanh(new_x)                                   # f32 tanh, then bf16

    # pad batch to a multiple of BB, go time-major + bf16 for the LSTM stack
    B_pad = _round_up(B, BB)
    if B_pad != B:
        new_x = jnp.pad(new_x, ((0, B_pad - B), (0, 0), (0, 0)))
    h_tm = jnp.transpose(new_x, (1, 0, 2)).astype(jnp.bfloat16)   # [T,B_pad,544]

    for layer in range(layer_dim):
        lw = params["lstm"][layer]
        h_tm = run_lstm(h_tm, lw["w_ih"], lw["w_hh"], lw["b"])    # [T,B_pad,HP]

    # attention + fc kernel consumes the LSTM's time-major layout directly
    res = run_attn_fc(h_tm, params["mlp_w"], params["mlp_b"], params["sim_w"],
                      params["fc_wc"], params["fc_wh"], params["fc_b"])
    return res[:B, :T - 1, :output_dim]                            # [B, T-1, O]


if __name__ == "__main__":
    # small, forward-consistent shapes
    B, T = 2, 8
    input_dim = 16          # number of skills
    hidden_dim = 32
    layer_dim = 1
    output_dim = 16

    key = jax.random.PRNGKey(0)
    kp, kf, ka, ks, kab, kd = jax.random.split(key, 6)

    params = init_params(kp, input_dim, hidden_dim, layer_dim, output_dim)

    # build x: first input_dim cols are arbitrary floats (unused downstream),
    # last 4 cols are integer-valued: [ans, skill, abili, dif]
    feats = jax.random.normal(kf, (B, T, input_dim), dtype=jnp.float32)
    ans = jax.random.randint(ka, (B, T, 1), 0, 2).astype(jnp.float32)
    skill = jax.random.randint(ks, (B, T, 1), 0, input_dim).astype(jnp.float32)
    abili = jax.random.randint(kab, (B, T, 1), 0, 8).astype(jnp.float32)
    dif = jax.random.randint(kd, (B, T, 1), 0, 11).astype(jnp.float32)
    x = jnp.concatenate([feats, ans, skill, abili, dif], axis=2)   # [B,T,20]

    fwd = jax.jit(functools.partial(
        eernn_forward, input_dim=input_dim, hidden_dim=hidden_dim,
        layer_dim=layer_dim, output_dim=output_dim))
    res = fwd(params, x)
    jax.block_until_ready(res)

    assert res.shape == (B, T - 1, output_dim)
    assert bool(jnp.all(jnp.isfinite(res)))
    print("KERNEL_OK")
</pallas_src>

<mosaic_0001>
module attributes {stable_mosaic.version = 11 : i64} {
  func.func @lstm_kernel(%arg0: i32, %arg1: memref<8x8x544xbf16, #tpu.memory_space<vmem>>, %arg2: memref<544x512xbf16, #tpu.memory_space<vmem>>, %arg3: memref<128x512xbf16, #tpu.memory_space<vmem>>, %arg4: memref<1x512xf32, #tpu.memory_space<vmem>>, %arg5: memref<8x8x128xbf16, #tpu.memory_space<vmem>>, %arg6: memref<8x8x512xf32, #tpu.memory_space<vmem>>, %arg7: memref<8x128xf32, #tpu.memory_space<vmem>>, %arg8: memref<8x128xf32, #tpu.memory_space<vmem>>) attributes {dimension_semantics = [#tpu.dimension_semantics<parallel>], iteration_bounds = array<i64: 1>, scalar_prefetch = 0 : i64, scratch_operands = 3 : i64, tpu.core_type = #tpu.core_type<tc>, window_params = [{transform_indices = @transform_0, window_bounds = array<i64: 8, 8, 544>}, {pipeline_mode = #tpu.pipeline_mode<synchronous>, transform_indices = @transform_1, window_bounds = array<i64: 544, 512>}, {pipeline_mode = #tpu.pipeline_mode<synchronous>, transform_indices = @transform_2, window_bounds = array<i64: 128, 512>}, {pipeline_mode = #tpu.pipeline_mode<synchronous>, transform_indices = @transform_3, window_bounds = array<i64: 1, 512>}, {transform_indices = @transform_4, window_bounds = array<i64: 8, 8, 128>}]} {
    %c0 = arith.constant 0 : index
    %c0_0 = arith.constant 0 : index
    %c0_1 = arith.constant 0 : index
    %0 = vector.load %arg1[%c0, %c0_0, %c0_1] : memref<8x8x544xbf16, #tpu.memory_space<vmem>>, vector<8x8x544xbf16>
    %c0_2 = arith.constant 0 : index
    %c0_3 = arith.constant 0 : index
    %1 = vector.load %arg2[%c0_2, %c0_3] : memref<544x512xbf16, #tpu.memory_space<vmem>>, vector<544x512xbf16>
    "tpu.trace_start"() <{level = 10 : i32, message = "tbd,dg->tbg"}> : () -> ()
    %cst = arith.constant dense<0.000000e+00> : vector<8x8x512xf32>
    %2 = tpu.matmul %0, %1, %cst {dimension_numbers = #tpu.dot_dimension_numbers<[2], [0], [0, 1], [1], [0, 0, 0, 1, 1, 1], [], []>} : vector<8x8x544xbf16>, vector<544x512xbf16>, vector<8x8x512xf32> -> vector<8x8x512xf32>
    "tpu.trace_stop"() : () -> ()
    %c0_4 = arith.constant 0 : index
    %c0_5 = arith.constant 0 : index
    %3 = vector.load %arg4[%c0_4, %c0_5] : memref<1x512xf32, #tpu.memory_space<vmem>>, vector<1x512xf32>
    %4 = vector.shape_cast %3 : vector<1x512xf32> to vector<1x1x512xf32>
    %5 = vector.broadcast %4 : vector<1x1x512xf32> to vector<8x8x512xf32>
    %6 = arith.addf %2, %5 : vector<8x8x512xf32>
    %c0_6 = arith.constant 0 : index
    %c0_7 = arith.constant 0 : index
    %c0_8 = arith.constant 0 : index
    %7 = vector.load %arg6[%c0_6, %c0_7, %c0_8] : memref<8x8x512xf32, #tpu.memory_space<vmem>>, vector<8x8x512xf32>
    tpu.vector_store %arg6[%c0_6, %c0_7, %c0_8], %6 {strides = array<i32>} : memref<8x8x512xf32, #tpu.memory_space<vmem>>, vector<8x8x512xf32>,
    %cst_9 = arith.constant 0.000000e+00 : f32
    %8 = vector.broadcast %cst_9 : f32 to vector<8x128xf32>
    %c0_10 = arith.constant 0 : index
    %c0_11 = arith.constant 0 : index
    %9 = vector.load %arg7[%c0_10, %c0_11] : memref<8x128xf32, #tpu.memory_space<vmem>>, vector<8x128xf32>
    tpu.vector_store %arg7[%c0_10, %c0_11], %8 {strides = array<i32>} : memref<8x128xf32, #tpu.memory_space<vmem>>, vector<8x128xf32>,
    %cst_12 = arith.constant 0.000000e+00 : f32
    %10 = vector.broadcast %cst_12 : f32 to vector<8x128xf32>
    %c0_13 = arith.constant 0 : index
    %c0_14 = arith.constant 0 : index
    %11 = vector.load %arg8[%c0_13, %c0_14] : memref<8x128xf32, #tpu.memory_space<vmem>>, vector<8x128xf32>
    tpu.vector_store %arg8[%c0_13, %c0_14], %10 {strides = array<i32>} : memref<8x128xf32, #tpu.memory_space<vmem>>, vector<8x128xf32>,
    %c0_15 = arith.constant 0 : index
    %c0_16 = arith.constant 0 : index
    %12 = vector.load %arg3[%c0_15, %c0_16] : memref<128x512xbf16, #tpu.memory_space<vmem>>, vector<128x512xbf16>
    %c0_i32 = arith.constant 0 : i32
    %13 = arith.index_cast %c0_i32 : i32 to index
    %c0_17 = arith.constant 0 : index
    %c0_18 = arith.constant 0 : index
    %14 = vector.load %arg6[%13, %c0_17, %c0_18] : memref<8x8x512xf32, #tpu.memory_space<vmem>>, vector<1x8x512xf32>
    %15 = vector.shape_cast %14 : vector<1x8x512xf32> to vector<8x512xf32>
    %c0_19 = arith.constant 0 : index
    %c0_20 = arith.constant 0 : index
    %16 = vector.load %arg7[%c0_19, %c0_20] : memref<8x128xf32, #tpu.memory_space<vmem>>, vector<8x128xf32>
    %17 = arith.truncf %16 : vector<8x128xf32> to vector<8x128xbf16>
    %cst_21 = arith.constant dense<0.000000e+00> : vector<8x512xf32>
    %18 = tpu.matmul %17, %12, %cst_21 {dimension_numbers = #tpu.dot_dimension_numbers<[1], [0], [0], [1], [0, 0, 1, 1], [], []>} : vector<8x128xbf16>, vector<128x512xbf16>, vector<8x512xf32> -> vector<8x512xf32>
    %19 = arith.addf %15, %18 : vector<8x512xf32>
    %20 = vector.extract_strided_slice %19 {offsets = [0, 0], sizes = [8, 128], strides = [1, 1]} : vector<8x512xf32> to vector<8x128xf32>
    %21 = arith.negf %20 : vector<8x128xf32>
    %22 = math.exp %21 : vector<8x128xf32>
    %cst_22 = arith.constant 1.000000e+00 : f32
    %23 = vector.broadcast %cst_22 : f32 to vector<8x128xf32>
    %24 = arith.addf %23, %22 : vector<8x128xf32>
    %25 = arith.divf %23, %24 : vector<8x128xf32>
    %26 = vector.extract_strided_slice %19 {offsets = [0, 128], sizes = [8, 128], strides = [1, 1]} : vector<8x512xf32> to vector<8x128xf32>
    %27 = arith.negf %26 : vector<8x128xf32>
    %28 = math.exp %27 : vector<8x128xf32>
    %cst_23 = arith.constant 1.000000e+00 : f32
    %29 = vector.broadcast %cst_23 : f32 to vector<8x128xf32>
    %30 = arith.addf %29, %28 : vector<8x128xf32>
    %31 = arith.divf %29, %30 : vector<8x128xf32>
    %32 = vector.extract_strided_slice %19 {offsets = [0, 256], sizes = [8, 128], strides = [1, 1]} : vector<8x512xf32> to vector<8x128xf32>
    %33 = math.tanh %32 : vector<8x128xf32>
    %34 = vector.extract_strided_slice %19 {offsets = [0, 384], sizes = [8, 128], strides = [1, 1]} : vector<8x512xf32> to vector<8x128xf32>
    %35 = arith.negf %34 : vector<8x128xf32>
    %36 = math.exp %35 : vector<8x128xf32>
    %cst_24 = arith.constant 1.000000e+00 : f32
    %37 = vector.broadcast %cst_24 : f32 to vector<8x128xf32>
    %38 = arith.addf %37, %36 : vector<8x128xf32>
    %39 = arith.divf %37, %38 : vector<8x128xf32>
    %c0_25 = arith.constant 0 : index
    %c0_26 = arith.constant 0 : index
    %40 = vector.load %arg8[%c0_25, %c0_26] : memref<8x128xf32, #tpu.memory_space<vmem>>, vector<8x128xf32>
    %41 = arith.mulf %31, %40 : vector<8x128xf32>
    %42 = arith.mulf %25, %33 : vector<8x128xf32>
    %43 = arith.addf %41, %42 : vector<8x128xf32>
    %44 = math.tanh %43 : vector<8x128xf32>
    %45 = arith.mulf %39, %44 : vector<8x128xf32>
    %c0_27 = arith.constant 0 : index
    %c0_28 = arith.constant 0 : index
    %46 = vector.load %arg8[%c0_27, %c0_28] : memref<8x128xf32, #tpu.memory_space<vmem>>, vector<8x128xf32>
    tpu.vector_store %arg8[%c0_27, %c0_28], %43 {strides = array<i32>} : memref<8x128xf32, #tpu.memory_space<vmem>>, vector<8x128xf32>,
    %c0_29 = arith.constant 0 : index
    %c0_30 = arith.constant 0 : index
    %47 = vector.load %arg7[%c0_29, %c0_30] : memref<8x128xf32, #tpu.memory_space<vmem>>, vector<8x128xf32>
    tpu.vector_store %arg7[%c0_29, %c0_30], %45 {strides = array<i32>} : memref<8x128xf32, #tpu.memory_space<vmem>>, vector<8x128xf32>,
    %48 = arith.truncf %45 : vector<8x128xf32> to vector<8x128xbf16>
    %49 = arith.index_cast %c0_i32 : i32 to index
    %c0_31 = arith.constant 0 : index
    %c0_32 = arith.constant 0 : index
    %50 = vector.load %arg5[%49, %c0_31, %c0_32] : memref<8x8x128xbf16, #tpu.memory_space<vmem>>, vector<1x8x128xbf16>
    %51 = vector.shape_cast %50 : vector<1x8x128xbf16> to vector<8x128xbf16>
    %52 = vector.shape_cast %48 : vector<8x128xbf16> to vector<1x8x128xbf16>
    tpu.vector_store %arg5[%49, %c0_31, %c0_32], %52 {strides = array<i32>} : memref<8x8x128xbf16, #tpu.memory_space<vmem>>, vector<1x8x128xbf16>,
    %c1_i32 = arith.constant 1 : i32
    %53 = arith.index_cast %c1_i32 : i32 to index
    %c0_33 = arith.constant 0 : index
    %c0_34 = arith.constant 0 : index
    %54 = vector.load %arg6[%53, %c0_33, %c0_34] : memref<8x8x512xf32, #tpu.memory_space<vmem>>, vector<1x8x512xf32>
    %55 = vector.shape_cast %54 : vector<1x8x512xf32> to vector<8x512xf32>
    %c0_35 = arith.constant 0 : index
    %c0_36 = arith.constant 0 : index
    %56 = vector.load %arg7[%c0_35, %c0_36] : memref<8x128xf32, #tpu.memory_space<vmem>>, vector<8x128xf32>
    %57 = arith.truncf %56 : vector<8x128xf32> to vector<8x128xbf16>
    %cst_37 = arith.constant dense<0.000000e+00> : vector<8x512xf32>
    %58 = tpu.matmul %57, %12, %cst_37 {dimension_numbers = #tpu.dot_dimension_numbers<[1], [0], [0], [1], [0, 0, 1, 1], [], []>} : vector<8x128xbf16>, vector<128x512xbf16>, vector<8x512xf32> -> vector<8x512xf32>
    %59 = arith.addf %55, %58 : vector<8x512xf32>
    %60 = vector.extract_strided_slice %59 {offsets = [0, 0], sizes = [8, 128], strides = [1, 1]} : vector<8x512xf32> to vector<8x128xf32>
    %61 = arith.negf %60 : vector<8x128xf32>
    %62 = math.exp %61 : vector<8x128xf32>
    %cst_38 = arith.constant 1.000000e+00 : f32
    %63 = vector.broadcast %cst_38 : f32 to vector<8x128xf32>
    %64 = arith.addf %63, %62 : vector<8x128xf32>
    %65 = arith.divf %63, %64 : vector<8x128xf32>
    %66 = vector.extract_strided_slice %59 {offsets = [0, 128], sizes = [8, 128], strides = [1, 1]} : vector<8x512xf32> to vector<8x128xf32>
    %67 = arith.negf %66 : vector<8x128xf32>
    %68 = math.exp %67 : vector<8x128xf32>
    %cst_39 = arith.constant 1.000000e+00 : f32
    %69 = vector.broadcast %cst_39 : f32 to vector<8x128xf32>
    %70 = arith.addf %69, %68 : vector<8x128xf32>
    %71 = arith.divf %69, %70 : vector<8x128xf32>
    %72 = vector.extract_strided_slice %59 {offsets = [0, 256], sizes = [8, 128], strides = [1, 1]} : vector<8x512xf32> to vector<8x128xf32>
    %73 = math.tanh %72 : vector<8x128xf32>
    %74 = vector.extract_strided_slice %59 {offsets = [0, 384], sizes = [8, 128], strides = [1, 1]} : vector<8x512xf32> to vector<8x128xf32>
    %75 = arith.negf %74 : vector<8x128xf32>
    %76 = math.exp %75 : vector<8x128xf32>
    %cst_40 = arith.constant 1.000000e+00 : f32
    %77 = vector.broadcast %cst_40 : f32 to vector<8x128xf32>
    %78 = arith.addf %77, %76 : vector<8x128xf32>
    %79 = arith.divf %77, %78 : vector<8x128xf32>
    %c0_41 = arith.constant 0 : index
    %c0_42 = arith.constant 0 : index
    %80 = vector.load %arg8[%c0_41, %c0_42] : memref<8x128xf32, #tpu.memory_space<vmem>>, vector<8x128xf32>
    %81 = arith.mulf %71, %80 : vector<8x128xf32>
    %82 = arith.mulf %65, %73 : vector<8x128xf32>
    %83 = arith.addf %81, %82 : vector<8x128xf32>
    %84 = math.tanh %83 : vector<8x128xf32>
    %85 = arith.mulf %79, %84 : vector<8x128xf32>
    %c0_43 = arith.constant 0 : index
    %c0_44 = arith.constant 0 : index
    %86 = vector.load %arg8[%c0_43, %c0_44] : memref<8x128xf32, #tpu.memory_space<vmem>>, vector<8x128xf32>
    tpu.vector_store %arg8[%c0_43, %c0_44], %83 {strides = array<i32>} : memref<8x128xf32, #tpu.memory_space<vmem>>, vector<8x128xf32>,
    %c0_45 = arith.constant 0 : index
    %c0_46 = arith.constant 0 : index
    %87 = vector.load %arg7[%c0_45, %c0_46] : memref<8x128xf32, #tpu.memory_space<vmem>>, vector<8x128xf32>
    tpu.vector_store %arg7[%c0_45, %c0_46], %85 {strides = array<i32>} : memref<8x128xf32, #tpu.memory_space<vmem>>, vector<8x128xf32>,
    %88 = arith.truncf %85 : vector<8x128xf32> to vector<8x128xbf16>
    %89 = arith.index_cast %c1_i32 : i32 to index
    %c0_47 = arith.constant 0 : index
    %c0_48 = arith.constant 0 : index
    %90 = vector.load %arg5[%89, %c0_47, %c0_48] : memref<8x8x128xbf16, #tpu.memory_space<vmem>>, vector<1x8x128xbf16>
    %91 = vector.shape_cast %90 : vector<1x8x128xbf16> to vector<8x128xbf16>
    %92 = vector.shape_cast %88 : vector<8x128xbf16> to vector<1x8x128xbf16>
    tpu.vector_store %arg5[%89, %c0_47, %c0_48], %92 {strides = array<i32>} : memref<8x8x128xbf16, #tpu.memory_space<vmem>>, vector<1x8x128xbf16>,
    %c2_i32 = arith.constant 2 : i32
    %93 = arith.index_cast %c2_i32 : i32 to index
    %c0_49 = arith.constant 0 : index
    %c0_50 = arith.constant 0 : index
    %94 = vector.load %arg6[%93, %c0_49, %c0_50] : memref<8x8x512xf32, #tpu.memory_space<vmem>>, vector<1x8x512xf32>
    %95 = vector.shape_cast %94 : vector<1x8x512xf32> to vector<8x512xf32>
    %c0_51 = arith.constant 0 : index
    %c0_52 = arith.constant 0 : index
    %96 = vector.load %arg7[%c0_51, %c0_52] : memref<8x128xf32, #tpu.memory_space<vmem>>, vector<8x128xf32>
    %97 = arith.truncf %96 : vector<8x128xf32> to vector<8x128xbf16>
    %cst_53 = arith.constant dense<0.000000e+00> : vector<8x512xf32>
    %98 = tpu.matmul %97, %12, %cst_53 {dimension_numbers = #tpu.dot_dimension_numbers<[1], [0], [0], [1], [0, 0, 1, 1], [], []>} : vector<8x128xbf16>, vector<128x512xbf16>, vector<8x512xf32> -> vector<8x512xf32>
    %99 = arith.addf %95, %98 : vector<8x512xf32>
    %100 = vector.extract_strided_slice %99 {offsets = [0, 0], sizes = [8, 128], strides = [1, 1]} : vector<8x512xf32> to vector<8x128xf32>
    %101 = arith.negf %100 : vector<8x128xf32>
    %102 = math.exp %101 : vector<8x128xf32>
    %cst_54 = arith.constant 1.000000e+00 : f32
    %103 = vector.broadcast %cst_54 : f32 to vector<8x128xf32>
    %104 = arith.addf %103, %102 : vector<8x128xf32>
    %105 = arith.divf %103, %104 : vector<8x128xf32>
    %106 = vector.extract_strided_slice %99 {offsets = [0, 128], sizes = [8, 128], strides = [1, 1]} : vector<8x512xf32> to vector<8x128xf32>
    %107 = arith.negf %106 : vector<8x128xf32>
    %108 = math.exp %107 : vector<8x128xf32>
    %cst_55 = arith.constant 1.000000e+00 : f32
    %109 = vector.broadcast %cst_55 : f32 to vector<8x128xf32>
    %110 = arith.addf %109, %108 : vector<8x128xf32>
    %111 = arith.divf %109, %110 : vector<8x128xf32>
    %112 = vector.extract_strided_slice %99 {offsets = [0, 256], sizes = [8, 128], strides = [1, 1]} : vector<8x512xf32> to vector<8x128xf32>
    %113 = math.tanh %112 : vector<8x128xf32>
    %114 = vector.extract_strided_slice %99 {offsets = [0, 384], sizes = [8, 128], strides = [1, 1]} : vector<8x512xf32> to vector<8x128xf32>
    %115 = arith.negf %114 : vector<8x128xf32>
    %116 = math.exp %115 : vector<8x128xf32>
    %cst_56 = arith.constant 1.000000e+00 : f32
    %117 = vector.broadcast %cst_56 : f32 to vector<8x128xf32>
    %118 = arith.addf %117, %116 : vector<8x128xf32>
    %119 = arith.divf %117, %118 : vector<8x128xf32>
    %c0_57 = arith.constant 0 : index
    %c0_58 = arith.constant 0 : index
    %120 = vector.load %arg8[%c0_57, %c0_58] : memref<8x128xf32, #tpu.memory_space<vmem>>, vector<8x128xf32>
    %121 = arith.mulf %111, %120 : vector<8x128xf32>
    %122 = arith.mulf %105, %113 : vector<8x128xf32>
    %123 = arith.addf %121, %122 : vector<8x128xf32>
    %124 = math.tanh %123 : vector<8x128xf32>
    %125 = arith.mulf %119, %124 : vector<8x128xf32>
    %c0_59 = arith.constant 0 : index
    %c0_60 = arith.constant 0 : index
    %126 = vector.load %arg8[%c0_59, %c0_60] : memref<8x128xf32, #tpu.memory_space<vmem>>, vector<8x128xf32>
    tpu.vector_store %arg8[%c0_59, %c0_60], %123 {strides = array<i32>} : memref<8x128xf32, #tpu.memory_space<vmem>>, vector<8x128xf32>,
    %c0_61 = arith.constant 0 : index
    %c0_62 = arith.constant 0 : index
    %127 = vector.load %arg7[%c0_61, %c0_62] : memref<8x128xf32, #tpu.memory_space<vmem>>, vector<8x128xf32>
    tpu.vector_store %arg7[%c0_61, %c0_62], %125 {strides = array<i32>} : memref<8x128xf32, #tpu.memory_space<vmem>>, vector<8x128xf32>,
    %128 = arith.truncf %125 : vector<8x128xf32> to vector<8x128xbf16>
    %129 = arith.index_cast %c2_i32 : i32 to index
    %c0_63 = arith.constant 0 : index
    %c0_64 = arith.constant 0 : index
    %130 = vector.load %arg5[%129, %c0_63, %c0_64] : memref<8x8x128xbf16, #tpu.memory_space<vmem>>, vector<1x8x128xbf16>
    %131 = vector.shape_cast %130 : vector<1x8x128xbf16> to vector<8x128xbf16>
    %132 = vector.shape_cast %128 : vector<8x128xbf16> to vector<1x8x128xbf16>
    tpu.vector_store %arg5[%129, %c0_63, %c0_64], %132 {strides = array<i32>} : memref<8x8x128xbf16, #tpu.memory_space<vmem>>, vector<1x8x128xbf16>,
    %c3_i32 = arith.constant 3 : i32
    %133 = arith.index_cast %c3_i32 : i32 to index
    %c0_65 = arith.constant 0 : index
    %c0_66 = arith.constant 0 : index
    %134 = vector.load %arg6[%133, %c0_65, %c0_66] : memref<8x8x512xf32, #tpu.memory_space<vmem>>, vector<1x8x512xf32>
    %135 = vector.shape_cast %134 : vector<1x8x512xf32> to vector<8x512xf32>
    %c0_67 = arith.constant 0 : index
    %c0_68 = arith.constant 0 : index
    %136 = vector.load %arg7[%c0_67, %c0_68] : memref<8x128xf32, #tpu.memory_space<vmem>>, vector<8x128xf32>
    %137 = arith.truncf %136 : vector<8x128xf32> to vector<8x128xbf16>
    %cst_69 = arith.constant dense<0.000000e+00> : vector<8x512xf32>
    %138 = tpu.matmul %137, %12, %cst_69 {dimension_numbers = #tpu.dot_dimension_numbers<[1], [0], [0], [1], [0, 0, 1, 1], [], []>} : vector<8x128xbf16>, vector<128x512xbf16>, vector<8x512xf32> -> vector<8x512xf32>
    %139 = arith.addf %135, %138 : vector<8x512xf32>
    %140 = vector.extract_strided_slice %139 {offsets = [0, 0], sizes = [8, 128], strides = [1, 1]} : vector<8x512xf32> to vector<8x128xf32>
    %141 = arith.negf %140 : vector<8x128xf32>
    %142 = math.exp %141 : vector<8x128xf32>
    %cst_70 = arith.constant 1.000000e+00 : f32
    %143 = vector.broadcast %cst_70 : f32 to vector<8x128xf32>
    %144 = arith.addf %143, %142 : vector<8x128xf32>
    %145 = arith.divf %143, %144 : vector<8x128xf32>
    %146 = vector.extract_strided_slice %139 {offsets = [0, 128], sizes = [8, 128], strides = [1, 1]} : vector<8x512xf32> to vector<8x128xf32>
    %147 = arith.negf %146 : vector<8x128xf32>
    %148 = math.exp %147 : vector<8x128xf32>
    %cst_71 = arith.constant 1.000000e+00 : f32
    %149 = vector.broadcast %cst_71 : f32 to vector<8x128xf32>
    %150 = arith.addf %149, %148 : vector<8x128xf32>
    %151 = arith.divf %149, %150 : vector<8x128xf32>
    %152 = vector.extract_strided_slice %139 {offsets = [0, 256], sizes = [8, 128], strides = [1, 1]} : vector<8x512xf32> to vector<8x128xf32>
    %153 = math.tanh %152 : vector<8x128xf32>
    %154 = vector.extract_strided_slice %139 {offsets = [0, 384], sizes = [8, 128], strides = [1, 1]} : vector<8x512xf32> to vector<8x128xf32>
    %155 = arith.negf %154 : vector<8x128xf32>
    %156 = math.exp %155 : vector<8x128xf32>
    %cst_72 = arith.constant 1.000000e+00 : f32
    %157 = vector.broadcast %cst_72 : f32 to vector<8x128xf32>
    %158 = arith.addf %157, %156 : vector<8x128xf32>
    %159 = arith.divf %157, %158 : vector<8x128xf32>
    %c0_73 = arith.constant 0 : index
    %c0_74 = arith.constant 0 : index
    %160 = vector.load %arg8[%c0_73, %c0_74] : memref<8x128xf32, #tpu.memory_space<vmem>>, vector<8x128xf32>
    %161 = arith.mulf %151, %160 : vector<8x128xf32>
    %162 = arith.mulf %145, %153 : vector<8x128xf32>
    %163 = arith.addf %161, %162 : vector<8x128xf32>
    %164 = math.tanh %163 : vector<8x128xf32>
    %165 = arith.mulf %159, %164 : vector<8x128xf32>
    %c0_75 = arith.constant 0 : index
    %c0_76 = arith.constant 0 : index
    %166 = vector.load %arg8[%c0_75, %c0_76] : memref<8x128xf32, #tpu.memory_space<vmem>>, vector<8x128xf32>
    tpu.vector_store %arg8[%c0_75, %c0_76], %163 {strides = array<i32>} : memref<8x128xf32, #tpu.memory_space<vmem>>, vector<8x128xf32>,
    %c0_77 = arith.constant 0 : index
    %c0_78 = arith.constant 0 : index
    %167 = vector.load %arg7[%c0_77, %c0_78] : memref<8x128xf32, #tpu.memory_space<vmem>>, vector<8x128xf32>
    tpu.vector_store %arg7[%c0_77, %c0_78], %165 {strides = array<i32>} : memref<8x128xf32, #tpu.memory_space<vmem>>, vector<8x128xf32>,
    %168 = arith.truncf %165 : vector<8x128xf32> to vector<8x128xbf16>
    %169 = arith.index_cast %c3_i32 : i32 to index
    %c0_79 = arith.constant 0 : index
    %c0_80 = arith.constant 0 : index
    %170 = vector.load %arg5[%169, %c0_79, %c0_80] : memref<8x8x128xbf16, #tpu.memory_space<vmem>>, vector<1x8x128xbf16>
    %171 = vector.shape_cast %170 : vector<1x8x128xbf16> to vector<8x128xbf16>
    %172 = vector.shape_cast %168 : vector<8x128xbf16> to vector<1x8x128xbf16>
    tpu.vector_store %arg5[%169, %c0_79, %c0_80], %172 {strides = array<i32>} : memref<8x8x128xbf16, #tpu.memory_space<vmem>>, vector<1x8x128xbf16>,
    %c4_i32 = arith.constant 4 : i32
    %173 = arith.index_cast %c4_i32 : i32 to index
    %c0_81 = arith.constant 0 : index
    %c0_82 = arith.constant 0 : index
    %174 = vector.load %arg6[%173, %c0_81, %c0_82] : memref<8x8x512xf32, #tpu.memory_space<vmem>>, vector<1x8x512xf32>
    %175 = vector.shape_cast %174 : vector<1x8x512xf32> to vector<8x512xf32>
    %c0_83 = arith.constant 0 : index
    %c0_84 = arith.constant 0 : index
    %176 = vector.load %arg7[%c0_83, %c0_84] : memref<8x128xf32, #tpu.memory_space<vmem>>, vector<8x128xf32>
    %177 = arith.truncf %176 : vector<8x128xf32> to vector<8x128xbf16>
    %cst_85 = arith.constant dense<0.000000e+00> : vector<8x512xf32>
    %178 = tpu.matmul %177, %12, %cst_85 {dimension_numbers = #tpu.dot_dimension_numbers<[1], [0], [0], [1], [0, 0, 1, 1], [], []>} : vector<8x128xbf16>, vector<128x512xbf16>, vector<8x512xf32> -> vector<8x512xf32>
    %179 = arith.addf %175, %178 : vector<8x512xf32>
    %180 = vector.extract_strided_slice %179 {offsets = [0, 0], sizes = [8, 128], strides = [1, 1]} : vector<8x512xf32> to vector<8x128xf32>
    %181 = arith.negf %180 : vector<8x128xf32>
    %182 = math.exp %181 : vector<8x128xf32>
    %cst_86 = arith.constant 1.000000e+00 : f32
    %183 = vector.broadcast %cst_86 : f32 to vector<8x128xf32>
    %184 = arith.addf %183, %182 : vector<8x128xf32>
    %185 = arith.divf %183, %184 : vector<8x128xf32>
    %186 = vector.extract_strided_slice %179 {offsets = [0, 128], sizes = [8, 128], strides = [1, 1]} : vector<8x512xf32> to vector<8x128xf32>
    %187 = arith.negf %186 : vector<8x128xf32>
    %188 = math.exp %187 : vector<8x128xf32>
    %cst_87 = arith.constant 1.000000e+00 : f32
    %189 = vector.broadcast %cst_87 : f32 to vector<8x128xf32>
    %190 = arith.addf %189, %188 : vector<8x128xf32>
    %191 = arith.divf %189, %190 : vector<8x128xf32>
    %192 = vector.extract_strided_slice %179 {offsets = [0, 256], sizes = [8, 128], strides = [1, 1]} : vector<8x512xf32> to vector<8x128xf32>
    %193 = math.tanh %192 : vector<8x128xf32>
    %194 = vector.extract_strided_slice %179 {offsets = [0, 384], sizes = [8, 128], strides = [1, 1]} : vector<8x512xf32> to vector<8x128xf32>
    %195 = arith.negf %194 : vector<8x128xf32>
    %196 = math.exp %195 : vector<8x128xf32>
    %cst_88 = arith.constant 1.000000e+00 : f32
    %197 = vector.broadcast %cst_88 : f32 to vector<8x128xf32>
    %198 = arith.addf %197, %196 : vector<8x128xf32>
    %199 = arith.divf %197, %198 : vector<8x128xf32>
    %c0_89 = arith.constant 0 : index
    %c0_90 = arith.constant 0 : index
    %200 = vector.load %arg8[%c0_89, %c0_90] : memref<8x128xf32, #tpu.memory_space<vmem>>, vector<8x128xf32>
    %201 = arith.mulf %191, %200 : vector<8x128xf32>
    %202 = arith.mulf %185, %193 : vector<8x128xf32>
    %203 = arith.addf %201, %202 : vector<8x128xf32>
    %204 = math.tanh %203 : vector<8x128xf32>
    %205 = arith.mulf %199, %204 : vector<8x128xf32>
    %c0_91 = arith.constant 0 : index
    %c0_92 = arith.constant 0 : index
    %206 = vector.load %arg8[%c0_91, %c0_92] : memref<8x128xf32, #tpu.memory_space<vmem>>, vector<8x128xf32>
    tpu.vector_store %arg8[%c0_91, %c0_92], %203 {strides = array<i32>} : memref<8x128xf32, #tpu.memory_space<vmem>>, vector<8x128xf32>,
    %c0_93 = arith.constant 0 : index
    %c0_94 = arith.constant 0 : index
    %207 = vector.load %arg7[%c0_93, %c0_94] : memref<8x128xf32, #tpu.memory_space<vmem>>, vector<8x128xf32>
    tpu.vector_store %arg7[%c0_93, %c0_94], %205 {strides = array<i32>} : memref<8x128xf32, #tpu.memory_space<vmem>>, vector<8x128xf32>,
    %208 = arith.truncf %205 : vector<8x128xf32> to vector<8x128xbf16>
    %209 = arith.index_cast %c4_i32 : i32 to index
    %c0_95 = arith.constant 0 : index
    %c0_96 = arith.constant 0 : index
    %210 = vector.load %arg5[%209, %c0_95, %c0_96] : memref<8x8x128xbf16, #tpu.memory_space<vmem>>, vector<1x8x128xbf16>
    %211 = vector.shape_cast %210 : vector<1x8x128xbf16> to vector<8x128xbf16>
    %212 = vector.shape_cast %208 : vector<8x128xbf16> to vector<1x8x128xbf16>
    tpu.vector_store %arg5[%209, %c0_95, %c0_96], %212 {strides = array<i32>} : memref<8x8x128xbf16, #tpu.memory_space<vmem>>, vector<1x8x128xbf16>,
    %c5_i32 = arith.constant 5 : i32
    %213 = arith.index_cast %c5_i32 : i32 to index
    %c0_97 = arith.constant 0 : index
    %c0_98 = arith.constant 0 : index
    %214 = vector.load %arg6[%213, %c0_97, %c0_98] : memref<8x8x512xf32, #tpu.memory_space<vmem>>, vector<1x8x512xf32>
    %215 = vector.shape_cast %214 : vector<1x8x512xf32> to vector<8x512xf32>
    %c0_99 = arith.constant 0 : index
    %c0_100 = arith.constant 0 : index
    %216 = vector.load %arg7[%c0_99, %c0_100] : memref<8x128xf32, #tpu.memory_space<vmem>>, vector<8x128xf32>
    %217 = arith.truncf %216 : vector<8x128xf32> to vector<8x128xbf16>
    %cst_101 = arith.constant dense<0.000000e+00> : vector<8x512xf32>
    %218 = tpu.matmul %217, %12, %cst_101 {dimension_numbers = #tpu.dot_dimension_numbers<[1], [0], [0], [1], [0, 0, 1, 1], [], []>} : vector<8x128xbf16>, vector<128x512xbf16>, vector<8x512xf32> -> vector<8x512xf32>
    %219 = arith.addf %215, %218 : vector<8x512xf32>
    %220 = vector.extract_strided_slice %219 {offsets = [0, 0], sizes = [8, 128], strides = [1, 1]} : vector<8x512xf32> to vector<8x128xf32>
    %221 = arith.negf %220 : vector<8x128xf32>
    %222 = math.exp %221 : vector<8x128xf32>
    %cst_102 = arith.constant 1.000000e+00 : f32
    %223 = vector.broadcast %cst_102 : f32 to vector<8x128xf32>
    %224 = arith.addf %223, %222 : vector<8x128xf32>
    %225 = arith.divf %223, %224 : vector<8x128xf32>
    %226 = vector.extract_strided_slice %219 {offsets = [0, 128], sizes = [8, 128], strides = [1, 1]} : vector<8x512xf32> to vector<8x128xf32>
    %227 = arith.negf %226 : vector<8x128xf32>
    %228 = math.exp %227 : vector<8x128xf32>
    %cst_103 = arith.constant 1.000000e+00 : f32
    %229 = vector.broadcast %cst_103 : f32 to vector<8x128xf32>
    %230 = arith.addf %229, %228 : vector<8x128xf32>
    %231 = arith.divf %229, %230 : vector<8x128xf32>
    %232 = vector.extract_strided_slice %219 {offsets = [0, 256], sizes = [8, 128], strides = [1, 1]} : vector<8x512xf32> to vector<8x128xf32>
    %233 = math.tanh %232 : vector<8x128xf32>
    %234 = vector.extract_strided_slice %219 {offsets = [0, 384], sizes = [8, 128], strides = [1, 1]} : vector<8x512xf32> to vector<8x128xf32>
    %235 = arith.negf %234 : vector<8x128xf32>
    %236 = math.exp %235 : vector<8x128xf32>
    %cst_104 = arith.constant 1.000000e+00 : f32
    %237 = vector.broadcast %cst_104 : f32 to vector<8x128xf32>
    %238 = arith.addf %237, %236 : vector<8x128xf32>
    %239 = arith.divf %237, %238 : vector<8x128xf32>
    %c0_105 = arith.constant 0 : index
    %c0_106 = arith.constant 0 : index
    %240 = vector.load %arg8[%c0_105, %c0_106] : memref<8x128xf32, #tpu.memory_space<vmem>>, vector<8x128xf32>
    %241 = arith.mulf %231, %240 : vector<8x128xf32>
    %242 = arith.mulf %225, %233 : vector<8x128xf32>
    %243 = arith.addf %241, %242 : vector<8x128xf32>
    %244 = math.tanh %243 : vector<8x128xf32>
    %245 = arith.mulf %239, %244 : vector<8x128xf32>
    %c0_107 = arith.constant 0 : index
    %c0_108 = arith.constant 0 : index
    %246 = vector.load %arg8[%c0_107, %c0_108] : memref<8x128xf32, #tpu.memory_space<vmem>>, vector<8x128xf32>
    tpu.vector_store %arg8[%c0_107, %c0_108], %243 {strides = array<i32>} : memref<8x128xf32, #tpu.memory_space<vmem>>, vector<8x128xf32>,
    %c0_109 = arith.constant 0 : index
    %c0_110 = arith.constant 0 : index
    %247 = vector.load %arg7[%c0_109, %c0_110] : memref<8x128xf32, #tpu.memory_space<vmem>>, vector<8x128xf32>
    tpu.vector_store %arg7[%c0_109, %c0_110], %245 {strides = array<i32>} : memref<8x128xf32, #tpu.memory_space<vmem>>, vector<8x128xf32>,
    %248 = arith.truncf %245 : vector<8x128xf32> to vector<8x128xbf16>
    %249 = arith.index_cast %c5_i32 : i32 to index
    %c0_111 = arith.constant 0 : index
    %c0_112 = arith.constant 0 : index
    %250 = vector.load %arg5[%249, %c0_111, %c0_112] : memref<8x8x128xbf16, #tpu.memory_space<vmem>>, vector<1x8x128xbf16>
    %251 = vector.shape_cast %250 : vector<1x8x128xbf16> to vector<8x128xbf16>
    %252 = vector.shape_cast %248 : vector<8x128xbf16> to vector<1x8x128xbf16>
    tpu.vector_store %arg5[%249, %c0_111, %c0_112], %252 {strides = array<i32>} : memref<8x8x128xbf16, #tpu.memory_space<vmem>>, vector<1x8x128xbf16>,
    %c6_i32 = arith.constant 6 : i32
    %253 = arith.index_cast %c6_i32 : i32 to index
    %c0_113 = arith.constant 0 : index
    %c0_114 = arith.constant 0 : index
    %254 = vector.load %arg6[%253, %c0_113, %c0_114] : memref<8x8x512xf32, #tpu.memory_space<vmem>>, vector<1x8x512xf32>
    %255 = vector.shape_cast %254 : vector<1x8x512xf32> to vector<8x512xf32>
    %c0_115 = arith.constant 0 : index
    %c0_116 = arith.constant 0 : index
    %256 = vector.load %arg7[%c0_115, %c0_116] : memref<8x128xf32, #tpu.memory_space<vmem>>, vector<8x128xf32>
    %257 = arith.truncf %256 : vector<8x128xf32> to vector<8x128xbf16>
    %cst_117 = arith.constant dense<0.000000e+00> : vector<8x512xf32>
    %258 = tpu.matmul %257, %12, %cst_117 {dimension_numbers = #tpu.dot_dimension_numbers<[1], [0], [0], [1], [0, 0, 1, 1], [], []>} : vector<8x128xbf16>, vector<128x512xbf16>, vector<8x512xf32> -> vector<8x512xf32>
    %259 = arith.addf %255, %258 : vector<8x512xf32>
    %260 = vector.extract_strided_slice %259 {offsets = [0, 0], sizes = [8, 128], strides = [1, 1]} : vector<8x512xf32> to vector<8x128xf32>
    %261 = arith.negf %260 : vector<8x128xf32>
    %262 = math.exp %261 : vector<8x128xf32>
    %cst_118 = arith.constant 1.000000e+00 : f32
    %263 = vector.broadcast %cst_118 : f32 to vector<8x128xf32>
    %264 = arith.addf %263, %262 : vector<8x128xf32>
    %265 = arith.divf %263, %264 : vector<8x128xf32>
    %266 = vector.extract_strided_slice %259 {offsets = [0, 128], sizes = [8, 128], strides = [1, 1]} : vector<8x512xf32> to vector<8x128xf32>
    %267 = arith.negf %266 : vector<8x128xf32>
    %268 = math.exp %267 : vector<8x128xf32>
    %cst_119 = arith.constant 1.000000e+00 : f32
    %269 = vector.broadcast %cst_119 : f32 to vector<8x128xf32>
    %270 = arith.addf %269, %268 : vector<8x128xf32>
    %271 = arith.divf %269, %270 : vector<8x128xf32>
    %272 = vector.extract_strided_slice %259 {offsets = [0, 256], sizes = [8, 128], strides = [1, 1]} : vector<8x512xf32> to vector<8x128xf32>
    %273 = math.tanh %272 : vector<8x128xf32>
    %274 = vector.extract_strided_slice %259 {offsets = [0, 384], sizes = [8, 128], strides = [1, 1]} : vector<8x512xf32> to vector<8x128xf32>
    %275 = arith.negf %274 : vector<8x128xf32>
    %276 = math.exp %275 : vector<8x128xf32>
    %cst_120 = arith.constant 1.000000e+00 : f32
    %277 = vector.broadcast %cst_120 : f32 to vector<8x128xf32>
    %278 = arith.addf %277, %276 : vector<8x128xf32>
    %279 = arith.divf %277, %278 : vector<8x128xf32>
    %c0_121 = arith.constant 0 : index
    %c0_122 = arith.constant 0 : index
    %280 = vector.load %arg8[%c0_121, %c0_122] : memref<8x128xf32, #tpu.memory_space<vmem>>, vector<8x128xf32>
    %281 = arith.mulf %271, %280 : vector<8x128xf32>
    %282 = arith.mulf %265, %273 : vector<8x128xf32>
    %283 = arith.addf %281, %282 : vector<8x128xf32>
    %284 = math.tanh %283 : vector<8x128xf32>
    %285 = arith.mulf %279, %284 : vector<8x128xf32>
    %c0_123 = arith.constant 0 : index
    %c0_124 = arith.constant 0 : index
    %286 = vector.load %arg8[%c0_123, %c0_124] : memref<8x128xf32, #tpu.memory_space<vmem>>, vector<8x128xf32>
    tpu.vector_store %arg8[%c0_123, %c0_124], %283 {strides = array<i32>} : memref<8x128xf32, #tpu.memory_space<vmem>>, vector<8x128xf32>,
    %c0_125 = arith.constant 0 : index
    %c0_126 = arith.constant 0 : index
    %287 = vector.load %arg7[%c0_125, %c0_126] : memref<8x128xf32, #tpu.memory_space<vmem>>, vector<8x128xf32>
    tpu.vector_store %arg7[%c0_125, %c0_126], %285 {strides = array<i32>} : memref<8x128xf32, #tpu.memory_space<vmem>>, vector<8x128xf32>,
    %288 = arith.truncf %285 : vector<8x128xf32> to vector<8x128xbf16>
    %289 = arith.index_cast %c6_i32 : i32 to index
    %c0_127 = arith.constant 0 : index
    %c0_128 = arith.constant 0 : index
    %290 = vector.load %arg5[%289, %c0_127, %c0_128] : memref<8x8x128xbf16, #tpu.memory_space<vmem>>, vector<1x8x128xbf16>
    %291 = vector.shape_cast %290 : vector<1x8x128xbf16> to vector<8x128xbf16>
    %292 = vector.shape_cast %288 : vector<8x128xbf16> to vector<1x8x128xbf16>
    tpu.vector_store %arg5[%289, %c0_127, %c0_128], %292 {strides = array<i32>} : memref<8x8x128xbf16, #tpu.memory_space<vmem>>, vector<1x8x128xbf16>,
    %c7_i32 = arith.constant 7 : i32
    %293 = arith.index_cast %c7_i32 : i32 to index
    %c0_129 = arith.constant 0 : index
    %c0_130 = arith.constant 0 : index
    %294 = vector.load %arg6[%293, %c0_129, %c0_130] : memref<8x8x512xf32, #tpu.memory_space<vmem>>, vector<1x8x512xf32>
    %295 = vector.shape_cast %294 : vector<1x8x512xf32> to vector<8x512xf32>
    %c0_131 = arith.constant 0 : index
    %c0_132 = arith.constant 0 : index
    %296 = vector.load %arg7[%c0_131, %c0_132] : memref<8x128xf32, #tpu.memory_space<vmem>>, vector<8x128xf32>
    %297 = arith.truncf %296 : vector<8x128xf32> to vector<8x128xbf16>
    %cst_133 = arith.constant dense<0.000000e+00> : vector<8x512xf32>
    %298 = tpu.matmul %297, %12, %cst_133 {dimension_numbers = #tpu.dot_dimension_numbers<[1], [0], [0], [1], [0, 0, 1, 1], [], []>} : vector<8x128xbf16>, vector<128x512xbf16>, vector<8x512xf32> -> vector<8x512xf32>
    %299 = arith.addf %295, %298 : vector<8x512xf32>
    %300 = vector.extract_strided_slice %299 {offsets = [0, 0], sizes = [8, 128], strides = [1, 1]} : vector<8x512xf32> to vector<8x128xf32>
    %301 = arith.negf %300 : vector<8x128xf32>
    %302 = math.exp %301 : vector<8x128xf32>
    %cst_134 = arith.constant 1.000000e+00 : f32
    %303 = vector.broadcast %cst_134 : f32 to vector<8x128xf32>
    %304 = arith.addf %303, %302 : vector<8x128xf32>
    %305 = arith.divf %303, %304 : vector<8x128xf32>
    %306 = vector.extract_strided_slice %299 {offsets = [0, 128], sizes = [8, 128], strides = [1, 1]} : vector<8x512xf32> to vector<8x128xf32>
    %307 = arith.negf %306 : vector<8x128xf32>
    %308 = math.exp %307 : vector<8x128xf32>
    %cst_135 = arith.constant 1.000000e+00 : f32
    %309 = vector.broadcast %cst_135 : f32 to vector<8x128xf32>
    %310 = arith.addf %309, %308 : vector<8x128xf32>
    %311 = arith.divf %309, %310 : vector<8x128xf32>
    %312 = vector.extract_strided_slice %299 {offsets = [0, 256], sizes = [8, 128], strides = [1, 1]} : vector<8x512xf32> to vector<8x128xf32>
    %313 = math.tanh %312 : vector<8x128xf32>
    %314 = vector.extract_strided_slice %299 {offsets = [0, 384], sizes = [8, 128], strides = [1, 1]} : vector<8x512xf32> to vector<8x128xf32>
    %315 = arith.negf %314 : vector<8x128xf32>
    %316 = math.exp %315 : vector<8x128xf32>
    %cst_136 = arith.constant 1.000000e+00 : f32
    %317 = vector.broadcast %cst_136 : f32 to vector<8x128xf32>
    %318 = arith.addf %317, %316 : vector<8x128xf32>
    %319 = arith.divf %317, %318 : vector<8x128xf32>
    %c0_137 = arith.constant 0 : index
    %c0_138 = arith.constant 0 : index
    %320 = vector.load %arg8[%c0_137, %c0_138] : memref<8x128xf32, #tpu.memory_space<vmem>>, vector<8x128xf32>
    %321 = arith.mulf %311, %320 : vector<8x128xf32>
    %322 = arith.mulf %305, %313 : vector<8x128xf32>
    %323 = arith.addf %321, %322 : vector<8x128xf32>
    %324 = math.tanh %323 : vector<8x128xf32>
    %325 = arith.mulf %319, %324 : vector<8x128xf32>
    %c0_139 = arith.constant 0 : index
    %c0_140 = arith.constant 0 : index
    %326 = vector.load %arg8[%c0_139, %c0_140] : memref<8x128xf32, #tpu.memory_space<vmem>>, vector<8x128xf32>
    tpu.vector_store %arg8[%c0_139, %c0_140], %323 {strides = array<i32>} : memref<8x128xf32, #tpu.memory_space<vmem>>, vector<8x128xf32>,
    %c0_141 = arith.constant 0 : index
    %c0_142 = arith.constant 0 : index
    %327 = vector.load %arg7[%c0_141, %c0_142] : memref<8x128xf32, #tpu.memory_space<vmem>>, vector<8x128xf32>
    tpu.vector_store %arg7[%c0_141, %c0_142], %325 {strides = array<i32>} : memref<8x128xf32, #tpu.memory_space<vmem>>, vector<8x128xf32>,
    %328 = arith.truncf %325 : vector<8x128xf32> to vector<8x128xbf16>
    %329 = arith.index_cast %c7_i32 : i32 to index
    %c0_143 = arith.constant 0 : index
    %c0_144 = arith.constant 0 : index
    %330 = vector.load %arg5[%329, %c0_143, %c0_144] : memref<8x8x128xbf16, #tpu.memory_space<vmem>>, vector<1x8x128xbf16>
    %331 = vector.shape_cast %330 : vector<1x8x128xbf16> to vector<8x128xbf16>
    %332 = vector.shape_cast %328 : vector<8x128xbf16> to vector<1x8x128xbf16>
    tpu.vector_store %arg5[%329, %c0_143, %c0_144], %332 {strides = array<i32>} : memref<8x8x128xbf16, #tpu.memory_space<vmem>>, vector<1x8x128xbf16>,
    %c8_i32 = arith.constant 8 : i32
    return
  }
  func.func @transform_0(%arg0: i32) -> (i32, i32, i32) {
    %c0_i32 = arith.constant 0 : i32
    %c0_i32_0 = arith.constant 0 : i32
    %c0_i32_1 = arith.constant 0 : i32
    return %c0_i32, %arg0, %c0_i32_0 : i32, i32, i32
  }
  func.func @transform_1(%arg0: i32) -> (i32, i32) {
    %c0_i32 = arith.constant 0 : i32
    %c0_i32_0 = arith.constant 0 : i32
    %c0_i32_1 = arith.constant 0 : i32
    return %c0_i32, %c0_i32_0 : i32, i32
  }
  func.func @transform_2(%arg0: i32) -> (i32, i32) {
    %c0_i32 = arith.constant 0 : i32
    %c0_i32_0 = arith.constant 0 : i32
    %c0_i32_1 = arith.constant 0 : i32
    return %c0_i32, %c0_i32_0 : i32, i32
  }
  func.func @transform_3(%arg0: i32) -> (i32, i32) {
    %c0_i32 = arith.constant 0 : i32
    %c0_i32_0 = arith.constant 0 : i32
    %c0_i32_1 = arith.constant 0 : i32
    return %c0_i32, %c0_i32_0 : i32, i32
  }
  func.func @transform_4(%arg0: i32) -> (i32, i32, i32) {
    %c0_i32 = arith.constant 0 : i32
    %c0_i32_0 = arith.constant 0 : i32
    %c0_i32_1 = arith.constant 0 : i32
    return %c0_i32, %arg0, %c0_i32_0 : i32, i32, i32
  }
}

module attributes {stable_mosaic.version = 11 : i64} {
  func.func @attn_fc_kernel(%arg0: i32, %arg1: memref<8x8x128xbf16, #tpu.memory_space<vmem>>, %arg2: memref<128x256xbf16, #tpu.memory_space<vmem>>, %arg3: memref<1x256xf32, #tpu.memory_space<vmem>>, %arg4: memref<1x256xf32, #tpu.memory_space<vmem>>, %arg5: memref<128x128xbf16, #tpu.memory_space<vmem>>, %arg6: memref<128x128xbf16, #tpu.memory_space<vmem>>, %arg7: memref<1x128xf32, #tpu.memory_space<vmem>>, %arg8: memref<8x8x128xf32, #tpu.memory_space<vmem>>) attributes {dimension_semantics = [#tpu.dimension_semantics<parallel>], iteration_bounds = array<i64: 1>, scalar_prefetch = 0 : i64, scratch_operands = 0 : i64, tpu.core_type = #tpu.core_type<tc>, window_params = [{transform_indices = @transform_0, window_bounds = array<i64: 8, 8, 128>}, {pipeline_mode = #tpu.pipeline_mode<synchronous>, transform_indices = @transform_1, window_bounds = array<i64: 128, 256>}, {pipeline_mode = #tpu.pipeline_mode<synchronous>, transform_indices = @transform_2, window_bounds = array<i64: 1, 256>}, {pipeline_mode = #tpu.pipeline_mode<synchronous>, transform_indices = @transform_3, window_bounds = array<i64: 1, 256>}, {pipeline_mode = #tpu.pipeline_mode<synchronous>, transform_indices = @transform_4, window_bounds = array<i64: 128, 128>}, {pipeline_mode = #tpu.pipeline_mode<synchronous>, transform_indices = @transform_5, window_bounds = array<i64: 128, 128>}, {pipeline_mode = #tpu.pipeline_mode<synchronous>, transform_indices = @transform_6, window_bounds = array<i64: 1, 128>}, {transform_indices = @transform_7, window_bounds = array<i64: 8, 8, 128>}]} {
    %c0 = arith.constant 0 : index
    %c0_0 = arith.constant 0 : index
    %c0_1 = arith.constant 0 : index
    %0 = vector.load %arg1[%c0, %c0_0, %c0_1] : memref<8x8x128xbf16, #tpu.memory_space<vmem>>, vector<8x8x128xbf16>
    %1 = tpu.transpose %0, [1, 0, 2] : vector<8x8x128xbf16> -> vector<8x8x128xbf16>
    %c0_2 = arith.constant 0 : index
    %c0_3 = arith.constant 0 : index
    %2 = vector.load %arg2[%c0_2, %c0_3] : memref<128x256xbf16, #tpu.memory_space<vmem>>, vector<128x256xbf16>
    "tpu.trace_start"() <{level = 10 : i32, message = "bth,ha->bta"}> : () -> ()
    %cst = arith.constant dense<0.000000e+00> : vector<8x8x256xf32>
    %3 = tpu.matmul %1, %2, %cst {dimension_numbers = #tpu.dot_dimension_numbers<[2], [0], [0, 1], [1], [0, 0, 0, 1, 1, 1], [], []>} : vector<8x8x128xbf16>, vector<128x256xbf16>, vector<8x8x256xf32> -> vector<8x8x256xf32>
    "tpu.trace_stop"() : () -> ()
    %c0_4 = arith.constant 0 : index
    %c0_5 = arith.constant 0 : index
    %4 = vector.load %arg3[%c0_4, %c0_5] : memref<1x256xf32, #tpu.memory_space<vmem>>, vector<1x256xf32>
    %5 = vector.shape_cast %4 : vector<1x256xf32> to vector<1x1x256xf32>
    %6 = vector.broadcast %5 : vector<1x1x256xf32> to vector<8x8x256xf32>
    %7 = arith.addf %3, %6 : vector<8x8x256xf32>
    %8 = math.tanh %7 : vector<8x8x256xf32>
    %c0_6 = arith.constant 0 : index
    %c0_7 = arith.constant 0 : index
    %9 = vector.load %arg4[%c0_6, %c0_7] : memref<1x256xf32, #tpu.memory_space<vmem>>, vector<1x256xf32>
    %10 = vector.shape_cast %9 : vector<1x256xf32> to vector<1x1x256xf32>
    %11 = vector.broadcast %10 : vector<1x1x256xf32> to vector<8x8x256xf32>
    %12 = arith.mulf %8, %11 : vector<8x8x256xf32>
    %cst_8 = arith.constant dense<0.000000e+00> : vector<8x8xf32>
    %13 = vector.multi_reduction <add>, %12, %cst_8 [2] : vector<8x8x256xf32> to vector<8x8xf32>
    %14 = vector.shape_cast %13 : vector<8x8xf32> to vector<8x8x1xf32>
    %cst_9 = arith.constant dense<0xFF800000> : vector<8x1xf32>
    %15 = vector.multi_reduction <maximumf>, %14, %cst_9 [1] : vector<8x8x1xf32> to vector<8x1xf32>
    %16 = vector.shape_cast %15 : vector<8x1xf32> to vector<8x1x1xf32>
    %17 = vector.broadcast %16 : vector<8x1x1xf32> to vector<8x8x1xf32>
    %18 = arith.subf %14, %17 : vector<8x8x1xf32>
    %19 = math.exp %18 : vector<8x8x1xf32>
    %cst_10 = arith.constant dense<0.000000e+00> : vector<8x1xf32>
    %20 = vector.multi_reduction <add>, %19, %cst_10 [1] : vector<8x8x1xf32> to vector<8x1xf32>
    %21 = vector.shape_cast %20 : vector<8x1xf32> to vector<8x1x1xf32>
    %22 = vector.broadcast %21 : vector<8x1x1xf32> to vector<8x8x1xf32>
    %23 = arith.divf %19, %22 : vector<8x8x1xf32>
    %24 = arith.extf %1 : vector<8x8x128xbf16> to vector<8x8x128xf32>
    %25 = vector.broadcast %23 : vector<8x8x1xf32> to vector<8x8x128xf32>
    %26 = arith.mulf %25, %24 : vector<8x8x128xf32>
    %27 = arith.truncf %26 : vector<8x8x128xf32> to vector<8x8x128xbf16>
    %28 = tpu.iota {dimensions = array<i32: 0>} : vector<8x8xi32>
    %29 = tpu.iota {dimensions = array<i32: 1>} : vector<8x8xi32>
    %30 = arith.cmpi sgt, %28, %29 : vector<8x8xi32>
    %31 = arith.extui %30 : vector<8x8xi1> to vector<8x8xi32>
    %32 = arith.sitofp %31 : vector<8x8xi32> to vector<8x8xf32>
    %33 = arith.truncf %32 : vector<8x8xf32> to vector<8x8xbf16>
    "tpu.trace_start"() <{level = 10 : i32, message = "ts,bsh->bth"}> : () -> ()
    %cst_11 = arith.constant dense<0.000000e+00> : vector<8x128x8xf32>
    %34 = tpu.matmul %27, %33, %cst_11 {dimension_numbers = #tpu.dot_dimension_numbers<[1], [1], [0, 2], [0], [0, 0, 0, 2, 1, 0], [], []>} : vector<8x8x128xbf16>, vector<8x8xbf16>, vector<8x128x8xf32> -> vector<8x128x8xf32>
    %35 = tpu.transpose %34, [0, 2, 1] : vector<8x128x8xf32> -> vector<8x8x128xf32>
    "tpu.trace_stop"() : () -> ()
    %36 = arith.truncf %35 : vector<8x8x128xf32> to vector<8x8x128xbf16>
    %c0_12 = arith.constant 0 : index
    %c0_13 = arith.constant 0 : index
    %37 = vector.load %arg5[%c0_12, %c0_13] : memref<128x128xbf16, #tpu.memory_space<vmem>>, vector<128x128xbf16>
    "tpu.trace_start"() <{level = 10 : i32, message = "bth,ho->bto"}> : () -> ()
    %cst_14 = arith.constant dense<0.000000e+00> : vector<8x8x128xf32>
    %38 = tpu.matmul %36, %37, %cst_14 {dimension_numbers = #tpu.dot_dimension_numbers<[2], [0], [0, 1], [1], [0, 0, 0, 1, 1, 1], [], []>} : vector<8x8x128xbf16>, vector<128x128xbf16>, vector<8x8x128xf32> -> vector<8x8x128xf32>
    "tpu.trace_stop"() : () -> ()
    %c0_15 = arith.constant 0 : index
    %c0_16 = arith.constant 0 : index
    %39 = vector.load %arg6[%c0_15, %c0_16] : memref<128x128xbf16, #tpu.memory_space<vmem>>, vector<128x128xbf16>
    "tpu.trace_start"() <{level = 10 : i32, message = "bth,ho->bto"}> : () -> ()
    %cst_17 = arith.constant dense<0.000000e+00> : vector<8x8x128xf32>
    %40 = tpu.matmul %1, %39, %cst_17 {dimension_numbers = #tpu.dot_dimension_numbers<[2], [0], [0, 1], [1], [0, 0, 0, 1, 1, 1], [], []>} : vector<8x8x128xbf16>, vector<128x128xbf16>, vector<8x8x128xf32> -> vector<8x8x128xf32>
    "tpu.trace_stop"() : () -> ()
    %41 = arith.addf %38, %40 : vector<8x8x128xf32>
    %c0_18 = arith.constant 0 : index
    %c0_19 = arith.constant 0 : index
    %42 = vector.load %arg7[%c0_18, %c0_19] : memref<1x128xf32, #tpu.memory_space<vmem>>, vector<1x128xf32>
    %43 = vector.shape_cast %42 : vector<1x128xf32> to vector<1x1x128xf32>
    %44 = vector.broadcast %43 : vector<1x1x128xf32> to vector<8x8x128xf32>
    %45 = arith.addf %41, %44 : vector<8x8x128xf32>
    %46 = arith.negf %45 : vector<8x8x128xf32>
    %47 = math.exp %46 : vector<8x8x128xf32>
    %cst_20 = arith.constant 1.000000e+00 : f32
    %48 = vector.broadcast %cst_20 : f32 to vector<8x8x128xf32>
    %49 = arith.addf %48, %47 : vector<8x8x128xf32>
    %50 = arith.divf %48, %49 : vector<8x8x128xf32>
    %c0_21 = arith.constant 0 : index
    %c0_22 = arith.constant 0 : index
    %c0_23 = arith.constant 0 : index
    %51 = vector.load %arg8[%c0_21, %c0_22, %c0_23] : memref<8x8x128xf32, #tpu.memory_space<vmem>>, vector<8x8x128xf32>
    tpu.vector_store %arg8[%c0_21, %c0_22, %c0_23], %50 {strides = array<i32>} : memref<8x8x128xf32, #tpu.memory_space<vmem>>, vector<8x8x128xf32>,
    return
  }
  func.func @transform_0(%arg0: i32) -> (i32, i32, i32) {
    %c0_i32 = arith.constant 0 : i32
    %c0_i32_0 = arith.constant 0 : i32
    %c0_i32_1 = arith.constant 0 : i32
    return %c0_i32, %arg0, %c0_i32_0 : i32, i32, i32
  }
  func.func @transform_1(%arg0: i32) -> (i32, i32) {
    %c0_i32 = arith.constant 0 : i32
    %c0_i32_0 = arith.constant 0 : i32
    %c0_i32_1 = arith.constant 0 : i32
    return %c0_i32, %c0_i32_0 : i32, i32
  }
  func.func @transform_2(%arg0: i32) -> (i32, i32) {
    %c0_i32 = arith.constant 0 : i32
    %c0_i32_0 = arith.constant 0 : i32
    %c0_i32_1 = arith.constant 0 : i32
    return %c0_i32, %c0_i32_0 : i32, i32
  }
  func.func @transform_3(%arg0: i32) -> (i32, i32) {
    %c0_i32 = arith.constant 0 : i32
    %c0_i32_0 = arith.constant 0 : i32
    %c0_i32_1 = arith.constant 0 : i32
    return %c0_i32, %c0_i32_0 : i32, i32
  }
  func.func @transform_4(%arg0: i32) -> (i32, i32) {
    %c0_i32 = arith.constant 0 : i32
    %c0_i32_0 = arith.constant 0 : i32
    %c0_i32_1 = arith.constant 0 : i32
    return %c0_i32, %c0_i32_0 : i32, i32
  }
  func.func @transform_5(%arg0: i32) -> (i32, i32) {
    %c0_i32 = arith.constant 0 : i32
    %c0_i32_0 = arith.constant 0 : i32
    %c0_i32_1 = arith.constant 0 : i32
    return %c0_i32, %c0_i32_0 : i32, i32
  }
  func.func @transform_6(%arg0: i32) -> (i32, i32) {
    %c0_i32 = arith.constant 0 : i32
    %c0_i32_0 = arith.constant 0 : i32
    %c0_i32_1 = arith.constant 0 : i32
    return %c0_i32, %c0_i32_0 : i32, i32
  }
  func.func @transform_7(%arg0: i32) -> (i32, i32, i32) {
    %c0_i32 = arith.constant 0 : i32
    %c0_i32_0 = arith.constant 0 : i32
    %c0_i32_1 = arith.constant 0 : i32
    return %arg0, %c0_i32, %c0_i32_0 : i32, i32, i32
  }
}

</mosaic_0001>

<llo_original>
// kernel: eernn_forward.3
$region0: #{eernn_forward.3}
  #allocation0 [shape = 'u32[]', space=smem, size = 0x4, offset = 0x4, fixed_abs, tag = 'smem constant byte address 0x4 - core index']
  #allocation1 [shape = 'u32[144,128]{1,0:T(1,128)}', space=vmem, size = 0x12000, scoped, tag = 'internal scratch']
  %s0 = inlined_call_operand.vmem [shape: bf16[8,8,128], index: 0, kind: input, shape index: {}]
  %s1 = inlined_call_operand.vmem [shape: bf16[128,256], index: 1, kind: input, shape index: {}]
  %s2 = inlined_call_operand.vmem [shape: f32[1,256], index: 2, kind: input, shape index: {}]
  %s3 = inlined_call_operand.vmem [shape: f32[1,256], index: 3, kind: input, shape index: {}]
  %s4 = inlined_call_operand.vmem [shape: bf16[128,128], index: 4, kind: input, shape index: {}]
  %s5 = inlined_call_operand.vmem [shape: bf16[128,128], index: 5, kind: input, shape index: {}]
  %s6 = inlined_call_operand.vmem [shape: f32[1,128], index: 6, kind: input, shape index: {}]
  %s7 = inlined_call_operand.vmem [shape: f32[8,8,128], index: 7, kind: output, shape index: {}]
  %s8 = sld [smem:[#allocation0]]
  $region38: #{eernn_forward.3} parent=0
    _
  %s10 = ssub.s32 1, %s8
  %s11 = scalar_select 0, %s10, %s8
  // Predicated region
  $region2: #{eernn_forward.3} parent=0 // pred_check
    _
  $region3: #{eernn_forward.3} parent=0 // pred_check_branch
    %13 = sbr.rel (0) target = $region5
  $region4: #{eernn_forward.3} parent=0 // pred_region
    _
  $region5: #{eernn_forward.3} parent=0 // pred_fallthru
    _
  // Predicated region
  $region6: #{eernn_forward.3} parent=0 // pred_check
    _
  $region7: #{eernn_forward.3} parent=0 // pred_check_branch
    %15 = sbr.rel (0) target = $region9
  $region8: #{eernn_forward.3} parent=0 // pred_region
    _
  $region9: #{eernn_forward.3} parent=0 // pred_fallthru
    _
  // Predicated region
  $region10: #{eernn_forward.3} parent=0 // pred_check
    _
  $region11: #{eernn_forward.3} parent=0 // pred_check_branch
    %17 = sbr.rel (0) target = $region13
  $region12: #{eernn_forward.3} parent=0 // pred_region
    _
  $region13: #{eernn_forward.3} parent=0 // pred_fallthru
    _
  // Predicated region
  $region14: #{eernn_forward.3} parent=0 // pred_check
    _
  $region15: #{eernn_forward.3} parent=0 // pred_check_branch
    %19 = sbr.rel (0) target = $region17
  $region16: #{eernn_forward.3} parent=0 // pred_region
    _
  $region17: #{eernn_forward.3} parent=0 // pred_fallthru
    _
  // Predicated region
  $region18: #{eernn_forward.3} parent=0 // pred_check
    _
  $region19: #{eernn_forward.3} parent=0 // pred_check_branch
    %21 = sbr.rel (0) target = $region21
  $region20: #{eernn_forward.3} parent=0 // pred_region
    _
  $region21: #{eernn_forward.3} parent=0 // pred_fallthru
    _
  // Predicated region
  $region22: #{eernn_forward.3} parent=0 // pred_check
    _
  $region23: #{eernn_forward.3} parent=0 // pred_check_branch
    %23 = sbr.rel (0) target = $region25
  $region24: #{eernn_forward.3} parent=0 // pred_region
    _
  $region25: #{eernn_forward.3} parent=0 // pred_fallthru
    _
  // Predicated region
  $region26: #{eernn_forward.3} parent=0 // pred_check
    _
  $region27: #{eernn_forward.3} parent=0 // pred_check_branch
    %25 = sbr.rel (0) target = $region29
  $region28: #{eernn_forward.3} parent=0 // pred_region
    _
  $region29: #{eernn_forward.3} parent=0 // pred_fallthru
    _
  %v27 = vld [vmem:[%s0] sm:$0xf]
  %v28 = vld [vmem:[%s0 + $0x4] sm:$0xf]
  %v29 = vld [vmem:[%s0 + $0x8] sm:$0xf]
  %v30 = vld [vmem:[%s0 + $0xc] sm:$0xf]
  %v31 = vld [vmem:[%s0 + $0x10] sm:$0xf]
  %v32 = vld [vmem:[%s0 + $0x14] sm:$0xf]
  %v33 = vld [vmem:[%s0 + $0x18] sm:$0xf]
  %v34 = vld [vmem:[%s0 + $0x1c] sm:$0xf]
  %v35 = vcombine.low %v27, %v31
  %v37 = vunpack.c.l.s4 1983009808
  %v38 = vunpack.c.0.s8 %v37
  %v39 = vlaneseq
  %v40 = vshrl.u32 %v39, 7
  %v41 = vsub.s32 %v38, %v40
  %v42 = vrot.slane %v35, %v41
  %v43 = vcombine.low %v29, %v33
  %v45 = vunpack.c.l.s4 1983009808
  %v46 = vunpack.c.0.s8 %v45
  %v47 = vlaneseq
  %v48 = vshrl.u32 %v47, 7
  %v49 = vsub.s32 %v46, %v48
  %v50 = vrot.slane %v43, %v49
  %v51 = vcombine.low %v42, %v50
  %v52 = vcombine.high %v42, %v50
  %v54 = vunpack.c.l.s4 1934713408
  %v55 = vunpack.c.0.s8 %v54
  %v56 = vlaneseq
  %v57 = vshrl.u32 %v56, 7
  %v58 = vsub.s32 %v55, %v57
  %v59 = vrot.slane %v51, %v58
  %v61 = vunpack.c.l.s4 1934713408
  %v62 = vunpack.c.0.s8 %v61
  %v63 = vlaneseq
  %v64 = vshrl.u32 %v63, 7
  %v65 = vsub.s32 %v62, %v64
  %v66 = vrot.slane %v52, %v65
  %v67 = vcombine.high %v59, 0
  %v68 = vcombine.high %v66, 0
  %v69 = vcombine.low %v28, %v32
  %v71 = vunpack.c.l.s4 1983009808
  %v72 = vunpack.c.0.s8 %v71
  %v73 = vlaneseq
  %v74 = vshrl.u32 %v73, 7
  %v75 = vsub.s32 %v72, %v74
  %v76 = vrot.slane %v69, %v75
  %v77 = vcombine.low %v30, %v34
  %v79 = vunpack.c.l.s4 1983009808
  %v80 = vunpack.c.0.s8 %v79
  %v81 = vlaneseq
  %v82 = vshrl.u32 %v81, 7
  %v83 = vsub.s32 %v80, %v82
  %v84 = vrot.slane %v77, %v83
  %v85 = vcombine.low %v76, %v84
  %v86 = vcombine.high %v76, %v84
  %v88 = vunpack.c.l.s4 1934713408
  %v89 = vunpack.c.0.s8 %v88
  %v90 = vlaneseq
  %v91 = vshrl.u32 %v90, 7
  %v92 = vsub.s32 %v89, %v91
  %v93 = vrot.slane %v85, %v92
  %v95 = vunpack.c.l.s4 1934713408
  %v96 = vunpack.c.0.s8 %v95
  %v97 = vlaneseq
  %v98 = vshrl.u32 %v97, 7
  %v99 = vsub.s32 %v96, %v98
  %v100 = vrot.slane %v86, %v99
  %v101 = vcombine.high %v93, 0
  %v102 = vcombine.high %v100, 0
  %v105 = vpack.i.b16 %v93, %v59
  %v107 = vshrl.u32 %v59, 16
  %v108 = vshrl.u32 %v93, 16
  %v109 = vpack.i.b16 %v108, %v107
  %v113 = vpack.i.b16 %v101, %v67
  %v115 = vshrl.u32 %v67, 16
  %v116 = vshrl.u32 %v101, 16
  %v117 = vpack.i.b16 %v116, %v115
  %v121 = vpack.i.b16 %v100, %v66
  %v123 = vshrl.u32 %v66, 16
  %v124 = vshrl.u32 %v100, 16
  %v125 = vpack.i.b16 %v124, %v123
  %v129 = vpack.i.b16 %v102, %v68
  %v131 = vshrl.u32 %v68, 16
  %v132 = vshrl.u32 %v102, 16
  %v133 = vpack.i.b16 %v132, %v131
  %v135 = vld [vmem:[%s1] sm:$0xff]
  %v136 = vld [vmem:[%s1 + $0x8] sm:$0xff]
  %v137 = vld [vmem:[%s1 + $0x10] sm:$0xff]
  %v138 = vld [vmem:[%s1 + $0x18] sm:$0xff]
  %v139 = vld [vmem:[%s1 + $0x20] sm:$0xff]
  %v140 = vld [vmem:[%s1 + $0x28] sm:$0xff]
  %v141 = vld [vmem:[%s1 + $0x30] sm:$0xff]
  %v142 = vld [vmem:[%s1 + $0x38] sm:$0xff]
  %v143 = vld [vmem:[%s1 + $0x40] sm:$0xff]
  %v144 = vld [vmem:[%s1 + $0x48] sm:$0xff]
  %v145 = vld [vmem:[%s1 + $0x50] sm:$0xff]
  %v146 = vld [vmem:[%s1 + $0x58] sm:$0xff]
  %v147 = vld [vmem:[%s1 + $0x60] sm:$0xff]
  %v148 = vld [vmem:[%s1 + $0x68] sm:$0xff]
  %v149 = vld [vmem:[%s1 + $0x70] sm:$0xff]
  %v150 = vld [vmem:[%s1 + $0x78] sm:$0xff]
  %v151 = vld [vmem:[%s2] sm:$0x3]
  %v153 = vlaneseq
  %v154 = vshrl.u32 %v153, 7
  %v155 = vsub.s32 0, %v154
  %v156 = vrot.slane %v151, %v155
  %v157 = vlaneseq
  %v158 = vshrl.u32 %v157, 7
  %v159 = vsub.s32 1, %v158
  %v160 = vrot.slane %v151, %v159
  %v163 = vunpack.c.l.b16 %v105
  %v164 = vunpack.c.l.b16 %v109
  %v165 = vunpack.c.l.b16 %v113
  %v166 = vunpack.c.l.b16 %v117
  %v167 = vunpack.c.l.b16 %v121
  %v168 = vunpack.c.l.b16 %v125
  %v169 = vunpack.c.l.b16 %v129
  %v170 = vunpack.c.l.b16 %v133
  %v171 = vpack.c.b16 %v164, %v163
  %v172 = vpack.c.b16 %v166, %v165
  %v173 = vpack.c.b16 %v168, %v167
  %v174 = vpack.c.b16 %v170, %v169
  %v195 = vunpack.c.l.b16 %v135
  %v196 = vunpack.c.h.b16 %v135
  %v197 = vunpack.c.l.b16 %v136
  %v198 = vunpack.c.h.b16 %v136
  %v199 = vunpack.c.l.b16 %v137
  %v200 = vunpack.c.h.b16 %v137
  %v201 = vunpack.c.l.b16 %v138
  %v202 = vunpack.c.h.b16 %v138
  %v203 = vunpack.c.l.b16 %v139
  %v204 = vunpack.c.h.b16 %v139
  %v205 = vunpack.c.l.b16 %v140
  %v206 = vunpack.c.h.b16 %v140
  %v207 = vunpack.c.l.b16 %v141
  %v208 = vunpack.c.h.b16 %v141
  %v209 = vunpack.c.l.b16 %v142
  %v210 = vunpack.c.h.b16 %v142
  %v211 = vunpack.c.l.b16 %v143
  %v212 = vunpack.c.h.b16 %v143
  %v213 = vunpack.c.l.b16 %v144
  %v214 = vunpack.c.h.b16 %v144
  %v215 = vunpack.c.l.b16 %v145
  %v216 = vunpack.c.h.b16 %v145
  %v217 = vunpack.c.l.b16 %v146
  %v218 = vunpack.c.h.b16 %v146
  %v219 = vunpack.c.l.b16 %v147
  %v220 = vunpack.c.h.b16 %v147
  %v221 = vunpack.c.l.b16 %v148
  %v222 = vunpack.c.h.b16 %v148
  %v223 = vunpack.c.l.b16 %v149
  %v224 = vunpack.c.h.b16 %v149
  %v225 = vunpack.c.l.b16 %v150
  %v226 = vunpack.c.h.b16 %v150
  %v227 = vpack.c.b16 %v197, %v195
  %v228 = vpack.c.b16 %v198, %v196
  %v229 = vpack.c.b16 %v201, %v199
  %v230 = vpack.c.b16 %v202, %v200
  %v231 = vpack.c.b16 %v205, %v203
  %v232 = vpack.c.b16 %v206, %v204
  %v233 = vpack.c.b16 %v209, %v207
  %v234 = vpack.c.b16 %v210, %v208
  %v235 = vpack.c.b16 %v213, %v211
  %v236 = vpack.c.b16 %v214, %v212
  %v237 = vpack.c.b16 %v217, %v215
  %v238 = vpack.c.b16 %v218, %v216
  %v239 = vpack.c.b16 %v221, %v219
  %v240 = vpack.c.b16 %v222, %v220
  %v241 = vpack.c.b16 %v225, %v223
  %v242 = vpack.c.b16 %v226, %v224
  %259 = vmatprep.subr.bf16.mxu0 %v228
  %260 = vmatpush1.bf16.msra.mxu0 %v227
  %261 = vmatprep.subr.bf16.mxu0 %v230
  %262 = vmatpush1.bf16.msra.mxu0 %v229
  %263 = vmatprep.subr.bf16.mxu0 %v232
  %264 = vmatpush1.bf16.msra.mxu0 %v231
  %265 = vmatprep.subr.bf16.mxu0 %v234
  %266 = vmatpush1.bf16.msra.mxu0 %v233
  %267 = vmatprep.subr.bf16.mxu0 %v236
  %268 = vmatpush1.bf16.msra.mxu0 %v235
  %269 = vmatprep.subr.bf16.mxu0 %v238
  %270 = vmatpush1.bf16.msra.mxu0 %v237
  %271 = vmatprep.subr.bf16.mxu0 %v240
  %272 = vmatpush1.bf16.msra.mxu0 %v239
  %273 = vmatprep.subr.bf16.mxu0 %v242
  %274 = vmatpush1.bf16.msra.mxu0 %v241
  %275 = vmatprep.subr.bf16.mxu0 0
  %276 = vmatpush1.bf16.msra.mxu0 0
  %277 = vmatprep.subr.bf16.mxu0 0
  %278 = vmatpush1.bf16.msra.mxu0 0
  %279 = vmatprep.subr.bf16.mxu0 0
  %280 = vmatpush1.bf16.msra.mxu0 0
  %281 = vmatprep.subr.bf16.mxu0 0
  %282 = vmatpush1.bf16.msra.mxu0 0
  %283 = vmatprep.subr.bf16.mxu0 0
  %284 = vmatpush1.bf16.msra.mxu0 0
  %285 = vmatprep.subr.bf16.mxu0 0
  %286 = vmatpush1.bf16.msra.mxu0 0
  %287 = vmatprep.subr.bf16.mxu0 0
  %288 = vmatpush1.bf16.msra.mxu0 0
  %289 = vmatprep.subr.bf16.mxu0 0
  %290 = vmatpush1.bf16.msra.mxu0 0
  %291 = vmatprep.mubr.bf16.mxu0 0
  %292 = vmatmul.mubr.bf16.gmra.mrb[0].mxu0 %v171
  %v293 = vpop.f32.mrb[0].mxu0
  %v294 = vadd.f32 %v156, %v293
  %v295 = vpop.f32.mrb[0].mxu0
  %v296 = vadd.f32 %v160, %v295
  %v297 = vpop.f32.mrb[0].mxu0
  %v298 = vadd.f32 %v156, %v297
  %v299 = vpop.f32.mrb[0].mxu0
  %v300 = vadd.f32 %v160, %v299
  %301 = vmatprep.mubr.bf16.mxu0 0
  %302 = vmatmul.mubr.bf16.gmra.mrb[0].mxu0 %v172
  %v303 = vpop.f32.mrb[0].mxu0
  %v304 = vadd.f32 %v156, %v303
  %v305 = vpop.f32.mrb[0].mxu0
  %v306 = vadd.f32 %v160, %v305
  %v307 = vpop.f32.mrb[0].mxu0
  %v308 = vadd.f32 %v156, %v307
  %v309 = vpop.f32.mrb[0].mxu0
  %v310 = vadd.f32 %v160, %v309
  %311 = vmatprep.mubr.bf16.mxu0 0
  %312 = vmatmul.mubr.bf16.gmra.mrb[0].mxu0 %v173
  %v313 = vpop.f32.mrb[0].mxu0
  %v314 = vadd.f32 %v156, %v313
  %v315 = vpop.f32.mrb[0].mxu0
  %v316 = vadd.f32 %v160, %v315
  %v317 = vpop.f32.mrb[0].mxu0
  %v318 = vadd.f32 %v156, %v317
  %v319 = vpop.f32.mrb[0].mxu0
  %v320 = vadd.f32 %v160, %v319
  %321 = vmatprep.mubr.bf16.mxu0 0
  %322 = vmatmul.mubr.bf16.gmra.mrb[0].mxu0 %v174
  %v323 = vpop.f32.mrb[0].mxu0
  %v324 = vadd.f32 %v156, %v323
  %v325 = vpop.f32.mrb[0].mxu0
  %v326 = vadd.f32 %v160, %v325
  %v327 = vpop.f32.mrb[0].mxu0
  %v328 = vadd.f32 %v156, %v327
  %v329 = vpop.f32.mrb[0].mxu0
  %v330 = vadd.f32 %v160, %v329
  %331 = vdwg.mxu0
  %v332 = vtanh.pop %v294
  %v333 = vtanh.pop %v296
  %v334 = vtanh.pop %v298
  %v335 = vtanh.pop %v300
  %v336 = vtanh.pop %v304
  %v337 = vtanh.pop %v306
  %v338 = vtanh.pop %v308
  %v339 = vtanh.pop %v310
  %v340 = vtanh.pop %v314
  %v341 = vtanh.pop %v316
  %v342 = vtanh.pop %v318
  %v343 = vtanh.pop %v320
  %v344 = vtanh.pop %v324
  %v345 = vtanh.pop %v326
  %v346 = vtanh.pop %v328
  %v347 = vtanh.pop %v330
  %v348 = vld [vmem:[%s3] sm:$0x3]
  %v350 = vlaneseq
  %v351 = vshrl.u32 %v350, 7
  %v352 = vsub.s32 0, %v351
  %v353 = vrot.slane %v348, %v352
  %v354 = vlaneseq
  %v355 = vshrl.u32 %v354, 7
  %v356 = vsub.s32 1, %v355
  %v357 = vrot.slane %v348, %v356
  %v360 = vmul.f32 %v332, %v353
  %v361 = vmul.f32 %v333, %v357
  %v362 = vmul.f32 %v334, %v353
  %v363 = vmul.f32 %v335, %v357
  %v364 = vmul.f32 %v336, %v353
  %v365 = vmul.f32 %v337, %v357
  %v366 = vmul.f32 %v338, %v353
  %v367 = vmul.f32 %v339, %v357
  %v368 = vmul.f32 %v340, %v353
  %v369 = vmul.f32 %v341, %v357
  %v370 = vmul.f32 %v342, %v353
  %v371 = vmul.f32 %v343, %v357
  %v372 = vmul.f32 %v344, %v353
  %v373 = vmul.f32 %v345, %v357
  %v374 = vmul.f32 %v346, %v353
  %v375 = vmul.f32 %v347, %v357
  %v376 = vadd.f32 %v360, %v361
  %377 = vadd.xlane.f32.xlu0 %v376
  %v378 = vpop.xlane.xlu0 %377
  %v379 = vadd.f32 %v362, %v363
  %380 = vadd.xlane.f32.xlu0 %v379
  %v381 = vpop.xlane.xlu0 %380
  %v382 = vadd.f32 %v364, %v365
  %383 = vadd.xlane.f32.xlu0 %v382
  %v384 = vpop.xlane.xlu0 %383
  %v385 = vadd.f32 %v366, %v367
  %386 = vadd.xlane.f32.xlu0 %v385
  %v387 = vpop.xlane.xlu0 %386
  %v388 = vadd.f32 %v368, %v369
  %389 = vadd.xlane.f32.xlu0 %v388
  %v390 = vpop.xlane.xlu0 %389
  %v391 = vadd.f32 %v370, %v371
  %392 = vadd.xlane.f32.xlu0 %v391
  %v393 = vpop.xlane.xlu0 %392
  %v394 = vadd.f32 %v372, %v373
  %395 = vadd.xlane.f32.xlu0 %v394
  %v396 = vpop.xlane.xlu0 %395
  %v397 = vadd.f32 %v374, %v375
  %398 = vadd.xlane.f32.xlu0 %v397
  %v399 = vpop.xlane.xlu0 %398
  %v400 = vrot.slane %v378, 4
  %v401 = vmax.f32 %v378, %v400
  %v402 = vrot.slane %v401, 2
  %v403 = vmax.f32 %v401, %v402
  %v404 = vrot.slane %v403, 1
  %v405 = vmax.f32 %v403, %v404
  %v406 = vrot.slane %v381, 4
  %v407 = vmax.f32 %v381, %v406
  %v408 = vrot.slane %v407, 2
  %v409 = vmax.f32 %v407, %v408
  %v410 = vrot.slane %v409, 1
  %v411 = vmax.f32 %v409, %v410
  %v412 = vrot.slane %v384, 4
  %v413 = vmax.f32 %v384, %v412
  %v414 = vrot.slane %v413, 2
  %v415 = vmax.f32 %v413, %v414
  %v416 = vrot.slane %v415, 1
  %v417 = vmax.f32 %v415, %v416
  %v418 = vrot.slane %v387, 4
  %v419 = vmax.f32 %v387, %v418
  %v420 = vrot.slane %v419, 2
  %v421 = vmax.f32 %v419, %v420
  %v422 = vrot.slane %v421, 1
  %v423 = vmax.f32 %v421, %v422
  %v424 = vrot.slane %v390, 4
  %v425 = vmax.f32 %v390, %v424
  %v426 = vrot.slane %v425, 2
  %v427 = vmax.f32 %v425, %v426
  %v428 = vrot.slane %v427, 1
  %v429 = vmax.f32 %v427, %v428
  %v430 = vrot.slane %v393, 4
  %v431 = vmax.f32 %v393, %v430
  %v432 = vrot.slane %v431, 2
  %v433 = vmax.f32 %v431, %v432
  %v434 = vrot.slane %v433, 1
  %v435 = vmax.f32 %v433, %v434
  %v436 = vrot.slane %v396, 4
  %v437 = vmax.f32 %v396, %v436
  %v438 = vrot.slane %v437, 2
  %v439 = vmax.f32 %v437, %v438
  %v440 = vrot.slane %v439, 1
  %v441 = vmax.f32 %v439, %v440
  %v442 = vrot.slane %v399, 4
  %v443 = vmax.f32 %v399, %v442
  %v444 = vrot.slane %v443, 2
  %v445 = vmax.f32 %v443, %v444
  %v446 = vrot.slane %v445, 1
  %v447 = vmax.f32 %v445, %v446
  %v448 = vsub.f32 %v378, %v405
  %v449 = vsub.f32 %v381, %v411
  %v450 = vsub.f32 %v384, %v417
  %v451 = vsub.f32 %v387, %v423
  %v452 = vsub.f32 %v390, %v429
  %v453 = vsub.f32 %v393, %v435
  %v454 = vsub.f32 %v396, %v441
  %v455 = vsub.f32 %v399, %v447
  %v456 = vmul.f32 %v448, 1.442695
  %v457 = vpow.pop %v456
  %v458 = vmul.f32 %v449, 1.442695
  %v459 = vpow.pop %v458
  %v460 = vmul.f32 %v450, 1.442695
  %v461 = vpow.pop %v460
  %v462 = vmul.f32 %v451, 1.442695
  %v463 = vpow.pop %v462
  %v464 = vmul.f32 %v452, 1.442695
  %v465 = vpow.pop %v464
  %v466 = vmul.f32 %v453, 1.442695
  %v467 = vpow.pop %v466
  %v468 = vmul.f32 %v454, 1.442695
  %v469 = vpow.pop %v468
  %v470 = vmul.f32 %v455, 1.442695
  %v471 = vpow.pop %v470
  %v472 = vrot.slane %v457, 4
  %v473 = vadd.f32 %v457, %v472
  %v474 = vrot.slane %v473, 2
  %v475 = vadd.f32 %v473, %v474
  %v476 = vrot.slane %v475, 1
  %v477 = vadd.f32 %v475, %v476
  %v478 = vrot.slane %v459, 4
  %v479 = vadd.f32 %v459, %v478
  %v480 = vrot.slane %v479, 2
  %v481 = vadd.f32 %v479, %v480
  %v482 = vrot.slane %v481, 1
  %v483 = vadd.f32 %v481, %v482
  %v484 = vrot.slane %v461, 4
  %v485 = vadd.f32 %v461, %v484
  %v486 = vrot.slane %v485, 2
  %v487 = vadd.f32 %v485, %v486
  %v488 = vrot.slane %v487, 1
  %v489 = vadd.f32 %v487, %v488
  %v490 = vrot.slane %v463, 4
  %v491 = vadd.f32 %v463, %v490
  %v492 = vrot.slane %v491, 2
  %v493 = vadd.f32 %v491, %v492
  %v494 = vrot.slane %v493, 1
  %v495 = vadd.f32 %v493, %v494
  %v496 = vrot.slane %v465, 4
  %v497 = vadd.f32 %v465, %v496
  %v498 = vrot.slane %v497, 2
  %v499 = vadd.f32 %v497, %v498
  %v500 = vrot.slane %v499, 1
  %v501 = vadd.f32 %v499, %v500
  %v502 = vrot.slane %v467, 4
  %v503 = vadd.f32 %v467, %v502
  %v504 = vrot.slane %v503, 2
  %v505 = vadd.f32 %v503, %v504
  %v506 = vrot.slane %v505, 1
  %v507 = vadd.f32 %v505, %v506
  %v508 = vrot.slane %v469, 4
  %v509 = vadd.f32 %v469, %v508
  %v510 = vrot.slane %v509, 2
  %v511 = vadd.f32 %v509, %v510
  %v512 = vrot.slane %v511, 1
  %v513 = vadd.f32 %v511, %v512
  %v514 = vrot.slane %v471, 4
  %v515 = vadd.f32 %v471, %v514
  %v516 = vrot.slane %v515, 2
  %v517 = vadd.f32 %v515, %v516
  %v518 = vrot.slane %v517, 1
  %v519 = vadd.f32 %v517, %v518
  %v520 = vrcp.pop %v477
  %v521 = vmul.f32 %v457, %v520
  %v522 = vrcp.pop %v483
  %v523 = vmul.f32 %v459, %v522
  %v524 = vrcp.pop %v489
  %v525 = vmul.f32 %v461, %v524
  %v526 = vrcp.pop %v495
  %v527 = vmul.f32 %v463, %v526
  %v528 = vrcp.pop %v501
  %v529 = vmul.f32 %v465, %v528
  %v530 = vrcp.pop %v507
  %v531 = vmul.f32 %v467, %v530
  %v532 = vrcp.pop %v513
  %v533 = vmul.f32 %v469, %v532
  %v534 = vrcp.pop %v519
  %v535 = vmul.f32 %v471, %v534
  %v536 = vunpack.c.l.bf16 %v105
  %v537 = vunpack.c.l.bf16 %v109
  %v538 = vunpack.c.l.bf16 %v113
  %v539 = vunpack.c.l.bf16 %v117
  %v540 = vunpack.c.l.bf16 %v121
  %v541 = vunpack.c.l.bf16 %v125
  %v542 = vunpack.c.l.bf16 %v129
  %v543 = vunpack.c.l.bf16 %v133
  %v544 = vmul.f32 %v521, %v536
  %v545 = vmul.f32 %v523, %v537
  %v546 = vmul.f32 %v525, %v538
  %v547 = vmul.f32 %v527, %v539
  %v548 = vmul.f32 %v529, %v540
  %v549 = vmul.f32 %v531, %v541
  %v550 = vmul.f32 %v533, %v542
  %v551 = vmul.f32 %v535, %v543
  %v552 = vpack.c.bf16 %v544, %v544
  %v553 = vpack.c.bf16 %v545, %v545
  %v554 = vpack.c.bf16 %v546, %v546
  %v555 = vpack.c.bf16 %v547, %v547
  %v556 = vpack.c.bf16 %v548, %v548
  %v557 = vpack.c.bf16 %v549, %v549
  %v558 = vpack.c.bf16 %v550, %v550
  %v559 = vpack.c.bf16 %v551, %v551
  %v560 = vlaneseq
  %v561 = vshrl.u32 %v560, 7
  %v562 = vlaneseq
  %v563 = vand.u32 %v562, 127
  %vm564 = vcmp.gt.s32.totalorder %v561, %v563
  %v565 = vsel %vm564, 1, 0
  %v566 = vcvt.s32.f32 %v565
  %v567 = vpack.c.bf16 %v566, %v566
  %568 = vxpose.xlu0.c.b16.start [1/8] %v552, 128
  %569 = vxpose.xlu0.c.b16.cont [2/8] 0, 128
  %570 = vxpose.xlu0.c.b16.cont [3/8] 0, 128
  %571 = vxpose.xlu0.c.b16.cont [4/8] 0, 128
  %572 = vxpose.xlu0.c.b16.cont [5/8] 0, 128
  %573 = vxpose.xlu0.c.b16.cont [6/8] 0, 128
  %574 = vxpose.xlu0.c.b16.cont [7/8] 0, 128
  %575 = vxpose.xlu0.c.b16.end [8/8] 0, 128
  %v576 = vpop.trf.xlu0
  %v577 = vpop.trf.xlu0
  %v578 = vpop.trf.xlu0
  %v579 = vpop.trf.xlu0
  %v580 = vpop.trf.xlu0
  %v581 = vpop.trf.xlu0
  %v582 = vpop.trf.xlu0
  %v583 = vpop.trf.xlu0
  %584 = vxpose.xlu0.c.b16.start [1/8] %v553, 128
  %585 = vxpose.xlu0.c.b16.cont [2/8] 0, 128
  %586 = vxpose.xlu0.c.b16.cont [3/8] 0, 128
  %587 = vxpose.xlu0.c.b16.cont [4/8] 0, 128
  %588 = vxpose.xlu0.c.b16.cont [5/8] 0, 128
  %589 = vxpose.xlu0.c.b16.cont [6/8] 0, 128
  %590 = vxpose.xlu0.c.b16.cont [7/8] 0, 128
  %591 = vxpose.xlu0.c.b16.end [8/8] 0, 128
  %v592 = vpop.trf.xlu0
  %v593 = vpop.trf.xlu0
  %v594 = vpop.trf.xlu0
  %v595 = vpop.trf.xlu0
  %v596 = vpop.trf.xlu0
  %v597 = vpop.trf.xlu0
  %v598 = vpop.trf.xlu0
  %v599 = vpop.trf.xlu0
  %600 = vxpose.xlu0.c.b16.start [1/8] %v554, 128
  %601 = vxpose.xlu0.c.b16.cont [2/8] 0, 128
  %602 = vxpose.xlu0.c.b16.cont [3/8] 0, 128
  %603 = vxpose.xlu0.c.b16.cont [4/8] 0, 128
  %604 = vxpose.xlu0.c.b16.cont [5/8] 0, 128
  %605 = vxpose.xlu0.c.b16.cont [6/8] 0, 128
  %606 = vxpose.xlu0.c.b16.cont [7/8] 0, 128
  %607 = vxpose.xlu0.c.b16.end [8/8] 0, 128
  %v608 = vpop.trf.xlu0
  %v609 = vpop.trf.xlu0
  %v610 = vpop.trf.xlu0
  %v611 = vpop.trf.xlu0
  %v612 = vpop.trf.xlu0
  %v613 = vpop.trf.xlu0
  %v614 = vpop.trf.xlu0
  %v615 = vpop.trf.xlu0
  %616 = vxpose.xlu0.c.b16.start [1/8] %v555, 128
  %617 = vxpose.xlu0.c.b16.cont [2/8] 0, 128
  %618 = vxpose.xlu0.c.b16.cont [3/8] 0, 128
  %619 = vxpose.xlu0.c.b16.cont [4/8] 0, 128
  %620 = vxpose.xlu0.c.b16.cont [5/8] 0, 128
  %621 = vxpose.xlu0.c.b16.cont [6/8] 0, 128
  %622 = vxpose.xlu0.c.b16.cont [7/8] 0, 128
  %623 = vxpose.xlu0.c.b16.end [8/8] 0, 128
  %v624 = vpop.trf.xlu0
  %v625 = vpop.trf.xlu0
  %v626 = vpop.trf.xlu0
  %v627 = vpop.trf.xlu0
  %v628 = vpop.trf.xlu0
  %v629 = vpop.trf.xlu0
  %v630 = vpop.trf.xlu0
  %v631 = vpop.trf.xlu0
  %632 = vxpose.xlu0.c.b16.start [1/8] %v556, 128
  %633 = vxpose.xlu0.c.b16.cont [2/8] 0, 128
  %634 = vxpose.xlu0.c.b16.cont [3/8] 0, 128
  %635 = vxpose.xlu0.c.b16.cont [4/8] 0, 128
  %636 = vxpose.xlu0.c.b16.cont [5/8] 0, 128
  %637 = vxpose.xlu0.c.b16.cont [6/8] 0, 128
  %638 = vxpose.xlu0.c.b16.cont [7/8] 0, 128
  %639 = vxpose.xlu0.c.b16.end [8/8] 0, 128
  %v640 = vpop.trf.xlu0
  %v641 = vpop.trf.xlu0
  %v642 = vpop.trf.xlu0
  %v643 = vpop.trf.xlu0
  %v644 = vpop.trf.xlu0
  %v645 = vpop.trf.xlu0
  %v646 = vpop.trf.xlu0
  %v647 = vpop.trf.xlu0
  %648 = vxpose.xlu0.c.b16.start [1/8] %v557, 128
  %649 = vxpose.xlu0.c.b16.cont [2/8] 0, 128
  %650 = vxpose.xlu0.c.b16.cont [3/8] 0, 128
  %651 = vxpose.xlu0.c.b16.cont [4/8] 0, 128
  %652 = vxpose.xlu0.c.b16.cont [5/8] 0, 128
  %653 = vxpose.xlu0.c.b16.cont [6/8] 0, 128
  %654 = vxpose.xlu0.c.b16.cont [7/8] 0, 128
  %655 = vxpose.xlu0.c.b16.end [8/8] 0, 128
  %v656 = vpop.trf.xlu0
  %v657 = vpop.trf.xlu0
  %v658 = vpop.trf.xlu0
  %v659 = vpop.trf.xlu0
  %v660 = vpop.trf.xlu0
  %v661 = vpop.trf.xlu0
  %v662 = vpop.trf.xlu0
  %v663 = vpop.trf.xlu0
  %664 = vxpose.xlu0.c.b16.start [1/8] %v558, 128
  %665 = vxpose.xlu0.c.b16.cont [2/8] 0, 128
  %666 = vxpose.xlu0.c.b16.cont [3/8] 0, 128
  %667 = vxpose.xlu0.c.b16.cont [4/8] 0, 128
  %668 = vxpose.xlu0.c.b16.cont [5/8] 0, 128
  %669 = vxpose.xlu0.c.b16.cont [6/8] 0, 128
  %670 = vxpose.xlu0.c.b16.cont [7/8] 0, 128
  %671 = vxpose.xlu0.c.b16.end [8/8] 0, 128
  %v672 = vpop.trf.xlu0
  %v673 = vpop.trf.xlu0
  %v674 = vpop.trf.xlu0
  %v675 = vpop.trf.xlu0
  %v676 = vpop.trf.xlu0
  %v677 = vpop.trf.xlu0
  %v678 = vpop.trf.xlu0
  %v679 = vpop.trf.xlu0
  %680 = vxpose.xlu0.c.b16.start [1/8] %v559, 128
  %681 = vxpose.xlu0.c.b16.cont [2/8] 0, 128
  %682 = vxpose.xlu0.c.b16.cont [3/8] 0, 128
  %683 = vxpose.xlu0.c.b16.cont [4/8] 0, 128
  %684 = vxpose.xlu0.c.b16.cont [5/8] 0, 128
  %685 = vxpose.xlu0.c.b16.cont [6/8] 0, 128
  %686 = vxpose.xlu0.c.b16.cont [7/8] 0, 128
  %687 = vxpose.xlu0.c.b16.end [8/8] 0, 128
  %v688 = vpop.trf.xlu0
  %v689 = vpop.trf.xlu0
  %v690 = vpop.trf.xlu0
  %v691 = vpop.trf.xlu0
  %v692 = vpop.trf.xlu0
  %v693 = vpop.trf.xlu0
  %v694 = vpop.trf.xlu0
  %v695 = vpop.trf.xlu0
  %vm696 = vcmask 64512
  %v698 = vsel %vm696, %v576, 0
  %v701 = vsel %vm696, %v577, 0
  %v704 = vsel %vm696, %v578, 0
  %v707 = vsel %vm696, %v579, 0
  %v710 = vsel %vm696, %v580, 0
  %v713 = vsel %vm696, %v581, 0
  %v716 = vsel %vm696, %v582, 0
  %v719 = vsel %vm696, %v583, 0
  %v722 = vsel %vm696, %v592, 0
  %v725 = vsel %vm696, %v593, 0
  %v728 = vsel %vm696, %v594, 0
  %v731 = vsel %vm696, %v595, 0
  %v734 = vsel %vm696, %v596, 0
  %v737 = vsel %vm696, %v597, 0
  %v740 = vsel %vm696, %v598, 0
  %v743 = vsel %vm696, %v599, 0
  %v746 = vsel %vm696, %v608, 0
  %v749 = vsel %vm696, %v609, 0
  %v752 = vsel %vm696, %v610, 0
  %v755 = vsel %vm696, %v611, 0
  %v758 = vsel %vm696, %v612, 0
  %v761 = vsel %vm696, %v613, 0
  %v764 = vsel %vm696, %v614, 0
  %v767 = vsel %vm696, %v615, 0
  %v770 = vsel %vm696, %v624, 0
  %v773 = vsel %vm696, %v625, 0
  %v776 = vsel %vm696, %v626, 0
  %v779 = vsel %vm696, %v627, 0
  %v782 = vsel %vm696, %v628, 0
  %v785 = vsel %vm696, %v629, 0
  %v788 = vsel %vm696, %v630, 0
  %v791 = vsel %vm696, %v631, 0
  %v794 = vsel %vm696, %v640, 0
  %v797 = vsel %vm696, %v641, 0
  %v800 = vsel %vm696, %v642, 0
  %v803 = vsel %vm696, %v643, 0
  %v806 = vsel %vm696, %v644, 0
  %v809 = vsel %vm696, %v645, 0
  %v812 = vsel %vm696, %v646, 0
  %v815 = vsel %vm696, %v647, 0
  %v818 = vsel %vm696, %v656, 0
  %v821 = vsel %vm696, %v657, 0
  %v824 = vsel %vm696, %v658, 0
  %v827 = vsel %vm696, %v659, 0
  %v830 = vsel %vm696, %v660, 0
  %v833 = vsel %vm696, %v661, 0
  %v836 = vsel %vm696, %v662, 0
  %v839 = vsel %vm696, %v663, 0
  %v842 = vsel %vm696, %v672, 0
  %v845 = vsel %vm696, %v673, 0
  %v848 = vsel %vm696, %v674, 0
  %v851 = vsel %vm696, %v675, 0
  %v854 = vsel %vm696, %v676, 0
  %v857 = vsel %vm696, %v677, 0
  %v860 = vsel %vm696, %v678, 0
  %v863 = vsel %vm696, %v679, 0
  %v866 = vsel %vm696, %v688, 0
  %v869 = vsel %vm696, %v689, 0
  %v872 = vsel %vm696, %v690, 0
  %v875 = vsel %vm696, %v691, 0
  %v878 = vsel %vm696, %v692, 0
  %v881 = vsel %vm696, %v693, 0
  %v884 = vsel %vm696, %v694, 0
  %v887 = vsel %vm696, %v695, 0
  %v890 = vsel %vm696, %v567, 0
  %892 = vmatprep.subr.bf16.mxu0 0
  %893 = vmatpush1.bf16.xpose.msra.mxu0 %v890
  %894 = vmatprep.subr.bf16.mxu0 0
  %895 = vmatpush1.bf16.xpose.msra.mxu0 0
  %896 = vmatprep.subr.bf16.mxu0 0
  %897 = vmatpush1.bf16.xpose.msra.mxu0 0
  %898 = vmatprep.subr.bf16.mxu0 0
  %899 = vmatpush1.bf16.xpose.msra.mxu0 0
  %900 = vmatprep.subr.bf16.mxu0 0
  %901 = vmatpush1.bf16.xpose.msra.mxu0 0
  %902 = vmatprep.subr.bf16.mxu0 0
  %903 = vmatpush1.bf16.xpose.msra.mxu0 0
  %904 = vmatprep.subr.bf16.mxu0 0
  %905 = vmatpush1.bf16.xpose.msra.mxu0 0
  %906 = vmatprep.subr.bf16.mxu0 0
  %907 = vmatpush1.bf16.xpose.msra.mxu0 0
  %908 = vmatprep.subr.bf16.mxu0 0
  %909 = vmatpush1.bf16.xpose.msra.mxu0 0
  %910 = vmatprep.subr.bf16.mxu0 0
  %911 = vmatpush1.bf16.xpose.msra.mxu0 0
  %912 = vmatprep.subr.bf16.mxu0 0
  %913 = vmatpush1.bf16.xpose.msra.mxu0 0
  %914 = vmatprep.subr.bf16.mxu0 0
  %915 = vmatpush1.bf16.xpose.msra.mxu0 0
  %916 = vmatprep.subr.bf16.mxu0 0
  %917 = vmatpush1.bf16.xpose.msra.mxu0 0
  %918 = vmatprep.subr.bf16.mxu0 0
  %919 = vmatpush1.bf16.xpose.msra.mxu0 0
  %920 = vmatprep.subr.bf16.mxu0 0
  %921 = vmatpush1.bf16.xpose.msra.mxu0 0
  %922 = vmatprep.subr.bf16.mxu0 0
  %923 = vmatpush1.bf16.xpose.msra.mxu0 0
  %924 = vmatprep.mubr.bf16.mxu0 0
  %925 = vmatmul.mubr.bf16.gmra.mrb[0].mxu0 %v698
  %v926 = vpop.f32.mrb[0].mxu0
  %v927 = vadd.f32 0.0, %v926
  %v928 = vpop.f32.mrb[0].mxu0
  %v929 = vpop.f32.mrb[0].mxu0
  %v930 = vadd.f32 0.0, %v929
  %v931 = vpop.f32.mrb[0].mxu0
  %932 = vmatprep.mubr.bf16.mxu0 0
  %933 = vmatmul.mubr.bf16.gmra.mrb[0].mxu0 %v701
  %v934 = vpop.f32.mrb[0].mxu0
  %v935 = vadd.f32 0.0, %v934
  %v936 = vpop.f32.mrb[0].mxu0
  %v937 = vpop.f32.mrb[0].mxu0
  %v938 = vadd.f32 0.0, %v937
  %v939 = vpop.f32.mrb[0].mxu0
  %940 = vmatprep.mubr.bf16.mxu0 0
  %941 = vmatmul.mubr.bf16.gmra.mrb[0].mxu0 %v704
  %v942 = vpop.f32.mrb[0].mxu0
  %v943 = vadd.f32 0.0, %v942
  %v944 = vpop.f32.mrb[0].mxu0
  %v945 = vpop.f32.mrb[0].mxu0
  %v946 = vadd.f32 0.0, %v945
  %v947 = vpop.f32.mrb[0].mxu0
  %948 = vmatprep.mubr.bf16.mxu0 0
  %949 = vmatmul.mubr.bf16.gmra.mrb[0].mxu0 %v707
  %v950 = vpop.f32.mrb[0].mxu0
  %v951 = vadd.f32 0.0, %v950
  %v952 = vpop.f32.mrb[0].mxu0
  %v953 = vpop.f32.mrb[0].mxu0
  %v954 = vadd.f32 0.0, %v953
  %v955 = vpop.f32.mrb[0].mxu0
  %956 = vmatprep.mubr.bf16.mxu0 0
  %957 = vmatmul.mubr.bf16.gmra.mrb[0].mxu0 %v710
  %v958 = vpop.f32.mrb[0].mxu0
  %v959 = vadd.f32 0.0, %v958
  %v960 = vpop.f32.mrb[0].mxu0
  %v961 = vpop.f32.mrb[0].mxu0
  %v962 = vadd.f32 0.0, %v961
  %v963 = vpop.f32.mrb[0].mxu0
  %964 = vmatprep.mubr.bf16.mxu0 0
  %965 = vmatmul.mubr.bf16.gmra.mrb[0].mxu0 %v713
  %v966 = vpop.f32.mrb[0].mxu0
  %v967 = vadd.f32 0.0, %v966
  %v968 = vpop.f32.mrb[0].mxu0
  %v969 = vpop.f32.mrb[0].mxu0
  %v970 = vadd.f32 0.0, %v969
  %v971 = vpop.f32.mrb[0].mxu0
  %972 = vmatprep.mubr.bf16.mxu0 0
  %973 = vmatmul.mubr.bf16.gmra.mrb[0].mxu0 %v716
  %v974 = vpop.f32.mrb[0].mxu0
  %v975 = vadd.f32 0.0, %v974
  %v976 = vpop.f32.mrb[0].mxu0
  %v977 = vpop.f32.mrb[0].mxu0
  %v978 = vadd.f32 0.0, %v977
  %v979 = vpop.f32.mrb[0].mxu0
  %980 = vmatprep.mubr.bf16.mxu0 0
  %981 = vmatmul.mubr.bf16.gmra.mrb[0].mxu0 %v719
  %v982 = vpop.f32.mrb[0].mxu0
  %v983 = vadd.f32 0.0, %v982
  %v984 = vpop.f32.mrb[0].mxu0
  %v985 = vpop.f32.mrb[0].mxu0
  %v986 = vadd.f32 0.0, %v985
  %v987 = vpop.f32.mrb[0].mxu0
  %988 = vmatprep.mubr.bf16.mxu0 0
  %989 = vmatmul.mubr.bf16.gmra.mrb[0].mxu0 %v722
  %v990 = vpop.f32.mrb[0].mxu0
  %v991 = vadd.f32 0.0, %v990
  %v992 = vpop.f32.mrb[0].mxu0
  %v993 = vpop.f32.mrb[0].mxu0
  %v994 = vadd.f32 0.0, %v993
  %v995 = vpop.f32.mrb[0].mxu0
  %996 = vmatprep.mubr.bf16.mxu0 0
  %997 = vmatmul.mubr.bf16.gmra.mrb[0].mxu0 %v725
  %v998 = vpop.f32.mrb[0].mxu0
  %v999 = vadd.f32 0.0, %v998
  %v1000 = vpop.f32.mrb[0].mxu0
  %v1001 = vpop.f32.mrb[0].mxu0
  %v1002 = vadd.f32 0.0, %v1001
  %v1003 = vpop.f32.mrb[0].mxu0
  %1004 = vmatprep.mubr.bf16.mxu0 0
  %1005 = vmatmul.mubr.bf16.gmra.mrb[0].mxu0 %v728
  %v1006 = vpop.f32.mrb[0].mxu0
  %v1007 = vadd.f32 0.0, %v1006
  %v1008 = vpop.f32.mrb[0].mxu0
  %v1009 = vpop.f32.mrb[0].mxu0
  %v1010 = vadd.f32 0.0, %v1009
  %v1011 = vpop.f32.mrb[0].mxu0
  %1012 = vmatprep.mubr.bf16.mxu0 0
  %1013 = vmatmul.mubr.bf16.gmra.mrb[0].mxu0 %v731
  %v1014 = vpop.f32.mrb[0].mxu0
  %v1015 = vadd.f32 0.0, %v1014
  %v1016 = vpop.f32.mrb[0].mxu0
  %v1017 = vpop.f32.mrb[0].mxu0
  %v1018 = vadd.f32 0.0, %v1017
  %v1019 = vpop.f32.mrb[0].mxu0
  %1020 = vmatprep.mubr.bf16.mxu0 0
  %1021 = vmatmul.mubr.bf16.gmra.mrb[0].mxu0 %v734
  %v1022 = vpop.f32.mrb[0].mxu0
  %v1023 = vadd.f32 0.0, %v1022
  %v1024 = vpop.f32.mrb[0].mxu0
  %v1025 = vpop.f32.mrb[0].mxu0
  %v1026 = vadd.f32 0.0, %v1025
  %v1027 = vpop.f32.mrb[0].mxu0
  %1028 = vmatprep.mubr.bf16.mxu0 0
  %1029 = vmatmul.mubr.bf16.gmra.mrb[0].mxu0 %v737
  %v1030 = vpop.f32.mrb[0].mxu0
  %v1031 = vadd.f32 0.0, %v1030
  %v1032 = vpop.f32.mrb[0].mxu0
  %v1033 = vpop.f32.mrb[0].mxu0
  %v1034 = vadd.f32 0.0, %v1033
  %v1035 = vpop.f32.mrb[0].mxu0
  %1036 = vmatprep.mubr.bf16.mxu0 0
  %1037 = vmatmul.mubr.bf16.gmra.mrb[0].mxu0 %v740
  %v1038 = vpop.f32.mrb[0].mxu0
  %v1039 = vadd.f32 0.0, %v1038
  %v1040 = vpop.f32.mrb[0].mxu0
  %v1041 = vpop.f32.mrb[0].mxu0
  %v1042 = vadd.f32 0.0, %v1041
  %v1043 = vpop.f32.mrb[0].mxu0
  %1044 = vmatprep.mubr.bf16.mxu0 0
  %1045 = vmatmul.mubr.bf16.gmra.mrb[0].mxu0 %v743
  %v1046 = vpop.f32.mrb[0].mxu0
  %v1047 = vadd.f32 0.0, %v1046
  %v1048 = vpop.f32.mrb[0].mxu0
  %v1049 = vpop.f32.mrb[0].mxu0
  %v1050 = vadd.f32 0.0, %v1049
  %v1051 = vpop.f32.mrb[0].mxu0
  %1052 = vmatprep.mubr.bf16.mxu0 0
  %1053 = vmatmul.mubr.bf16.gmra.mrb[0].mxu0 %v746
  %v1054 = vpop.f32.mrb[0].mxu0
  %v1055 = vadd.f32 0.0, %v1054
  %v1056 = vpop.f32.mrb[0].mxu0
  %v1057 = vpop.f32.mrb[0].mxu0
  %v1058 = vadd.f32 0.0, %v1057
  %v1059 = vpop.f32.mrb[0].mxu0
  %1060 = vmatprep.mubr.bf16.mxu0 0
  %1061 = vmatmul.mubr.bf16.gmra.mrb[0].mxu0 %v749
  %v1062 = vpop.f32.mrb[0].mxu0
  %v1063 = vadd.f32 0.0, %v1062
  %v1064 = vpop.f32.mrb[0].mxu0
  %v1065 = vpop.f32.mrb[0].mxu0
  %v1066 = vadd.f32 0.0, %v1065
  %v1067 = vpop.f32.mrb[0].mxu0
  %1068 = vmatprep.mubr.bf16.mxu0 0
  %1069 = vmatmul.mubr.bf16.gmra.mrb[0].mxu0 %v752
  %v1070 = vpop.f32.mrb[0].mxu0
  %v1071 = vadd.f32 0.0, %v1070
  %v1072 = vpop.f32.mrb[0].mxu0
  %v1073 = vpop.f32.mrb[0].mxu0
  %v1074 = vadd.f32 0.0, %v1073
  %v1075 = vpop.f32.mrb[0].mxu0
  %1076 = vmatprep.mubr.bf16.mxu0 0
  %1077 = vmatmul.mubr.bf16.gmra.mrb[0].mxu0 %v755
  %v1078 = vpop.f32.mrb[0].mxu0
  %v1079 = vadd.f32 0.0, %v1078
  %v1080 = vpop.f32.mrb[0].mxu0
  %v1081 = vpop.f32.mrb[0].mxu0
  %v1082 = vadd.f32 0.0, %v1081
  %v1083 = vpop.f32.mrb[0].mxu0
  %1084 = vmatprep.mubr.bf16.mxu0 0
  %1085 = vmatmul.mubr.bf16.gmra.mrb[0].mxu0 %v758
  %v1086 = vpop.f32.mrb[0].mxu0
  %v1087 = vadd.f32 0.0, %v1086
  %v1088 = vpop.f32.mrb[0].mxu0
  %v1089 = vpop.f32.mrb[0].mxu0
  %v1090 = vadd.f32 0.0, %v1089
  %v1091 = vpop.f32.mrb[0].mxu0
  %1092 = vmatprep.mubr.bf16.mxu0 0
  %1093 = vmatmul.mubr.bf16.gmra.mrb[0].mxu0 %v761
  %v1094 = vpop.f32.mrb[0].mxu0
  %v1095 = vadd.f32 0.0, %v1094
  %v1096 = vpop.f32.mrb[0].mxu0
  %v1097 = vpop.f32.mrb[0].mxu0
  %v1098 = vadd.f32 0.0, %v1097
  %v1099 = vpop.f32.mrb[0].mxu0
  %1100 = vmatprep.mubr.bf16.mxu0 0
  %1101 = vmatmul.mubr.bf16.gmra.mrb[0].mxu0 %v764
  %v1102 = vpop.f32.mrb[0].mxu0
  %v1103 = vadd.f32 0.0, %v1102
  %v1104 = vpop.f32.mrb[0].mxu0
  %v1105 = vpop.f32.mrb[0].mxu0
  %v1106 = vadd.f32 0.0, %v1105
  %v1107 = vpop.f32.mrb[0].mxu0
  %1108 = vmatprep.mubr.bf16.mxu0 0
  %1109 = vmatmul.mubr.bf16.gmra.mrb[0].mxu0 %v767
  %v1110 = vpop.f32.mrb[0].mxu0
  %v1111 = vadd.f32 0.0, %v1110
  %v1112 = vpop.f32.mrb[0].mxu0
  %v1113 = vpop.f32.mrb[0].mxu0
  %v1114 = vadd.f32 0.0, %v1113
  %v1115 = vpop.f32.mrb[0].mxu0
  %1116 = vmatprep.mubr.bf16.mxu0 0
  %1117 = vmatmul.mubr.bf16.gmra.mrb[0].mxu0 %v770
  %v1118 = vpop.f32.mrb[0].mxu0
  %v1119 = vadd.f32 0.0, %v1118
  %v1120 = vpop.f32.mrb[0].mxu0
  %v1121 = vpop.f32.mrb[0].mxu0
  %v1122 = vadd.f32 0.0, %v1121
  %v1123 = vpop.f32.mrb[0].mxu0
  %1124 = vmatprep.mubr.bf16.mxu0 0
  %1125 = vmatmul.mubr.bf16.gmra.mrb[0].mxu0 %v773
  %v1126 = vpop.f32.mrb[0].mxu0
  %v1127 = vadd.f32 0.0, %v1126
  %v1128 = vpop.f32.mrb[0].mxu0
  %v1129 = vpop.f32.mrb[0].mxu0
  %v1130 = vadd.f32 0.0, %v1129
  %v1131 = vpop.f32.mrb[0].mxu0
  %1132 = vmatprep.mubr.bf16.mxu0 0
  %1133 = vmatmul.mubr.bf16.gmra.mrb[0].mxu0 %v776
  %v1134 = vpop.f32.mrb[0].mxu0
  %v1135 = vadd.f32 0.0, %v1134
  %v1136 = vpop.f32.mrb[0].mxu0
  %v1137 = vpop.f32.mrb[0].mxu0
  %v1138 = vadd.f32 0.0, %v1137
  %v1139 = vpop.f32.mrb[0].mxu0
  %1140 = vmatprep.mubr.bf16.mxu0 0
  %1141 = vmatmul.mubr.bf16.gmra.mrb[0].mxu0 %v779
  %v1142 = vpop.f32.mrb[0].mxu0
  %v1143 = vadd.f32 0.0, %v1142
  %v1144 = vpop.f32.mrb[0].mxu0
  %v1145 = vpop.f32.mrb[0].mxu0
  %v1146 = vadd.f32 0.0, %v1145
  %v1147 = vpop.f32.mrb[0].mxu0
  %1148 = vmatprep.mubr.bf16.mxu0 0
  %1149 = vmatmul.mubr.bf16.gmra.mrb[0].mxu0 %v782
  %v1150 = vpop.f32.mrb[0].mxu0
  %v1151 = vadd.f32 0.0, %v1150
  %v1152 = vpop.f32.mrb[0].mxu0
  %v1153 = vpop.f32.mrb[0].mxu0
  %v1154 = vadd.f32 0.0, %v1153
  %v1155 = vpop.f32.mrb[0].mxu0
  %1156 = vmatprep.mubr.bf16.mxu0 0
  %1157 = vmatmul.mubr.bf16.gmra.mrb[0].mxu0 %v785
  %v1158 = vpop.f32.mrb[0].mxu0
  %v1159 = vadd.f32 0.0, %v1158
  %v1160 = vpop.f32.mrb[0].mxu0
  %v1161 = vpop.f32.mrb[0].mxu0
  %v1162 = vadd.f32 0.0, %v1161
  %v1163 = vpop.f32.mrb[0].mxu0
  %1164 = vmatprep.mubr.bf16.mxu0 0
  %1165 = vmatmul.mubr.bf16.gmra.mrb[0].mxu0 %v788
  %v1166 = vpop.f32.mrb[0].mxu0
  %v1167 = vadd.f32 0.0, %v1166
  %v1168 = vpop.f32.mrb[0].mxu0
  %v1169 = vpop.f32.mrb[0].mxu0
  %v1170 = vadd.f32 0.0, %v1169
  %v1171 = vpop.f32.mrb[0].mxu0
  %1172 = vmatprep.mubr.bf16.mxu0 0
  %1173 = vmatmul.mubr.bf16.gmra.mrb[0].mxu0 %v791
  %v1174 = vpop.f32.mrb[0].mxu0
  %v1175 = vadd.f32 0.0, %v1174
  %v1176 = vpop.f32.mrb[0].mxu0
  %v1177 = vpop.f32.mrb[0].mxu0
  %v1178 = vadd.f32 0.0, %v1177
  %v1179 = vpop.f32.mrb[0].mxu0
  %1180 = vmatprep.mubr.bf16.mxu0 0
  %1181 = vmatmul.mubr.bf16.gmra.mrb[0].mxu0 %v794
  %v1182 = vpop.f32.mrb[0].mxu0
  %v1183 = vadd.f32 0.0, %v1182
  %v1184 = vpop.f32.mrb[0].mxu0
  %v1185 = vpop.f32.mrb[0].mxu0
  %v1186 = vadd.f32 0.0, %v1185
  %v1187 = vpop.f32.mrb[0].mxu0
  %1188 = vmatprep.mubr.bf16.mxu0 0
  %1189 = vmatmul.mubr.bf16.gmra.mrb[0].mxu0 %v797
  %v1190 = vpop.f32.mrb[0].mxu0
  %v1191 = vadd.f32 0.0, %v1190
  %v1192 = vpop.f32.mrb[0].mxu0
  %v1193 = vpop.f32.mrb[0].mxu0
  %v1194 = vadd.f32 0.0, %v1193
  %v1195 = vpop.f32.mrb[0].mxu0
  %1196 = vmatprep.mubr.bf16.mxu0 0
  %1197 = vmatmul.mubr.bf16.gmra.mrb[0].mxu0 %v800
  %v1198 = vpop.f32.mrb[0].mxu0
  %v1199 = vadd.f32 0.0, %v1198
  %v1200 = vpop.f32.mrb[0].mxu0
  %v1201 = vpop.f32.mrb[0].mxu0
  %v1202 = vadd.f32 0.0, %v1201
  %v1203 = vpop.f32.mrb[0].mxu0
  %1204 = vmatprep.mubr.bf16.mxu0 0
  %1205 = vmatmul.mubr.bf16.gmra.mrb[0].mxu0 %v803
  %v1206 = vpop.f32.mrb[0].mxu0
  %v1207 = vadd.f32 0.0, %v1206
  %v1208 = vpop.f32.mrb[0].mxu0
  %v1209 = vpop.f32.mrb[0].mxu0
  %v1210 = vadd.f32 0.0, %v1209
  %v1211 = vpop.f32.mrb[0].mxu0
  %1212 = vmatprep.mubr.bf16.mxu0 0
  %1213 = vmatmul.mubr.bf16.gmra.mrb[0].mxu0 %v806
  %v1214 = vpop.f32.mrb[0].mxu0
  %v1215 = vadd.f32 0.0, %v1214
  %v1216 = vpop.f32.mrb[0].mxu0
  %v1217 = vpop.f32.mrb[0].mxu0
  %v1218 = vadd.f32 0.0, %v1217
  %v1219 = vpop.f32.mrb[0].mxu0
  %1220 = vmatprep.mubr.bf16.mxu0 0
  %1221 = vmatmul.mubr.bf16.gmra.mrb[0].mxu0 %v809
  %v1222 = vpop.f32.mrb[0].mxu0
  %v1223 = vadd.f32 0.0, %v1222
  %v1224 = vpop.f32.mrb[0].mxu0
  %v1225 = vpop.f32.mrb[0].mxu0
  %v1226 = vadd.f32 0.0, %v1225
  %v1227 = vpop.f32.mrb[0].mxu0
  %1228 = vmatprep.mubr.bf16.mxu0 0
  %1229 = vmatmul.mubr.bf16.gmra.mrb[0].mxu0 %v812
  %v1230 = vpop.f32.mrb[0].mxu0
  %v1231 = vadd.f32 0.0, %v1230
  %v1232 = vpop.f32.mrb[0].mxu0
  %v1233 = vpop.f32.mrb[0].mxu0
  %v1234 = vadd.f32 0.0, %v1233
  %v1235 = vpop.f32.mrb[0].mxu0
  %1236 = vmatprep.mubr.bf16.mxu0 0
  %1237 = vmatmul.mubr.bf16.gmra.mrb[0].mxu0 %v815
  %v1238 = vpop.f32.mrb[0].mxu0
  %v1239 = vadd.f32 0.0, %v1238
  %v1240 = vpop.f32.mrb[0].mxu0
  %v1241 = vpop.f32.mrb[0].mxu0
  %v1242 = vadd.f32 0.0, %v1241
  %v1243 = vpop.f32.mrb[0].mxu0
  %1244 = vmatprep.mubr.bf16.mxu0 0
  %1245 = vmatmul.mubr.bf16.gmra.mrb[0].mxu0 %v818
  %v1246 = vpop.f32.mrb[0].mxu0
  %v1247 = vadd.f32 0.0, %v1246
  %v1248 = vpop.f32.mrb[0].mxu0
  %v1249 = vpop.f32.mrb[0].mxu0
  %v1250 = vadd.f32 0.0, %v1249
  %v1251 = vpop.f32.mrb[0].mxu0
  %1252 = vmatprep.mubr.bf16.mxu0 0
  %1253 = vmatmul.mubr.bf16.gmra.mrb[0].mxu0 %v821
  %v1254 = vpop.f32.mrb[0].mxu0
  %v1255 = vadd.f32 0.0, %v1254
  %v1256 = vpop.f32.mrb[0].mxu0
  %v1257 = vpop.f32.mrb[0].mxu0
  %v1258 = vadd.f32 0.0, %v1257
  %v1259 = vpop.f32.mrb[0].mxu0
  %1260 = vmatprep.mubr.bf16.mxu0 0
  %1261 = vmatmul.mubr.bf16.gmra.mrb[0].mxu0 %v824
  %v1262 = vpop.f32.mrb[0].mxu0
  %v1263 = vadd.f32 0.0, %v1262
  %v1264 = vpop.f32.mrb[0].mxu0
  %v1265 = vpop.f32.mrb[0].mxu0
  %v1266 = vadd.f32 0.0, %v1265
  %v1267 = vpop.f32.mrb[0].mxu0
  %1268 = vmatprep.mubr.bf16.mxu0 0
  %1269 = vmatmul.mubr.bf16.gmra.mrb[0].mxu0 %v827
  %v1270 = vpop.f32.mrb[0].mxu0
  %v1271 = vadd.f32 0.0, %v1270
  %v1272 = vpop.f32.mrb[0].mxu0
  %v1273 = vpop.f32.mrb[0].mxu0
  %v1274 = vadd.f32 0.0, %v1273
  %v1275 = vpop.f32.mrb[0].mxu0
  %1276 = vmatprep.mubr.bf16.mxu0 0
  %1277 = vmatmul.mubr.bf16.gmra.mrb[0].mxu0 %v830
  %v1278 = vpop.f32.mrb[0].mxu0
  %v1279 = vadd.f32 0.0, %v1278
  %v1280 = vpop.f32.mrb[0].mxu0
  %v1281 = vpop.f32.mrb[0].mxu0
  %v1282 = vadd.f32 0.0, %v1281
  %v1283 = vpop.f32.mrb[0].mxu0
  %1284 = vmatprep.mubr.bf16.mxu0 0
  %1285 = vmatmul.mubr.bf16.gmra.mrb[0].mxu0 %v833
  %v1286 = vpop.f32.mrb[0].mxu0
  %v1287 = vadd.f32 0.0, %v1286
  %v1288 = vpop.f32.mrb[0].mxu0
  %v1289 = vpop.f32.mrb[0].mxu0
  %v1290 = vadd.f32 0.0, %v1289
  %v1291 = vpop.f32.mrb[0].mxu0
  %1292 = vmatprep.mubr.bf16.mxu0 0
  %1293 = vmatmul.mubr.bf16.gmra.mrb[0].mxu0 %v836
  %v1294 = vpop.f32.mrb[0].mxu0
  %v1295 = vadd.f32 0.0, %v1294
  %v1296 = vpop.f32.mrb[0].mxu0
  %v1297 = vpop.f32.mrb[0].mxu0
  %v1298 = vadd.f32 0.0, %v1297
  %v1299 = vpop.f32.mrb[0].mxu0
  %1300 = vmatprep.mubr.bf16.mxu0 0
  %1301 = vmatmul.mubr.bf16.gmra.mrb[0].mxu0 %v839
  %v1302 = vpop.f32.mrb[0].mxu0
  %v1303 = vadd.f32 0.0, %v1302
  %v1304 = vpop.f32.mrb[0].mxu0
  %v1305 = vpop.f32.mrb[0].mxu0
  %v1306 = vadd.f32 0.0, %v1305
  %v1307 = vpop.f32.mrb[0].mxu0
  %1308 = vmatprep.mubr.bf16.mxu0 0
  %1309 = vmatmul.mubr.bf16.gmra.mrb[0].mxu0 %v842
  %v1310 = vpop.f32.mrb[0].mxu0
  %v1311 = vadd.f32 0.0, %v1310
  %v1312 = vpop.f32.mrb[0].mxu0
  %v1313 = vpop.f32.mrb[0].mxu0
  %v1314 = vadd.f32 0.0, %v1313
  %v1315 = vpop.f32.mrb[0].mxu0
  %1316 = vmatprep.mubr.bf16.mxu0 0
  %1317 = vmatmul.mubr.bf16.gmra.mrb[0].mxu0 %v845
  %v1318 = vpop.f32.mrb[0].mxu0
  %v1319 = vadd.f32 0.0, %v1318
  %v1320 = vpop.f32.mrb[0].mxu0
  %v1321 = vpop.f32.mrb[0].mxu0
  %v1322 = vadd.f32 0.0, %v1321
  %v1323 = vpop.f32.mrb[0].mxu0
  %1324 = vmatprep.mubr.bf16.mxu0 0
  %1325 = vmatmul.mubr.bf16.gmra.mrb[0].mxu0 %v848
  %v1326 = vpop.f32.mrb[0].mxu0
  %v1327 = vadd.f32 0.0, %v1326
  %v1328 = vpop.f32.mrb[0].mxu0
  %v1329 = vpop.f32.mrb[0].mxu0
  %v1330 = vadd.f32 0.0, %v1329
  %v1331 = vpop.f32.mrb[0].mxu0
  %1332 = vmatprep.mubr.bf16.mxu0 0
  %1333 = vmatmul.mubr.bf16.gmra.mrb[0].mxu0 %v851
  %v1334 = vpop.f32.mrb[0].mxu0
  %v1335 = vadd.f32 0.0, %v1334
  %v1336 = vpop.f32.mrb[0].mxu0
  %v1337 = vpop.f32.mrb[0].mxu0
  %v1338 = vadd.f32 0.0, %v1337
  %v1339 = vpop.f32.mrb[0].mxu0
  %1340 = vmatprep.mubr.bf16.mxu0 0
  %1341 = vmatmul.mubr.bf16.gmra.mrb[0].mxu0 %v854
  %v1342 = vpop.f32.mrb[0].mxu0
  %v1343 = vadd.f32 0.0, %v1342
  %v1344 = vpop.f32.mrb[0].mxu0
  %v1345 = vpop.f32.mrb[0].mxu0
  %v1346 = vadd.f32 0.0, %v1345
  %v1347 = vpop.f32.mrb[0].mxu0
  %1348 = vmatprep.mubr.bf16.mxu0 0
  %1349 = vmatmul.mubr.bf16.gmra.mrb[0].mxu0 %v857
  %v1350 = vpop.f32.mrb[0].mxu0
  %v1351 = vadd.f32 0.0, %v1350
  %v1352 = vpop.f32.mrb[0].mxu0
  %v1353 = vpop.f32.mrb[0].mxu0
  %v1354 = vadd.f32 0.0, %v1353
  %v1355 = vpop.f32.mrb[0].mxu0
  %1356 = vmatprep.mubr.bf16.mxu0 0
  %1357 = vmatmul.mubr.bf16.gmra.mrb[0].mxu0 %v860
  %v1358 = vpop.f32.mrb[0].mxu0
  %v1359 = vadd.f32 0.0, %v1358
  %v1360 = vpop.f32.mrb[0].mxu0
  %v1361 = vpop.f32.mrb[0].mxu0
  %v1362 = vadd.f32 0.0, %v1361
  %v1363 = vpop.f32.mrb[0].mxu0
  %1364 = vmatprep.mubr.bf16.mxu0 0
  %1365 = vmatmul.mubr.bf16.gmra.mrb[0].mxu0 %v863
  %v1366 = vpop.f32.mrb[0].mxu0
  %v1367 = vadd.f32 0.0, %v1366
  %v1368 = vpop.f32.mrb[0].mxu0
  %v1369 = vpop.f32.mrb[0].mxu0
  %v1370 = vadd.f32 0.0, %v1369
  %v1371 = vpop.f32.mrb[0].mxu0
  %1372 = vmatprep.mubr.bf16.mxu0 0
  %1373 = vmatmul.mubr.bf16.gmra.mrb[0].mxu0 %v866
  %v1374 = vpop.f32.mrb[0].mxu0
  %v1375 = vadd.f32 0.0, %v1374
  %v1376 = vpop.f32.mrb[0].mxu0
  %v1377 = vpop.f32.mrb[0].mxu0
  %v1378 = vadd.f32 0.0, %v1377
  %v1379 = vpop.f32.mrb[0].mxu0
  %1380 = vmatprep.mubr.bf16.mxu0 0
  %1381 = vmatmul.mubr.bf16.gmra.mrb[0].mxu0 %v869
  %v1382 = vpop.f32.mrb[0].mxu0
  %v1383 = vadd.f32 0.0, %v1382
  %v1384 = vpop.f32.mrb[0].mxu0
  %v1385 = vpop.f32.mrb[0].mxu0
  %v1386 = vadd.f32 0.0, %v1385
  %v1387 = vpop.f32.mrb[0].mxu0
  %1388 = vmatprep.mubr.bf16.mxu0 0
  %1389 = vmatmul.mubr.bf16.gmra.mrb[0].mxu0 %v872
  %v1390 = vpop.f32.mrb[0].mxu0
  %v1391 = vadd.f32 0.0, %v1390
  %v1392 = vpop.f32.mrb[0].mxu0
  %v1393 = vpop.f32.mrb[0].mxu0
  %v1394 = vadd.f32 0.0, %v1393
  %v1395 = vpop.f32.mrb[0].mxu0
  %1396 = vmatprep.mubr.bf16.mxu0 0
  %1397 = vmatmul.mubr.bf16.gmra.mrb[0].mxu0 %v875
  %v1398 = vpop.f32.mrb[0].mxu0
  %v1399 = vadd.f32 0.0, %v1398
  %v1400 = vpop.f32.mrb[0].mxu0
  %v1401 = vpop.f32.mrb[0].mxu0
  %v1402 = vadd.f32 0.0, %v1401
  %v1403 = vpop.f32.mrb[0].mxu0
  %1404 = vmatprep.mubr.bf16.mxu0 0
  %1405 = vmatmul.mubr.bf16.gmra.mrb[0].mxu0 %v878
  %v1406 = vpop.f32.mrb[0].mxu0
  %v1407 = vadd.f32 0.0, %v1406
  %v1408 = vpop.f32.mrb[0].mxu0
  %v1409 = vpop.f32.mrb[0].mxu0
  %v1410 = vadd.f32 0.0, %v1409
  %v1411 = vpop.f32.mrb[0].mxu0
  %1412 = vmatprep.mubr.bf16.mxu0 0
  %1413 = vmatmul.mubr.bf16.gmra.mrb[0].mxu0 %v881
  %v1414 = vpop.f32.mrb[0].mxu0
  %v1415 = vadd.f32 0.0, %v1414
  %v1416 = vpop.f32.mrb[0].mxu0
  %v1417 = vpop.f32.mrb[0].mxu0
  %v1418 = vadd.f32 0.0, %v1417
  %v1419 = vpop.f32.mrb[0].mxu0
  %1420 = vmatprep.mubr.bf16.mxu0 0
  %1421 = vmatmul.mubr.bf16.gmra.mrb[0].mxu0 %v884
  %v1422 = vpop.f32.mrb[0].mxu0
  %v1423 = vadd.f32 0.0, %v1422
  %v1424 = vpop.f32.mrb[0].mxu0
  %v1425 = vpop.f32.mrb[0].mxu0
  %v1426 = vadd.f32 0.0, %v1425
  %v1427 = vpop.f32.mrb[0].mxu0
  %1428 = vmatprep.mubr.bf16.mxu0 0
  %1429 = vmatmul.mubr.bf16.gmra.mrb[0].mxu0 %v887
  %v1430 = vpop.f32.mrb[0].mxu0
  %v1431 = vadd.f32 0.0, %v1430
  %v1432 = vpop.f32.mrb[0].mxu0
  %v1433 = vpop.f32.mrb[0].mxu0
  %v1434 = vadd.f32 0.0, %v1433
  %v1435 = vpop.f32.mrb[0].mxu0
  %1436 = vdwg.mxu0
  %1437 = vxpose.xlu0.b32.start [1/16] %v927, 128
  %1438 = vxpose.xlu0.b32.cont [2/16] %v930, 128
  %1439 = vxpose.xlu0.b32.cont [3/16] %v935, 128
  %1440 = vxpose.xlu0.b32.cont [4/16] %v938, 128
  %1441 = vxpose.xlu0.b32.cont [5/16] %v943, 128
  %1442 = vxpose.xlu0.b32.cont [6/16] %v946, 128
  %1443 = vxpose.xlu0.b32.cont [7/16] %v951, 128
  %1444 = vxpose.xlu0.b32.cont [8/16] %v954, 128
  %1445 = vxpose.xlu0.b32.cont [9/16] %v959, 128
  %1446 = vxpose.xlu0.b32.cont [10/16] %v962, 128
  %1447 = vxpose.xlu0.b32.cont [11/16] %v967, 128
  %1448 = vxpose.xlu0.b32.cont [12/16] %v970, 128
  %1449 = vxpose.xlu0.b32.cont [13/16] %v975, 128
  %1450 = vxpose.xlu0.b32.cont [14/16] %v978, 128
  %1451 = vxpose.xlu0.b32.cont [15/16] %v983, 128
  %1452 = vxpose.xlu0.b32.end [16/16] %v986, 128
  %v1453 = vpop.trf.xlu0
  %v1454 = vpop.trf.xlu0
  %v1455 = vpop.trf.xlu0
  %v1456 = vpop.trf.xlu0
  %v1457 = vpop.trf.xlu0
  %v1458 = vpop.trf.xlu0
  %v1459 = vpop.trf.xlu0
  %v1460 = vpop.trf.xlu0
  %v1461 = vpop.trf.xlu0
  %v1462 = vpop.trf.xlu0
  %v1463 = vpop.trf.xlu0
  %v1464 = vpop.trf.xlu0
  %v1465 = vpop.trf.xlu0
  %v1466 = vpop.trf.xlu0
  %v1467 = vpop.trf.xlu0
  %v1468 = vpop.trf.xlu0
  %1469 = vxpose.xlu0.b32.start [1/16] %v991, 128
  %1470 = vxpose.xlu0.b32.cont [2/16] %v994, 128
  %1471 = vxpose.xlu0.b32.cont [3/16] %v999, 128
  %1472 = vxpose.xlu0.b32.cont [4/16] %v1002, 128
  %1473 = vxpose.xlu0.b32.cont [5/16] %v1007, 128
  %1474 = vxpose.xlu0.b32.cont [6/16] %v1010, 128
  %1475 = vxpose.xlu0.b32.cont [7/16] %v1015, 128
  %1476 = vxpose.xlu0.b32.cont [8/16] %v1018, 128
  %1477 = vxpose.xlu0.b32.cont [9/16] %v1023, 128
  %1478 = vxpose.xlu0.b32.cont [10/16] %v1026, 128
  %1479 = vxpose.xlu0.b32.cont [11/16] %v1031, 128
  %1480 = vxpose.xlu0.b32.cont [12/16] %v1034, 128
  %1481 = vxpose.xlu0.b32.cont [13/16] %v1039, 128
  %1482 = vxpose.xlu0.b32.cont [14/16] %v1042, 128
  %1483 = vxpose.xlu0.b32.cont [15/16] %v1047, 128
  %1484 = vxpose.xlu0.b32.end [16/16] %v1050, 128
  %v1485 = vpop.trf.xlu0
  %v1486 = vpop.trf.xlu0
  %v1487 = vpop.trf.xlu0
  %v1488 = vpop.trf.xlu0
  %v1489 = vpop.trf.xlu0
  %v1490 = vpop.trf.xlu0
  %v1491 = vpop.trf.xlu0
  %v1492 = vpop.trf.xlu0
  %v1493 = vpop.trf.xlu0
  %v1494 = vpop.trf.xlu0
  %v1495 = vpop.trf.xlu0
  %v1496 = vpop.trf.xlu0
  %v1497 = vpop.trf.xlu0
  %v1498 = vpop.trf.xlu0
  %v1499 = vpop.trf.xlu0
  %v1500 = vpop.trf.xlu0
  %1501 = vxpose.xlu0.b32.start [1/16] %v1055, 128
  %1502 = vxpose.xlu0.b32.cont [2/16] %v1058, 128
  %1503 = vxpose.xlu0.b32.cont [3/16] %v1063, 128
  %1504 = vxpose.xlu0.b32.cont [4/16] %v1066, 128
  %1505 = vxpose.xlu0.b32.cont [5/16] %v1071, 128
  %1506 = vxpose.xlu0.b32.cont [6/16] %v1074, 128
  %1507 = vxpose.xlu0.b32.cont [7/16] %v1079, 128
  %1508 = vxpose.xlu0.b32.cont [8/16] %v1082, 128
  %1509 = vxpose.xlu0.b32.cont [9/16] %v1087, 128
  %1510 = vxpose.xlu0.b32.cont [10/16] %v1090, 128
  %1511 = vxpose.xlu0.b32.cont [11/16] %v1095, 128
  %1512 = vxpose.xlu0.b32.cont [12/16] %v1098, 128
  %1513 = vxpose.xlu0.b32.cont [13/16] %v1103, 128
  %1514 = vxpose.xlu0.b32.cont [14/16] %v1106, 128
  %1515 = vxpose.xlu0.b32.cont [15/16] %v1111, 128
  %1516 = vxpose.xlu0.b32.end [16/16] %v1114, 128
  %v1517 = vpop.trf.xlu0
  %v1518 = vpop.trf.xlu0
  %v1519 = vpop.trf.xlu0
  %v1520 = vpop.trf.xlu0
  %v1521 = vpop.trf.xlu0
  %v1522 = vpop.trf.xlu0
  %v1523 = vpop.trf.xlu0
  %v1524 = vpop.trf.xlu0
  %v1525 = vpop.trf.xlu0
  %v1526 = vpop.trf.xlu0
  %v1527 = vpop.trf.xlu0
  %v1528 = vpop.trf.xlu0
  %v1529 = vpop.trf.xlu0
  %v1530 = vpop.trf.xlu0
  %v1531 = vpop.trf.xlu0
  %v1532 = vpop.trf.xlu0
  %1533 = vxpose.xlu0.b32.start [1/16] %v1119, 128
  %1534 = vxpose.xlu0.b32.cont [2/16] %v1122, 128
  %1535 = vxpose.xlu0.b32.cont [3/16] %v1127, 128
  %1536 = vxpose.xlu0.b32.cont [4/16] %v1130, 128
  %1537 = vxpose.xlu0.b32.cont [5/16] %v1135, 128
  %1538 = vxpose.xlu0.b32.cont [6/16] %v1138, 128
  %1539 = vxpose.xlu0.b32.cont [7/16] %v1143, 128
  %1540 = vxpose.xlu0.b32.cont [8/16] %v1146, 128
  %1541 = vxpose.xlu0.b32.cont [9/16] %v1151, 128
  %1542 = vxpose.xlu0.b32.cont [10/16] %v1154, 128
  %1543 = vxpose.xlu0.b32.cont [11/16] %v1159, 128
  %1544 = vxpose.xlu0.b32.cont [12/16] %v1162, 128
  %1545 = vxpose.xlu0.b32.cont [13/16] %v1167, 128
  %1546 = vxpose.xlu0.b32.cont [14/16] %v1170, 128
  %1547 = vxpose.xlu0.b32.cont [15/16] %v1175, 128
  %1548 = vxpose.xlu0.b32.end [16/16] %v1178, 128
  %v1549 = vpop.trf.xlu0
  %v1550 = vpop.trf.xlu0
  %v1551 = vpop.trf.xlu0
  %v1552 = vpop.trf.xlu0
  %v1553 = vpop.trf.xlu0
  %v1554 = vpop.trf.xlu0
  %v1555 = vpop.trf.xlu0
  %v1556 = vpop.trf.xlu0
  %v1557 = vpop.trf.xlu0
  %v1558 = vpop.trf.xlu0
  %v1559 = vpop.trf.xlu0
  %v1560 = vpop.trf.xlu0
  %v1561 = vpop.trf.xlu0
  %v1562 = vpop.trf.xlu0
  %v1563 = vpop.trf.xlu0
  %v1564 = vpop.trf.xlu0
  %1565 = vxpose.xlu0.b32.start [1/16] %v1183, 128
  %1566 = vxpose.xlu0.b32.cont [2/16] %v1186, 128
  %1567 = vxpose.xlu0.b32.cont [3/16] %v1191, 128
  %1568 = vxpose.xlu0.b32.cont [4/16] %v1194, 128
  %1569 = vxpose.xlu0.b32.cont [5/16] %v1199, 128
  %1570 = vxpose.xlu0.b32.cont [6/16] %v1202, 128
  %1571 = vxpose.xlu0.b32.cont [7/16] %v1207, 128
  %1572 = vxpose.xlu0.b32.cont [8/16] %v1210, 128
  %1573 = vxpose.xlu0.b32.cont [9/16] %v1215, 128
  %1574 = vxpose.xlu0.b32.cont [10/16] %v1218, 128
  %1575 = vxpose.xlu0.b32.cont [11/16] %v1223, 128
  %1576 = vxpose.xlu0.b32.cont [12/16] %v1226, 128
  %1577 = vxpose.xlu0.b32.cont [13/16] %v1231, 128
  %1578 = vxpose.xlu0.b32.cont [14/16] %v1234, 128
  %1579 = vxpose.xlu0.b32.cont [15/16] %v1239, 128
  %1580 = vxpose.xlu0.b32.end [16/16] %v1242, 128
  %v1581 = vpop.trf.xlu0
  %v1582 = vpop.trf.xlu0
  %v1583 = vpop.trf.xlu0
  %v1584 = vpop.trf.xlu0
  %v1585 = vpop.trf.xlu0
  %v1586 = vpop.trf.xlu0
  %v1587 = vpop.trf.xlu0
  %v1588 = vpop.trf.xlu0
  %v1589 = vpop.trf.xlu0
  %v1590 = vpop.trf.xlu0
  %v1591 = vpop.trf.xlu0
  %v1592 = vpop.trf.xlu0
  %v1593 = vpop.trf.xlu0
  %v1594 = vpop.trf.xlu0
  %v1595 = vpop.trf.xlu0
  %v1596 = vpop.trf.xlu0
  %1597 = vxpose.xlu0.b32.start [1/16] %v1247, 128
  %1598 = vxpose.xlu0.b32.cont [2/16] %v1250, 128
  %1599 = vxpose.xlu0.b32.cont [3/16] %v1255, 128
  %1600 = vxpose.xlu0.b32.cont [4/16] %v1258, 128
  %1601 = vxpose.xlu0.b32.cont [5/16] %v1263, 128
  %1602 = vxpose.xlu0.b32.cont [6/16] %v1266, 128
  %1603 = vxpose.xlu0.b32.cont [7/16] %v1271, 128
  %1604 = vxpose.xlu0.b32.cont [8/16] %v1274, 128
  %1605 = vxpose.xlu0.b32.cont [9/16] %v1279, 128
  %1606 = vxpose.xlu0.b32.cont [10/16] %v1282, 128
  %1607 = vxpose.xlu0.b32.cont [11/16] %v1287, 128
  %1608 = vxpose.xlu0.b32.cont [12/16] %v1290, 128
  %1609 = vxpose.xlu0.b32.cont [13/16] %v1295, 128
  %1610 = vxpose.xlu0.b32.cont [14/16] %v1298, 128
  %1611 = vxpose.xlu0.b32.cont [15/16] %v1303, 128
  %1612 = vxpose.xlu0.b32.end [16/16] %v1306, 128
  %v1613 = vpop.trf.xlu0
  %v1614 = vpop.trf.xlu0
  %v1615 = vpop.trf.xlu0
  %v1616 = vpop.trf.xlu0
  %v1617 = vpop.trf.xlu0
  %v1618 = vpop.trf.xlu0
  %v1619 = vpop.trf.xlu0
  %v1620 = vpop.trf.xlu0
  %v1621 = vpop.trf.xlu0
  %v1622 = vpop.trf.xlu0
  %v1623 = vpop.trf.xlu0
  %v1624 = vpop.trf.xlu0
  %v1625 = vpop.trf.xlu0
  %v1626 = vpop.trf.xlu0
  %v1627 = vpop.trf.xlu0
  %v1628 = vpop.trf.xlu0
  %1629 = vxpose.xlu0.b32.start [1/16] %v1311, 128
  %1630 = vxpose.xlu0.b32.cont [2/16] %v1314, 128
  %1631 = vxpose.xlu0.b32.cont [3/16] %v1319, 128
  %1632 = vxpose.xlu0.b32.cont [4/16] %v1322, 128
  %1633 = vxpose.xlu0.b32.cont [5/16] %v1327, 128
  %1634 = vxpose.xlu0.b32.cont [6/16] %v1330, 128
  %1635 = vxpose.xlu0.b32.cont [7/16] %v1335, 128
  %1636 = vxpose.xlu0.b32.cont [8/16] %v1338, 128
  %1637 = vxpose.xlu0.b32.cont [9/16] %v1343, 128
  %1638 = vxpose.xlu0.b32.cont [10/16] %v1346, 128
  %1639 = vxpose.xlu0.b32.cont [11/16] %v1351, 128
  %1640 = vxpose.xlu0.b32.cont [12/16] %v1354, 128
  %1641 = vxpose.xlu0.b32.cont [13/16] %v1359, 128
  %1642 = vxpose.xlu0.b32.cont [14/16] %v1362, 128
  %1643 = vxpose.xlu0.b32.cont [15/16] %v1367, 128
  %1644 = vxpose.xlu0.b32.end [16/16] %v1370, 128
  %v1645 = vpop.trf.xlu0
  %v1646 = vpop.trf.xlu0
  %v1647 = vpop.trf.xlu0
  %v1648 = vpop.trf.xlu0
  %v1649 = vpop.trf.xlu0
  %v1650 = vpop.trf.xlu0
  %v1651 = vpop.trf.xlu0
  %v1652 = vpop.trf.xlu0
  %v1653 = vpop.trf.xlu0
  %v1654 = vpop.trf.xlu0
  %v1655 = vpop.trf.xlu0
  %v1656 = vpop.trf.xlu0
  %v1657 = vpop.trf.xlu0
  %v1658 = vpop.trf.xlu0
  %v1659 = vpop.trf.xlu0
  %v1660 = vpop.trf.xlu0
  %1661 = vxpose.xlu0.b32.start [1/16] %v1375, 128
  %1662 = vxpose.xlu0.b32.cont [2/16] %v1378, 128
  %1663 = vxpose.xlu0.b32.cont [3/16] %v1383, 128
  %1664 = vxpose.xlu0.b32.cont [4/16] %v1386, 128
  %1665 = vxpose.xlu0.b32.cont [5/16] %v1391, 128
  %1666 = vxpose.xlu0.b32.cont [6/16] %v1394, 128
  %1667 = vxpose.xlu0.b32.cont [7/16] %v1399, 128
  %1668 = vxpose.xlu0.b32.cont [8/16] %v1402, 128
  %1669 = vxpose.xlu0.b32.cont [9/16] %v1407, 128
  %1670 = vxpose.xlu0.b32.cont [10/16] %v1410, 128
  %1671 = vxpose.xlu0.b32.cont [11/16] %v1415, 128
  %1672 = vxpose.xlu0.b32.cont [12/16] %v1418, 128
  %1673 = vxpose.xlu0.b32.cont [13/16] %v1423, 128
  %1674 = vxpose.xlu0.b32.cont [14/16] %v1426, 128
  %1675 = vxpose.xlu0.b32.cont [15/16] %v1431, 128
  %1676 = vxpose.xlu0.b32.end [16/16] %v1434, 128
  %v1677 = vpop.trf.xlu0
  %v1678 = vpop.trf.xlu0
  %v1679 = vpop.trf.xlu0
  %v1680 = vpop.trf.xlu0
  %v1681 = vpop.trf.xlu0
  %v1682 = vpop.trf.xlu0
  %v1683 = vpop.trf.xlu0
  %v1684 = vpop.trf.xlu0
  %v1685 = vpop.trf.xlu0
  %v1686 = vpop.trf.xlu0
  %v1687 = vpop.trf.xlu0
  %v1688 = vpop.trf.xlu0
  %v1689 = vpop.trf.xlu0
  %v1690 = vpop.trf.xlu0
  %v1691 = vpop.trf.xlu0
  %v1692 = vpop.trf.xlu0
  %v1693 = vpack.c.bf16 %v1453, %v1453
  %v1694 = vpack.c.bf16 %v1485, %v1485
  %v1695 = vpack.c.bf16 %v1517, %v1517
  %v1696 = vpack.c.bf16 %v1549, %v1549
  %v1697 = vpack.c.bf16 %v1581, %v1581
  %v1698 = vpack.c.bf16 %v1613, %v1613
  %v1699 = vpack.c.bf16 %v1645, %v1645
  %v1700 = vpack.c.bf16 %v1677, %v1677
  %v1701 = vld [vmem:[%s4] sm:$0xf]
  %v1702 = vld [vmem:[%s4 + $0x4] sm:$0xf]
  %v1703 = vld [vmem:[%s4 + $0x8] sm:$0xf]
  %v1704 = vld [vmem:[%s4 + $0xc] sm:$0xf]
  %v1705 = vld [vmem:[%s4 + $0x10] sm:$0xf]
  %v1706 = vld [vmem:[%s4 + $0x14] sm:$0xf]
  %v1707 = vld [vmem:[%s4 + $0x18] sm:$0xf]
  %v1708 = vld [vmem:[%s4 + $0x1c] sm:$0xf]
  %v1709 = vld [vmem:[%s4 + $0x20] sm:$0xf]
  %v1710 = vld [vmem:[%s4 + $0x24] sm:$0xf]
  %v1711 = vld [vmem:[%s4 + $0x28] sm:$0xf]
  %v1712 = vld [vmem:[%s4 + $0x2c] sm:$0xf]
  %v1713 = vld [vmem:[%s4 + $0x30] sm:$0xf]
  %v1714 = vld [vmem:[%s4 + $0x34] sm:$0xf]
  %v1715 = vld [vmem:[%s4 + $0x38] sm:$0xf]
  %v1716 = vld [vmem:[%s4 + $0x3c] sm:$0xf]
  %v1717 = vld [vmem:[%s5] sm:$0xf]
  %v1718 = vld [vmem:[%s5 + $0x4] sm:$0xf]
  %v1719 = vld [vmem:[%s5 + $0x8] sm:$0xf]
  %v1720 = vld [vmem:[%s5 + $0xc] sm:$0xf]
  %v1721 = vld [vmem:[%s5 + $0x10] sm:$0xf]
  %v1722 = vld [vmem:[%s5 + $0x14] sm:$0xf]
  %v1723 = vld [vmem:[%s5 + $0x18] sm:$0xf]
  %v1724 = vld [vmem:[%s5 + $0x1c] sm:$0xf]
  %v1725 = vld [vmem:[%s5 + $0x20] sm:$0xf]
  %v1726 = vld [vmem:[%s5 + $0x24] sm:$0xf]
  %v1727 = vld [vmem:[%s5 + $0x28] sm:$0xf]
  %v1728 = vld [vmem:[%s5 + $0x2c] sm:$0xf]
  %v1729 = vld [vmem:[%s5 + $0x30] sm:$0xf]
  %v1730 = vld [vmem:[%s5 + $0x34] sm:$0xf]
  %v1731 = vld [vmem:[%s5 + $0x38] sm:$0xf]
  %v1732 = vld [vmem:[%s5 + $0x3c] sm:$0xf]
  %v1749 = vunpack.c.l.b16 %v1717
  %v1750 = vunpack.c.l.b16 %v1718
  %v1751 = vunpack.c.l.b16 %v1719
  %v1752 = vunpack.c.l.b16 %v1720
  %v1753 = vunpack.c.l.b16 %v1721
  %v1754 = vunpack.c.l.b16 %v1722
  %v1755 = vunpack.c.l.b16 %v1723
  %v1756 = vunpack.c.l.b16 %v1724
  %v1757 = vunpack.c.l.b16 %v1725
  %v1758 = vunpack.c.l.b16 %v1726
  %v1759 = vunpack.c.l.b16 %v1727
  %v1760 = vunpack.c.l.b16 %v1728
  %v1761 = vunpack.c.l.b16 %v1729
  %v1762 = vunpack.c.l.b16 %v1730
  %v1763 = vunpack.c.l.b16 %v1731
  %v1764 = vunpack.c.l.b16 %v1732
  %v1765 = vpack.c.b16 %v1750, %v1749
  %v1766 = vpack.c.b16 %v1752, %v1751
  %v1767 = vpack.c.b16 %v1754, %v1753
  %v1768 = vpack.c.b16 %v1756, %v1755
  %v1769 = vpack.c.b16 %v1758, %v1757
  %v1770 = vpack.c.b16 %v1760, %v1759
  %v1771 = vpack.c.b16 %v1762, %v1761
  %v1772 = vpack.c.b16 %v1764, %v1763
  %1781 = vmatprep.subr.bf16.mxu0 0
  %1782 = vmatpush1.bf16.msra.mxu0 %v1765
  %1783 = vmatprep.subr.bf16.mxu0 0
  %1784 = vmatpush1.bf16.msra.mxu0 %v1766
  %1785 = vmatprep.subr.bf16.mxu0 0
  %1786 = vmatpush1.bf16.msra.mxu0 %v1767
  %1787 = vmatprep.subr.bf16.mxu0 0
  %1788 = vmatpush1.bf16.msra.mxu0 %v1768
  %1789 = vmatprep.subr.bf16.mxu0 0
  %1790 = vmatpush1.bf16.msra.mxu0 %v1769
  %1791 = vmatprep.subr.bf16.mxu0 0
  %1792 = vmatpush1.bf16.msra.mxu0 %v1770
  %1793 = vmatprep.subr.bf16.mxu0 0
  %1794 = vmatpush1.bf16.msra.mxu0 %v1771
  %1795 = vmatprep.subr.bf16.mxu0 0
  %1796 = vmatpush1.bf16.msra.mxu0 %v1772
  %1797 = vmatprep.subr.bf16.mxu0 0
  %1798 = vmatpush1.bf16.msra.mxu0 0
  %1799 = vmatprep.subr.bf16.mxu0 0
  %1800 = vmatpush1.bf16.msra.mxu0 0
  %1801 = vmatprep.subr.bf16.mxu0 0
  %1802 = vmatpush1.bf16.msra.mxu0 0
  %1803 = vmatprep.subr.bf16.mxu0 0
  %1804 = vmatpush1.bf16.msra.mxu0 0
  %1805 = vmatprep.subr.bf16.mxu0 0
  %1806 = vmatpush1.bf16.msra.mxu0 0
  %1807 = vmatprep.subr.bf16.mxu0 0
  %1808 = vmatpush1.bf16.msra.mxu0 0
  %1809 = vmatprep.subr.bf16.mxu0 0
  %1810 = vmatpush1.bf16.msra.mxu0 0
  %1811 = vmatprep.subr.bf16.mxu0 0
  %1812 = vmatpush1.bf16.msra.mxu0 0
  %1813 = vmatprep.mubr.bf16.mxu0 0
  %1814 = vmatmul.mubr.bf16.gmra.mrb[0].mxu0 %v171
  %v1815 = vpop.f32.mrb[0].mxu0
  %v1816 = vadd.f32 0.0, %v1815
  %v1817 = vpop.f32.mrb[0].mxu0
  %v1818 = vpop.f32.mrb[0].mxu0
  %v1819 = vadd.f32 0.0, %v1818
  %v1820 = vpop.f32.mrb[0].mxu0
  %1821 = vmatprep.mubr.bf16.mxu0 0
  %1822 = vmatmul.mubr.bf16.gmra.mrb[0].mxu0 %v172
  %v1823 = vpop.f32.mrb[0].mxu0
  %v1824 = vadd.f32 0.0, %v1823
  %v1825 = vpop.f32.mrb[0].mxu0
  %v1826 = vpop.f32.mrb[0].mxu0
  %v1827 = vadd.f32 0.0, %v1826
  %v1828 = vpop.f32.mrb[0].mxu0
  %1829 = vmatprep.mubr.bf16.mxu0 0
  %1830 = vmatmul.mubr.bf16.gmra.mrb[0].mxu0 %v173
  %v1831 = vpop.f32.mrb[0].mxu0
  %v1832 = vadd.f32 0.0, %v1831
  %v1833 = vpop.f32.mrb[0].mxu0
  %v1834 = vpop.f32.mrb[0].mxu0
  %v1835 = vadd.f32 0.0, %v1834
  %v1836 = vpop.f32.mrb[0].mxu0
  %1837 = vmatprep.mubr.bf16.mxu0 0
  %1838 = vmatmul.mubr.bf16.gmra.mrb[0].mxu0 %v174
  %v1839 = vpop.f32.mrb[0].mxu0
  %v1840 = vadd.f32 0.0, %v1839
  %v1841 = vpop.f32.mrb[0].mxu0
  %v1842 = vpop.f32.mrb[0].mxu0
  %v1843 = vadd.f32 0.0, %v1842
  %v1844 = vpop.f32.mrb[0].mxu0
  %1845 = vdwg.mxu0
  %v1854 = vunpack.c.l.b16 %v1693
  %v1855 = vunpack.c.l.b16 %v1694
  %v1856 = vunpack.c.l.b16 %v1695
  %v1857 = vunpack.c.l.b16 %v1696
  %v1858 = vunpack.c.l.b16 %v1697
  %v1859 = vunpack.c.l.b16 %v1698
  %v1860 = vunpack.c.l.b16 %v1699
  %v1861 = vunpack.c.l.b16 %v1700
  %v1862 = vpack.c.b16 %v1855, %v1854
  %v1863 = vpack.c.b16 %v1857, %v1856
  %v1864 = vpack.c.b16 %v1859, %v1858
  %v1865 = vpack.c.b16 %v1861, %v1860
  %v1886 = vunpack.c.l.b16 %v1701
  %v1887 = vunpack.c.l.b16 %v1702
  %v1888 = vunpack.c.l.b16 %v1703
  %v1889 = vunpack.c.l.b16 %v1704
  %v1890 = vunpack.c.l.b16 %v1705
  %v1891 = vunpack.c.l.b16 %v1706
  %v1892 = vunpack.c.l.b16 %v1707
  %v1893 = vunpack.c.l.b16 %v1708
  %v1894 = vunpack.c.l.b16 %v1709
  %v1895 = vunpack.c.l.b16 %v1710
  %v1896 = vunpack.c.l.b16 %v1711
  %v1897 = vunpack.c.l.b16 %v1712
  %v1898 = vunpack.c.l.b16 %v1713
  %v1899 = vunpack.c.l.b16 %v1714
  %v1900 = vunpack.c.l.b16 %v1715
  %v1901 = vunpack.c.l.b16 %v1716
  %v1902 = vpack.c.b16 %v1887, %v1886
  %v1903 = vpack.c.b16 %v1889, %v1888
  %v1904 = vpack.c.b16 %v1891, %v1890
  %v1905 = vpack.c.b16 %v1893, %v1892
  %v1906 = vpack.c.b16 %v1895, %v1894
  %v1907 = vpack.c.b16 %v1897, %v1896
  %v1908 = vpack.c.b16 %v1899, %v1898
  %v1909 = vpack.c.b16 %v1901, %v1900
  %1918 = vmatprep.subr.bf16.mxu0 0
  %1919 = vmatpush1.bf16.msra.mxu0 %v1902
  %1920 = vmatprep.subr.bf16.mxu0 0
  %1921 = vmatpush1.bf16.msra.mxu0 %v1903
  %1922 = vmatprep.subr.bf16.mxu0 0
  %1923 = vmatpush1.bf16.msra.mxu0 %v1904
  %1924 = vmatprep.subr.bf16.mxu0 0
  %1925 = vmatpush1.bf16.msra.mxu0 %v1905
  %1926 = vmatprep.subr.bf16.mxu0 0
  %1927 = vmatpush1.bf16.msra.mxu0 %v1906
  %1928 = vmatprep.subr.bf16.mxu0 0
  %1929 = vmatpush1.bf16.msra.mxu0 %v1907
  %1930 = vmatprep.subr.bf16.mxu0 0
  %1931 = vmatpush1.bf16.msra.mxu0 %v1908
  %1932 = vmatprep.subr.bf16.mxu0 0
  %1933 = vmatpush1.bf16.msra.mxu0 %v1909
  %1934 = vmatprep.subr.bf16.mxu0 0
  %1935 = vmatpush1.bf16.msra.mxu0 0
  %1936 = vmatprep.subr.bf16.mxu0 0
  %1937 = vmatpush1.bf16.msra.mxu0 0
  %1938 = vmatprep.subr.bf16.mxu0 0
  %1939 = vmatpush1.bf16.msra.mxu0 0
  %1940 = vmatprep.subr.bf16.mxu0 0
  %1941 = vmatpush1.bf16.msra.mxu0 0
  %1942 = vmatprep.subr.bf16.mxu0 0
  %1943 = vmatpush1.bf16.msra.mxu0 0
  %1944 = vmatprep.subr.bf16.mxu0 0
  %1945 = vmatpush1.bf16.msra.mxu0 0
  %1946 = vmatprep.subr.bf16.mxu0 0
  %1947 = vmatpush1.bf16.msra.mxu0 0
  %1948 = vmatprep.subr.bf16.mxu0 0
  %1949 = vmatpush1.bf16.msra.mxu0 0
  %1950 = vmatprep.mubr.bf16.mxu0 0
  %1951 = vmatmul.mubr.bf16.gmra.mrb[0].mxu0 %v1862
  %v1952 = vpop.f32.mrb[0].mxu0
  %v1953 = vadd.f32 %v1816, %v1952
  %v1954 = vpop.f32.mrb[0].mxu0
  %v1955 = vpop.f32.mrb[0].mxu0
  %v1956 = vadd.f32 %v1819, %v1955
  %v1957 = vpop.f32.mrb[0].mxu0
  %1958 = vmatprep.mubr.bf16.mxu0 0
  %1959 = vmatmul.mubr.bf16.gmra.mrb[0].mxu0 %v1863
  %v1960 = vpop.f32.mrb[0].mxu0
  %v1961 = vadd.f32 %v1824, %v1960
  %v1962 = vpop.f32.mrb[0].mxu0
  %v1963 = vpop.f32.mrb[0].mxu0
  %v1964 = vadd.f32 %v1827, %v1963
  %v1965 = vpop.f32.mrb[0].mxu0
  %1966 = vmatprep.mubr.bf16.mxu0 0
  %1967 = vmatmul.mubr.bf16.gmra.mrb[0].mxu0 %v1864
  %v1968 = vpop.f32.mrb[0].mxu0
  %v1969 = vadd.f32 %v1832, %v1968
  %v1970 = vpop.f32.mrb[0].mxu0
  %v1971 = vpop.f32.mrb[0].mxu0
  %v1972 = vadd.f32 %v1835, %v1971
  %v1973 = vpop.f32.mrb[0].mxu0
  %1974 = vmatprep.mubr.bf16.mxu0 0
  %1975 = vmatmul.mubr.bf16.gmra.mrb[0].mxu0 %v1865
  %v1976 = vpop.f32.mrb[0].mxu0
  %v1977 = vadd.f32 %v1840, %v1976
  %v1978 = vpop.f32.mrb[0].mxu0
  %v1979 = vpop.f32.mrb[0].mxu0
  %v1980 = vadd.f32 %v1843, %v1979
  %v1981 = vpop.f32.mrb[0].mxu0
  %1982 = vdwg.mxu0
  %v1983 = vld [vmem:[%s6] sm:$0x1]
  %v1985 = vlaneseq
  %v1986 = vshrl.u32 %v1985, 7
  %v1987 = vsub.s32 0, %v1986
  %v1988 = vrot.slane %v1983, %v1987
  %v1990 = vadd.f32 %v1953, %v1988
  %v1991 = vadd.f32 %v1956, %v1988
  %v1992 = vadd.f32 %v1961, %v1988
  %v1993 = vadd.f32 %v1964, %v1988
  %v1994 = vadd.f32 %v1969, %v1988
  %v1995 = vadd.f32 %v1972, %v1988
  %v1996 = vadd.f32 %v1977, %v1988
  %v1997 = vadd.f32 %v1980, %v1988
  %v1998 = vxor.u32 %v1990, 2147483648
  %v1999 = vxor.u32 %v1991, 2147483648
  %v2000 = vxor.u32 %v1992, 2147483648
  %v2001 = vxor.u32 %v1993, 2147483648
  %v2002 = vxor.u32 %v1994, 2147483648
  %v2003 = vxor.u32 %v1995, 2147483648
  %v2004 = vxor.u32 %v1996, 2147483648
  %v2005 = vxor.u32 %v1997, 2147483648
  %v2006 = vmul.f32 %v1998, 1.442695
  %v2007 = vpow.pop %v2006
  %v2008 = vmul.f32 %v1999, 1.442695
  %v2009 = vpow.pop %v2008
  %v2010 = vmul.f32 %v2000, 1.442695
  %v2011 = vpow.pop %v2010
  %v2012 = vmul.f32 %v2001, 1.442695
  %v2013 = vpow.pop %v2012
  %v2014 = vmul.f32 %v2002, 1.442695
  %v2015 = vpow.pop %v2014
  %v2016 = vmul.f32 %v2003, 1.442695
  %v2017 = vpow.pop %v2016
  %v2018 = vmul.f32 %v2004, 1.442695
  %v2019 = vpow.pop %v2018
  %v2020 = vmul.f32 %v2005, 1.442695
  %v2021 = vpow.pop %v2020
  %v2022 = vadd.f32 %v2007, 1.0
  %v2023 = vadd.f32 %v2009, 1.0
  %v2024 = vadd.f32 %v2011, 1.0
  %v2025 = vadd.f32 %v2013, 1.0
  %v2026 = vadd.f32 %v2015, 1.0
  %v2027 = vadd.f32 %v2017, 1.0
  %v2028 = vadd.f32 %v2019, 1.0
  %v2029 = vadd.f32 %v2021, 1.0
  %v2030 = vrcp.pop %v2022
  %v2031 = vmul.f32 1.0, %v2030
  %v2032 = vrcp.pop %v2023
  %v2033 = vmul.f32 1.0, %v2032
  %v2034 = vrcp.pop %v2024
  %v2035 = vmul.f32 1.0, %v2034
  %v2036 = vrcp.pop %v2025
  %v2037 = vmul.f32 1.0, %v2036
  %v2038 = vrcp.pop %v2026
  %v2039 = vmul.f32 1.0, %v2038
  %v2040 = vrcp.pop %v2027
  %v2041 = vmul.f32 1.0, %v2040
  %v2042 = vrcp.pop %v2028
  %v2043 = vmul.f32 1.0, %v2042
  %v2044 = vrcp.pop %v2029
  %v2045 = vmul.f32 1.0, %v2044
  %2046 = vst [vmem:[%s7] sm:$0xff] %v2031
  %2047 = vst [vmem:[%s7 + $0x8] sm:$0xff] %v2033
  %2048 = vst [vmem:[%s7 + $0x10] sm:$0xff] %v2035
  %2049 = vst [vmem:[%s7 + $0x18] sm:$0xff] %v2037
  %2050 = vst [vmem:[%s7 + $0x20] sm:$0xff] %v2039
  %2051 = vst [vmem:[%s7 + $0x28] sm:$0xff] %v2041
  %2052 = vst [vmem:[%s7 + $0x30] sm:$0xff] %v2043
  %2053 = vst [vmem:[%s7 + $0x38] sm:$0xff] %v2045
  // Predicated region
  $region30: #{eernn_forward.3} parent=0 // pred_check
    _
  $region31: #{eernn_forward.3} parent=0 // pred_check_branch
    %2055 = sbr.rel (0) target = $region33
  $region32: #{eernn_forward.3} parent=0 // pred_region
    _
  $region33: #{eernn_forward.3} parent=0 // pred_fallthru
    _
  // Predicated region
  $region34: #{eernn_forward.3} parent=0 // pred_check
    _
  $region35: #{eernn_forward.3} parent=0 // pred_check_branch
    %2057 = sbr.rel (0) target = $region37
  $region36: #{eernn_forward.3} parent=0 // pred_region
    _
  $region37: #{eernn_forward.3} parent=0 // pred_fallthru
    _

// kernel: eernn_forward.2
$region0: #{eernn_forward.2}
  #allocation0 [shape = 'u32[]', space=smem, size = 0x4, offset = 0x4, fixed_abs, tag = 'smem constant byte address 0x4 - core index']
  #allocation1 [shape = 'u32[144,128]{1,0:T(1,128)}', space=vmem, size = 0x12000, scoped, tag = 'internal scratch']
  #allocation2 [shape = 'f32[8,8,512]{2,1,0:T(8,128)}', space=vmem, size = 0x20000, scoped, tag = 'scratch operand']
  #allocation3 [shape = 'f32[8,128]{1,0:T(8,128)}', space=vmem, size = 0x1000, scoped, tag = 'scratch operand']
  #allocation4 [shape = 'f32[8,128]{1,0:T(8,128)}', space=vmem, size = 0x1000, scoped, tag = 'scratch operand']
  %s0 = inlined_call_operand.vmem [shape: bf16[8,8,544], index: 0, kind: input, shape index: {}]
  %s1 = inlined_call_operand.vmem [shape: bf16[544,512], index: 1, kind: input, shape index: {}]
  %s2 = inlined_call_operand.vmem [shape: bf16[128,512], index: 2, kind: input, shape index: {}]
  %s3 = inlined_call_operand.vmem [shape: f32[1,512], index: 3, kind: input, shape index: {}]
  %s4 = inlined_call_operand.vmem [shape: bf16[8,8,128], index: 4, kind: output, shape index: {}]
  %s5 = sld [smem:[#allocation0]]
  $region26: #{eernn_forward.2} parent=0
    _
  %s7 = ssub.s32 1, %s5
  %s8 = scalar_select 0, %s7, %s5
  // Predicated region
  $region2: #{eernn_forward.2} parent=0 // pred_check
    _
  $region3: #{eernn_forward.2} parent=0 // pred_check_branch
    %10 = sbr.rel (0) target = $region5
  $region4: #{eernn_forward.2} parent=0 // pred_region
    _
  $region5: #{eernn_forward.2} parent=0 // pred_fallthru
    _
  // Predicated region
  $region6: #{eernn_forward.2} parent=0 // pred_check
    _
  $region7: #{eernn_forward.2} parent=0 // pred_check_branch
    %12 = sbr.rel (0) target = $region9
  $region8: #{eernn_forward.2} parent=0 // pred_region
    _
  $region9: #{eernn_forward.2} parent=0 // pred_fallthru
    _
  // Predicated region
  $region10: #{eernn_forward.2} parent=0 // pred_check
    _
  $region11: #{eernn_forward.2} parent=0 // pred_check_branch
    %14 = sbr.rel (0) target = $region13
  $region12: #{eernn_forward.2} parent=0 // pred_region
    _
  $region13: #{eernn_forward.2} parent=0 // pred_fallthru
    _
  // Predicated region
  $region14: #{eernn_forward.2} parent=0 // pred_check
    _
  $region15: #{eernn_forward.2} parent=0 // pred_check_branch
    %16 = sbr.rel (0) target = $region17
  $region16: #{eernn_forward.2} parent=0 // pred_region
    _
  $region17: #{eernn_forward.2} parent=0 // pred_fallthru
    _
  %v18 = vld [vmem:[%s0] sm:$0xff]
  %v19 = vld [vmem:[%s0 + $0x8] sm:$0xff]
  %v20 = vld [vmem:[%s0 + $0x10] sm:$0xf]
  %v21 = vld [vmem:[%s0 + $0x14] sm:$0xff]
  %v22 = vld [vmem:[%s0 + $0x1c] sm:$0xff]
  %v23 = vld [vmem:[%s0 + $0x24] sm:$0xf]
  %v24 = vld [vmem:[%s0 + $0x28] sm:$0xff]
  %v25 = vld [vmem:[%s0 + $0x30] sm:$0xff]
  %v26 = vld [vmem:[%s0 + $0x38] sm:$0xf]
  %v27 = vld [vmem:[%s0 + $0x3c] sm:$0xff]
  %v28 = vld [vmem:[%s0 + $0x44] sm:$0xff]
  %v29 = vld [vmem:[%s0 + $0x4c] sm:$0xf]
  %v30 = vld [vmem:[%s0 + $0x50] sm:$0xff]
  %v31 = vld [vmem:[%s0 + $0x58] sm:$0xff]
  %v32 = vld [vmem:[%s0 + $0x60] sm:$0xf]
  %v33 = vld [vmem:[%s0 + $0x64] sm:$0xff]
  %v34 = vld [vmem:[%s0 + $0x6c] sm:$0xff]
  %v35 = vld [vmem:[%s0 + $0x74] sm:$0xf]
  %v36 = vld [vmem:[%s0 + $0x78] sm:$0xff]
  %v37 = vld [vmem:[%s0 + $0x80] sm:$0xff]
  %v38 = vld [vmem:[%s0 + $0x88] sm:$0xf]
  %v39 = vld [vmem:[%s0 + $0x8c] sm:$0xff]
  %v40 = vld [vmem:[%s0 + $0x94] sm:$0xff]
  %v41 = vld [vmem:[%s0 + $0x9c] sm:$0xf]
  %v42 = vld [vmem:[%s1] sm:$0xff]
  %v43 = vld [vmem:[%s1 + $0x8] sm:$0xff]
  %v44 = vld [vmem:[%s1 + $0x10] sm:$0xff]
  %v45 = vld [vmem:[%s1 + $0x18] sm:$0xff]
  %v46 = vld [vmem:[%s1 + $0x20] sm:$0xff]
  %v47 = vld [vmem:[%s1 + $0x28] sm:$0xff]
  %v48 = vld [vmem:[%s1 + $0x30] sm:$0xff]
  %v49 = vld [vmem:[%s1 + $0x38] sm:$0xff]
  %v50 = vld [vmem:[%s1 + $0x40] sm:$0xff]
  %v51 = vld [vmem:[%s1 + $0x48] sm:$0xff]
  %v52 = vld [vmem:[%s1 + $0x50] sm:$0xff]
  %v53 = vld [vmem:[%s1 + $0x58] sm:$0xff]
  %v54 = vld [vmem:[%s1 + $0x60] sm:$0xff]
  %v55 = vld [vmem:[%s1 + $0x68] sm:$0xff]
  %v56 = vld [vmem:[%s1 + $0x70] sm:$0xff]
  %v57 = vld [vmem:[%s1 + $0x78] sm:$0xff]
  %v58 = vld [vmem:[%s1 + $0x80] sm:$0xff]
  %v59 = vld [vmem:[%s1 + $0x88] sm:$0xff]
  %v60 = vld [vmem:[%s1 + $0x90] sm:$0xff]
  %v61 = vld [vmem:[%s1 + $0x98] sm:$0xff]
  %v62 = vld [vmem:[%s1 + $0xa0] sm:$0xff]
  %v63 = vld [vmem:[%s1 + $0xa8] sm:$0xff]
  %v64 = vld [vmem:[%s1 + $0xb0] sm:$0xff]
  %v65 = vld [vmem:[%s1 + $0xb8] sm:$0xff]
  %v66 = vld [vmem:[%s1 + $0xc0] sm:$0xff]
  %v67 = vld [vmem:[%s1 + $0xc8] sm:$0xff]
  %v68 = vld [vmem:[%s1 + $0xd0] sm:$0xff]
  %v69 = vld [vmem:[%s1 + $0xd8] sm:$0xff]
  %v70 = vld [vmem:[%s1 + $0xe0] sm:$0xff]
  %v71 = vld [vmem:[%s1 + $0xe8] sm:$0xff]
  %v72 = vld [vmem:[%s1 + $0xf0] sm:$0xff]
  %v73 = vld [vmem:[%s1 + $0xf8] sm:$0xff]
  %v74 = vld [vmem:[%s1 + $0x100] sm:$0xff]
  %v75 = vld [vmem:[%s1 + $0x108] sm:$0xff]
  %v76 = vld [vmem:[%s1 + $0x110] sm:$0xff]
  %v77 = vld [vmem:[%s1 + $0x118] sm:$0xff]
  %v78 = vld [vmem:[%s1 + $0x120] sm:$0xff]
  %v79 = vld [vmem:[%s1 + $0x128] sm:$0xff]
  %v80 = vld [vmem:[%s1 + $0x130] sm:$0xff]
  %v81 = vld [vmem:[%s1 + $0x138] sm:$0xff]
  %v82 = vld [vmem:[%s1 + $0x140] sm:$0xff]
  %v83 = vld [vmem:[%s1 + $0x148] sm:$0xff]
  %v84 = vld [vmem:[%s1 + $0x150] sm:$0xff]
  %v85 = vld [vmem:[%s1 + $0x158] sm:$0xff]
  %v86 = vld [vmem:[%s1 + $0x160] sm:$0xff]
  %v87 = vld [vmem:[%s1 + $0x168] sm:$0xff]
  %v88 = vld [vmem:[%s1 + $0x170] sm:$0xff]
  %v89 = vld [vmem:[%s1 + $0x178] sm:$0xff]
  %v90 = vld [vmem:[%s1 + $0x180] sm:$0xff]
  %v91 = vld [vmem:[%s1 + $0x188] sm:$0xff]
  %v92 = vld [vmem:[%s1 + $0x190] sm:$0xff]
  %v93 = vld [vmem:[%s1 + $0x198] sm:$0xff]
  %v94 = vld [vmem:[%s1 + $0x1a0] sm:$0xff]
  %v95 = vld [vmem:[%s1 + $0x1a8] sm:$0xff]
  %v96 = vld [vmem:[%s1 + $0x1b0] sm:$0xff]
  %v97 = vld [vmem:[%s1 + $0x1b8] sm:$0xff]
  %v98 = vld [vmem:[%s1 + $0x1c0] sm:$0xff]
  %v99 = vld [vmem:[%s1 + $0x1c8] sm:$0xff]
  %v100 = vld [vmem:[%s1 + $0x1d0] sm:$0xff]
  %v101 = vld [vmem:[%s1 + $0x1d8] sm:$0xff]
  %v102 = vld [vmem:[%s1 + $0x1e0] sm:$0xff]
  %v103 = vld [vmem:[%s1 + $0x1e8] sm:$0xff]
  %v104 = vld [vmem:[%s1 + $0x1f0] sm:$0xff]
  %v105 = vld [vmem:[%s1 + $0x1f8] sm:$0xff]
  %v106 = vld [vmem:[%s1 + $0x200] sm:$0xff]
  %v107 = vld [vmem:[%s1 + $0x208] sm:$0xff]
  %v108 = vld [vmem:[%s1 + $0x210] sm:$0xff]
  %v109 = vld [vmem:[%s1 + $0x218] sm:$0xff]
  %v110 = vld [vmem:[%s1 + $0x220] sm:$0xff]
  %v111 = vld [vmem:[%s1 + $0x228] sm:$0xff]
  %v112 = vld [vmem:[%s1 + $0x230] sm:$0xff]
  %v113 = vld [vmem:[%s1 + $0x238] sm:$0xff]
  %v114 = vld [vmem:[%s1 + $0x240] sm:$0xff]
  %v115 = vld [vmem:[%s1 + $0x248] sm:$0xff]
  %v116 = vld [vmem:[%s1 + $0x250] sm:$0xff]
  %v117 = vld [vmem:[%s1 + $0x258] sm:$0xff]
  %v118 = vld [vmem:[%s1 + $0x260] sm:$0xff]
  %v119 = vld [vmem:[%s1 + $0x268] sm:$0xff]
  %v120 = vld [vmem:[%s1 + $0x270] sm:$0xff]
  %v121 = vld [vmem:[%s1 + $0x278] sm:$0xff]
  %v122 = vld [vmem:[%s1 + $0x280] sm:$0xff]
  %v123 = vld [vmem:[%s1 + $0x288] sm:$0xff]
  %v124 = vld [vmem:[%s1 + $0x290] sm:$0xff]
  %v125 = vld [vmem:[%s1 + $0x298] sm:$0xff]
  %v126 = vld [vmem:[%s1 + $0x2a0] sm:$0xff]
  %v127 = vld [vmem:[%s1 + $0x2a8] sm:$0xff]
  %v128 = vld [vmem:[%s1 + $0x2b0] sm:$0xff]
  %v129 = vld [vmem:[%s1 + $0x2b8] sm:$0xff]
  %v130 = vld [vmem:[%s1 + $0x2c0] sm:$0xff]
  %v131 = vld [vmem:[%s1 + $0x2c8] sm:$0xff]
  %v132 = vld [vmem:[%s1 + $0x2d0] sm:$0xff]
  %v133 = vld [vmem:[%s1 + $0x2d8] sm:$0xff]
  %v134 = vld [vmem:[%s1 + $0x2e0] sm:$0xff]
  %v135 = vld [vmem:[%s1 + $0x2e8] sm:$0xff]
  %v136 = vld [vmem:[%s1 + $0x2f0] sm:$0xff]
  %v137 = vld [vmem:[%s1 + $0x2f8] sm:$0xff]
  %v138 = vld [vmem:[%s1 + $0x300] sm:$0xff]
  %v139 = vld [vmem:[%s1 + $0x308] sm:$0xff]
  %v140 = vld [vmem:[%s1 + $0x310] sm:$0xff]
  %v141 = vld [vmem:[%s1 + $0x318] sm:$0xff]
  %v142 = vld [vmem:[%s1 + $0x320] sm:$0xff]
  %v143 = vld [vmem:[%s1 + $0x328] sm:$0xff]
  %v144 = vld [vmem:[%s1 + $0x330] sm:$0xff]
  %v145 = vld [vmem:[%s1 + $0x338] sm:$0xff]
  %v146 = vld [vmem:[%s1 + $0x340] sm:$0xff]
  %v147 = vld [vmem:[%s1 + $0x348] sm:$0xff]
  %v148 = vld [vmem:[%s1 + $0x350] sm:$0xff]
  %v149 = vld [vmem:[%s1 + $0x358] sm:$0xff]
  %v150 = vld [vmem:[%s1 + $0x360] sm:$0xff]
  %v151 = vld [vmem:[%s1 + $0x368] sm:$0xff]
  %v152 = vld [vmem:[%s1 + $0x370] sm:$0xff]
  %v153 = vld [vmem:[%s1 + $0x378] sm:$0xff]
  %v154 = vld [vmem:[%s1 + $0x380] sm:$0xff]
  %v155 = vld [vmem:[%s1 + $0x388] sm:$0xff]
  %v156 = vld [vmem:[%s1 + $0x390] sm:$0xff]
  %v157 = vld [vmem:[%s1 + $0x398] sm:$0xff]
  %v158 = vld [vmem:[%s1 + $0x3a0] sm:$0xff]
  %v159 = vld [vmem:[%s1 + $0x3a8] sm:$0xff]
  %v160 = vld [vmem:[%s1 + $0x3b0] sm:$0xff]
  %v161 = vld [vmem:[%s1 + $0x3b8] sm:$0xff]
  %v162 = vld [vmem:[%s1 + $0x3c0] sm:$0xff]
  %v163 = vld [vmem:[%s1 + $0x3c8] sm:$0xff]
  %v164 = vld [vmem:[%s1 + $0x3d0] sm:$0xff]
  %v165 = vld [vmem:[%s1 + $0x3d8] sm:$0xff]
  %v166 = vld [vmem:[%s1 + $0x3e0] sm:$0xff]
  %v167 = vld [vmem:[%s1 + $0x3e8] sm:$0xff]
  %v168 = vld [vmem:[%s1 + $0x3f0] sm:$0xff]
  %v169 = vld [vmem:[%s1 + $0x3f8] sm:$0xff]
  %v170 = vld [vmem:[%s1 + $0x400] sm:$0xff]
  %v171 = vld [vmem:[%s1 + $0x408] sm:$0xff]
  %v172 = vld [vmem:[%s1 + $0x410] sm:$0xff]
  %v173 = vld [vmem:[%s1 + $0x418] sm:$0xff]
  %v174 = vld [vmem:[%s1 + $0x420] sm:$0xff]
  %v175 = vld [vmem:[%s1 + $0x428] sm:$0xff]
  %v176 = vld [vmem:[%s1 + $0x430] sm:$0xff]
  %v177 = vld [vmem:[%s1 + $0x438] sm:$0xff]
  %v178 = vld [vmem:[%s3] sm:$0xf]
  %v180 = vlaneseq
  %v181 = vshrl.u32 %v180, 7
  %v182 = vsub.s32 0, %v181
  %v183 = vrot.slane %v178, %v182
  %v184 = vlaneseq
  %v185 = vshrl.u32 %v184, 7
  %v186 = vsub.s32 1, %v185
  %v187 = vrot.slane %v178, %v186
  %v188 = vlaneseq
  %v189 = vshrl.u32 %v188, 7
  %v190 = vsub.s32 2, %v189
  %v191 = vrot.slane %v178, %v190
  %v192 = vlaneseq
  %v193 = vshrl.u32 %v192, 7
  %v194 = vsub.s32 3, %v193
  %v195 = vrot.slane %v178, %v194
  %v224 = vunpack.c.l.b16 %v18
  %v225 = vunpack.c.h.b16 %v18
  %v226 = vunpack.c.l.b16 %v19
  %v227 = vunpack.c.h.b16 %v19
  %v228 = vunpack.c.l.b16 %v20
  %v229 = vunpack.c.l.b16 %v21
  %v230 = vunpack.c.h.b16 %v21
  %v231 = vunpack.c.l.b16 %v22
  %v232 = vunpack.c.h.b16 %v22
  %v233 = vunpack.c.l.b16 %v23
  %v234 = vunpack.c.l.b16 %v24
  %v235 = vunpack.c.h.b16 %v24
  %v236 = vunpack.c.l.b16 %v25
  %v237 = vunpack.c.h.b16 %v25
  %v238 = vunpack.c.l.b16 %v26
  %v239 = vunpack.c.l.b16 %v27
  %v240 = vunpack.c.h.b16 %v27
  %v241 = vunpack.c.l.b16 %v28
  %v242 = vunpack.c.h.b16 %v28
  %v243 = vunpack.c.l.b16 %v29
  %v244 = vunpack.c.l.b16 %v30
  %v245 = vunpack.c.h.b16 %v30
  %v246 = vunpack.c.l.b16 %v31
  %v247 = vunpack.c.h.b16 %v31
  %v248 = vunpack.c.l.b16 %v32
  %v249 = vunpack.c.l.b16 %v33
  %v250 = vunpack.c.h.b16 %v33
  %v251 = vunpack.c.l.b16 %v34
  %v252 = vunpack.c.h.b16 %v34
  %v253 = vunpack.c.l.b16 %v35
  %v254 = vunpack.c.l.b16 %v36
  %v255 = vunpack.c.h.b16 %v36
  %v256 = vunpack.c.l.b16 %v37
  %v257 = vunpack.c.h.b16 %v37
  %v258 = vunpack.c.l.b16 %v38
  %v259 = vunpack.c.l.b16 %v39
  %v260 = vunpack.c.h.b16 %v39
  %v261 = vunpack.c.l.b16 %v40
  %v262 = vunpack.c.h.b16 %v40
  %v263 = vunpack.c.l.b16 %v41
  %v264 = vpack.c.b16 %v229, %v224
  %v265 = vpack.c.b16 %v230, %v225
  %v266 = vpack.c.b16 %v231, %v226
  %v267 = vpack.c.b16 %v232, %v227
  %v268 = vpack.c.b16 %v233, %v228
  %v269 = vpack.c.b16 %v239, %v234
  %v270 = vpack.c.b16 %v240, %v235
  %v271 = vpack.c.b16 %v241, %v236
  %v272 = vpack.c.b16 %v242, %v237
  %v273 = vpack.c.b16 %v243, %v238
  %v274 = vpack.c.b16 %v249, %v244
  %v275 = vpack.c.b16 %v250, %v245
  %v276 = vpack.c.b16 %v251, %v246
  %v277 = vpack.c.b16 %v252, %v247
  %v278 = vpack.c.b16 %v253, %v248
  %v279 = vpack.c.b16 %v259, %v254
  %v280 = vpack.c.b16 %v260, %v255
  %v281 = vpack.c.b16 %v261, %v256
  %v282 = vpack.c.b16 %v262, %v257
  %v283 = vpack.c.b16 %v263, %v258
  %v436 = vunpack.c.l.b16 %v42
  %v437 = vunpack.c.h.b16 %v42
  %v438 = vunpack.c.l.b16 %v43
  %v439 = vunpack.c.h.b16 %v43
  %v440 = vunpack.c.l.b16 %v44
  %v441 = vunpack.c.h.b16 %v44
  %v442 = vunpack.c.l.b16 %v45
  %v443 = vunpack.c.h.b16 %v45
  %v444 = vunpack.c.l.b16 %v46
  %v445 = vunpack.c.h.b16 %v46
  %v446 = vunpack.c.l.b16 %v47
  %v447 = vunpack.c.h.b16 %v47
  %v448 = vunpack.c.l.b16 %v48
  %v449 = vunpack.c.h.b16 %v48
  %v450 = vunpack.c.l.b16 %v49
  %v451 = vunpack.c.h.b16 %v49
  %v452 = vunpack.c.l.b16 %v50
  %v453 = vunpack.c.h.b16 %v50
  %v454 = vunpack.c.l.b16 %v51
  %v455 = vunpack.c.h.b16 %v51
  %v456 = vunpack.c.l.b16 %v52
  %v457 = vunpack.c.h.b16 %v52
  %v458 = vunpack.c.l.b16 %v53
  %v459 = vunpack.c.h.b16 %v53
  %v460 = vunpack.c.l.b16 %v54
  %v461 = vunpack.c.h.b16 %v54
  %v462 = vunpack.c.l.b16 %v55
  %v463 = vunpack.c.h.b16 %v55
  %v464 = vunpack.c.l.b16 %v56
  %v465 = vunpack.c.h.b16 %v56
  %v466 = vunpack.c.l.b16 %v57
  %v467 = vunpack.c.h.b16 %v57
  %v468 = vunpack.c.l.b16 %v58
  %v469 = vunpack.c.h.b16 %v58
  %v470 = vunpack.c.l.b16 %v59
  %v471 = vunpack.c.h.b16 %v59
  %v472 = vunpack.c.l.b16 %v60
  %v473 = vunpack.c.h.b16 %v60
  %v474 = vunpack.c.l.b16 %v61
  %v475 = vunpack.c.h.b16 %v61
  %v476 = vunpack.c.l.b16 %v62
  %v477 = vunpack.c.h.b16 %v62
  %v478 = vunpack.c.l.b16 %v63
  %v479 = vunpack.c.h.b16 %v63
  %v480 = vunpack.c.l.b16 %v64
  %v481 = vunpack.c.h.b16 %v64
  %v482 = vunpack.c.l.b16 %v65
  %v483 = vunpack.c.h.b16 %v65
  %v484 = vunpack.c.l.b16 %v66
  %v485 = vunpack.c.h.b16 %v66
  %v486 = vunpack.c.l.b16 %v67
  %v487 = vunpack.c.h.b16 %v67
  %v488 = vunpack.c.l.b16 %v68
  %v489 = vunpack.c.h.b16 %v68
  %v490 = vunpack.c.l.b16 %v69
  %v491 = vunpack.c.h.b16 %v69
  %v492 = vunpack.c.l.b16 %v70
  %v493 = vunpack.c.h.b16 %v70
  %v494 = vunpack.c.l.b16 %v71
  %v495 = vunpack.c.h.b16 %v71
  %v496 = vunpack.c.l.b16 %v72
  %v497 = vunpack.c.h.b16 %v72
  %v498 = vunpack.c.l.b16 %v73
  %v499 = vunpack.c.h.b16 %v73
  %v500 = vunpack.c.l.b16 %v74
  %v501 = vunpack.c.h.b16 %v74
  %v502 = vunpack.c.l.b16 %v75
  %v503 = vunpack.c.h.b16 %v75
  %v504 = vunpack.c.l.b16 %v76
  %v505 = vunpack.c.h.b16 %v76
  %v506 = vunpack.c.l.b16 %v77
  %v507 = vunpack.c.h.b16 %v77
  %v508 = vunpack.c.l.b16 %v78
  %v509 = vunpack.c.h.b16 %v78
  %v510 = vunpack.c.l.b16 %v79
  %v511 = vunpack.c.h.b16 %v79
  %v512 = vunpack.c.l.b16 %v80
  %v513 = vunpack.c.h.b16 %v80
  %v514 = vunpack.c.l.b16 %v81
  %v515 = vunpack.c.h.b16 %v81
  %v516 = vunpack.c.l.b16 %v82
  %v517 = vunpack.c.h.b16 %v82
  %v518 = vunpack.c.l.b16 %v83
  %v519 = vunpack.c.h.b16 %v83
  %v520 = vunpack.c.l.b16 %v84
  %v521 = vunpack.c.h.b16 %v84
  %v522 = vunpack.c.l.b16 %v85
  %v523 = vunpack.c.h.b16 %v85
  %v524 = vunpack.c.l.b16 %v86
  %v525 = vunpack.c.h.b16 %v86
  %v526 = vunpack.c.l.b16 %v87
  %v527 = vunpack.c.h.b16 %v87
  %v528 = vunpack.c.l.b16 %v88
  %v529 = vunpack.c.h.b16 %v88
  %v530 = vunpack.c.l.b16 %v89
  %v531 = vunpack.c.h.b16 %v89
  %v532 = vunpack.c.l.b16 %v90
  %v533 = vunpack.c.h.b16 %v90
  %v534 = vunpack.c.l.b16 %v91
  %v535 = vunpack.c.h.b16 %v91
  %v536 = vunpack.c.l.b16 %v92
  %v537 = vunpack.c.h.b16 %v92
  %v538 = vunpack.c.l.b16 %v93
  %v539 = vunpack.c.h.b16 %v93
  %v540 = vunpack.c.l.b16 %v94
  %v541 = vunpack.c.h.b16 %v94
  %v542 = vunpack.c.l.b16 %v95
  %v543 = vunpack.c.h.b16 %v95
  %v544 = vunpack.c.l.b16 %v96
  %v545 = vunpack.c.h.b16 %v96
  %v546 = vunpack.c.l.b16 %v97
  %v547 = vunpack.c.h.b16 %v97
  %v548 = vunpack.c.l.b16 %v98
  %v549 = vunpack.c.h.b16 %v98
  %v550 = vunpack.c.l.b16 %v99
  %v551 = vunpack.c.h.b16 %v99
  %v552 = vunpack.c.l.b16 %v100
  %v553 = vunpack.c.h.b16 %v100
  %v554 = vunpack.c.l.b16 %v101
  %v555 = vunpack.c.h.b16 %v101
  %v556 = vunpack.c.l.b16 %v102
  %v557 = vunpack.c.h.b16 %v102
  %v558 = vunpack.c.l.b16 %v103
  %v559 = vunpack.c.h.b16 %v103
  %v560 = vunpack.c.l.b16 %v104
  %v561 = vunpack.c.h.b16 %v104
  %v562 = vunpack.c.l.b16 %v105
  %v563 = vunpack.c.h.b16 %v105
  %v564 = vunpack.c.l.b16 %v106
  %v565 = vunpack.c.h.b16 %v106
  %v566 = vunpack.c.l.b16 %v107
  %v567 = vunpack.c.h.b16 %v107
  %v568 = vunpack.c.l.b16 %v108
  %v569 = vunpack.c.h.b16 %v108
  %v570 = vunpack.c.l.b16 %v109
  %v571 = vunpack.c.h.b16 %v109
  %v572 = vunpack.c.l.b16 %v110
  %v573 = vunpack.c.h.b16 %v110
  %v574 = vunpack.c.l.b16 %v111
  %v575 = vunpack.c.h.b16 %v111
  %v576 = vunpack.c.l.b16 %v112
  %v577 = vunpack.c.h.b16 %v112
  %v578 = vunpack.c.l.b16 %v113
  %v579 = vunpack.c.h.b16 %v113
  %v580 = vunpack.c.l.b16 %v114
  %v581 = vunpack.c.h.b16 %v114
  %v582 = vunpack.c.l.b16 %v115
  %v583 = vunpack.c.h.b16 %v115
  %v584 = vunpack.c.l.b16 %v116
  %v585 = vunpack.c.h.b16 %v116
  %v586 = vunpack.c.l.b16 %v117
  %v587 = vunpack.c.h.b16 %v117
  %v588 = vunpack.c.l.b16 %v118
  %v589 = vunpack.c.h.b16 %v118
  %v590 = vunpack.c.l.b16 %v119
  %v591 = vunpack.c.h.b16 %v119
  %v592 = vunpack.c.l.b16 %v120
  %v593 = vunpack.c.h.b16 %v120
  %v594 = vunpack.c.l.b16 %v121
  %v595 = vunpack.c.h.b16 %v121
  %v596 = vunpack.c.l.b16 %v122
  %v597 = vunpack.c.h.b16 %v122
  %v598 = vunpack.c.l.b16 %v123
  %v599 = vunpack.c.h.b16 %v123
  %v600 = vunpack.c.l.b16 %v124
  %v601 = vunpack.c.h.b16 %v124
  %v602 = vunpack.c.l.b16 %v125
  %v603 = vunpack.c.h.b16 %v125
  %v604 = vunpack.c.l.b16 %v126
  %v605 = vunpack.c.h.b16 %v126
  %v606 = vunpack.c.l.b16 %v127
  %v607 = vunpack.c.h.b16 %v127
  %v608 = vunpack.c.l.b16 %v128
  %v609 = vunpack.c.h.b16 %v128
  %v610 = vunpack.c.l.b16 %v129
  %v611 = vunpack.c.h.b16 %v129
  %v612 = vunpack.c.l.b16 %v130
  %v613 = vunpack.c.h.b16 %v130
  %v614 = vunpack.c.l.b16 %v131
  %v615 = vunpack.c.h.b16 %v131
  %v616 = vunpack.c.l.b16 %v132
  %v617 = vunpack.c.h.b16 %v132
  %v618 = vunpack.c.l.b16 %v133
  %v619 = vunpack.c.h.b16 %v133
  %v620 = vunpack.c.l.b16 %v134
  %v621 = vunpack.c.h.b16 %v134
  %v622 = vunpack.c.l.b16 %v135
  %v623 = vunpack.c.h.b16 %v135
  %v624 = vunpack.c.l.b16 %v136
  %v625 = vunpack.c.h.b16 %v136
  %v626 = vunpack.c.l.b16 %v137
  %v627 = vunpack.c.h.b16 %v137
  %v628 = vunpack.c.l.b16 %v138
  %v629 = vunpack.c.h.b16 %v138
  %v630 = vunpack.c.l.b16 %v139
  %v631 = vunpack.c.h.b16 %v139
  %v632 = vunpack.c.l.b16 %v140
  %v633 = vunpack.c.h.b16 %v140
  %v634 = vunpack.c.l.b16 %v141
  %v635 = vunpack.c.h.b16 %v141
  %v636 = vunpack.c.l.b16 %v142
  %v637 = vunpack.c.h.b16 %v142
  %v638 = vunpack.c.l.b16 %v143
  %v639 = vunpack.c.h.b16 %v143
  %v640 = vunpack.c.l.b16 %v144
  %v641 = vunpack.c.h.b16 %v144
  %v642 = vunpack.c.l.b16 %v145
  %v643 = vunpack.c.h.b16 %v145
  %v644 = vunpack.c.l.b16 %v146
  %v645 = vunpack.c.h.b16 %v146
  %v646 = vunpack.c.l.b16 %v147
  %v647 = vunpack.c.h.b16 %v147
  %v648 = vunpack.c.l.b16 %v148
  %v649 = vunpack.c.h.b16 %v148
  %v650 = vunpack.c.l.b16 %v149
  %v651 = vunpack.c.h.b16 %v149
  %v652 = vunpack.c.l.b16 %v150
  %v653 = vunpack.c.h.b16 %v150
  %v654 = vunpack.c.l.b16 %v151
  %v655 = vunpack.c.h.b16 %v151
  %v656 = vunpack.c.l.b16 %v152
  %v657 = vunpack.c.h.b16 %v152
  %v658 = vunpack.c.l.b16 %v153
  %v659 = vunpack.c.h.b16 %v153
  %v660 = vunpack.c.l.b16 %v154
  %v661 = vunpack.c.h.b16 %v154
  %v662 = vunpack.c.l.b16 %v155
  %v663 = vunpack.c.h.b16 %v155
  %v664 = vunpack.c.l.b16 %v156
  %v665 = vunpack.c.h.b16 %v156
  %v666 = vunpack.c.l.b16 %v157
  %v667 = vunpack.c.h.b16 %v157
  %v668 = vunpack.c.l.b16 %v158
  %v669 = vunpack.c.h.b16 %v158
  %v670 = vunpack.c.l.b16 %v159
  %v671 = vunpack.c.h.b16 %v159
  %v672 = vunpack.c.l.b16 %v160
  %v673 = vunpack.c.h.b16 %v160
  %v674 = vunpack.c.l.b16 %v161
  %v675 = vunpack.c.h.b16 %v161
  %v676 = vunpack.c.l.b16 %v162
  %v677 = vunpack.c.h.b16 %v162
  %v678 = vunpack.c.l.b16 %v163
  %v679 = vunpack.c.h.b16 %v163
  %v680 = vunpack.c.l.b16 %v164
  %v681 = vunpack.c.h.b16 %v164
  %v682 = vunpack.c.l.b16 %v165
  %v683 = vunpack.c.h.b16 %v165
  %v684 = vunpack.c.l.b16 %v166
  %v685 = vunpack.c.h.b16 %v166
  %v686 = vunpack.c.l.b16 %v167
  %v687 = vunpack.c.h.b16 %v167
  %v688 = vunpack.c.l.b16 %v168
  %v689 = vunpack.c.h.b16 %v168
  %v690 = vunpack.c.l.b16 %v169
  %v691 = vunpack.c.h.b16 %v169
  %v692 = vunpack.c.l.b16 %v170
  %v693 = vunpack.c.h.b16 %v170
  %v694 = vunpack.c.l.b16 %v171
  %v695 = vunpack.c.h.b16 %v171
  %v696 = vunpack.c.l.b16 %v172
  %v697 = vunpack.c.h.b16 %v172
  %v698 = vunpack.c.l.b16 %v173
  %v699 = vunpack.c.h.b16 %v173
  %v700 = vunpack.c.l.b16 %v174
  %v701 = vunpack.c.h.b16 %v174
  %v702 = vunpack.c.l.b16 %v175
  %v703 = vunpack.c.h.b16 %v175
  %v704 = vunpack.c.l.b16 %v176
  %v705 = vunpack.c.h.b16 %v176
  %v706 = vunpack.c.l.b16 %v177
  %v707 = vunpack.c.h.b16 %v177
  %v708 = vpack.c.b16 %v440, %v436
  %v709 = vpack.c.b16 %v441, %v437
  %v710 = vpack.c.b16 %v442, %v438
  %v711 = vpack.c.b16 %v443, %v439
  %v712 = vpack.c.b16 %v448, %v444
  %v713 = vpack.c.b16 %v449, %v445
  %v714 = vpack.c.b16 %v450, %v446
  %v715 = vpack.c.b16 %v451, %v447
  %v716 = vpack.c.b16 %v456, %v452
  %v717 = vpack.c.b16 %v457, %v453
  %v718 = vpack.c.b16 %v458, %v454
  %v719 = vpack.c.b16 %v459, %v455
  %v720 = vpack.c.b16 %v464, %v460
  %v721 = vpack.c.b16 %v465, %v461
  %v722 = vpack.c.b16 %v466, %v462
  %v723 = vpack.c.b16 %v467, %v463
  %v724 = vpack.c.b16 %v472, %v468
  %v725 = vpack.c.b16 %v473, %v469
  %v726 = vpack.c.b16 %v474, %v470
  %v727 = vpack.c.b16 %v475, %v471
  %v728 = vpack.c.b16 %v480, %v476
  %v729 = vpack.c.b16 %v481, %v477
  %v730 = vpack.c.b16 %v482, %v478
  %v731 = vpack.c.b16 %v483, %v479
  %v732 = vpack.c.b16 %v488, %v484
  %v733 = vpack.c.b16 %v489, %v485
  %v734 = vpack.c.b16 %v490, %v486
  %v735 = vpack.c.b16 %v491, %v487
  %v736 = vpack.c.b16 %v496, %v492
  %v737 = vpack.c.b16 %v497, %v493
  %v738 = vpack.c.b16 %v498, %v494
  %v739 = vpack.c.b16 %v499, %v495
  %v740 = vpack.c.b16 %v504, %v500
  %v741 = vpack.c.b16 %v505, %v501
  %v742 = vpack.c.b16 %v506, %v502
  %v743 = vpack.c.b16 %v507, %v503
  %v744 = vpack.c.b16 %v512, %v508
  %v745 = vpack.c.b16 %v513, %v509
  %v746 = vpack.c.b16 %v514, %v510
  %v747 = vpack.c.b16 %v515, %v511
  %v748 = vpack.c.b16 %v520, %v516
  %v749 = vpack.c.b16 %v521, %v517
  %v750 = vpack.c.b16 %v522, %v518
  %v751 = vpack.c.b16 %v523, %v519
  %v752 = vpack.c.b16 %v528, %v524
  %v753 = vpack.c.b16 %v529, %v525
  %v754 = vpack.c.b16 %v530, %v526
  %v755 = vpack.c.b16 %v531, %v527
  %v756 = vpack.c.b16 %v536, %v532
  %v757 = vpack.c.b16 %v537, %v533
  %v758 = vpack.c.b16 %v538, %v534
  %v759 = vpack.c.b16 %v539, %v535
  %v760 = vpack.c.b16 %v544, %v540
  %v761 = vpack.c.b16 %v545, %v541
  %v762 = vpack.c.b16 %v546, %v542
  %v763 = vpack.c.b16 %v547, %v543
  %v764 = vpack.c.b16 %v552, %v548
  %v765 = vpack.c.b16 %v553, %v549
  %v766 = vpack.c.b16 %v554, %v550
  %v767 = vpack.c.b16 %v555, %v551
  %v768 = vpack.c.b16 %v560, %v556
  %v769 = vpack.c.b16 %v561, %v557
  %v770 = vpack.c.b16 %v562, %v558
  %v771 = vpack.c.b16 %v563, %v559
  %v772 = vpack.c.b16 %v568, %v564
  %v773 = vpack.c.b16 %v569, %v565
  %v774 = vpack.c.b16 %v570, %v566
  %v775 = vpack.c.b16 %v571, %v567
  %v776 = vpack.c.b16 %v576, %v572
  %v777 = vpack.c.b16 %v577, %v573
  %v778 = vpack.c.b16 %v578, %v574
  %v779 = vpack.c.b16 %v579, %v575
  %v780 = vpack.c.b16 %v584, %v580
  %v781 = vpack.c.b16 %v585, %v581
  %v782 = vpack.c.b16 %v586, %v582
  %v783 = vpack.c.b16 %v587, %v583
  %v784 = vpack.c.b16 %v592, %v588
  %v785 = vpack.c.b16 %v593, %v589
  %v786 = vpack.c.b16 %v594, %v590
  %v787 = vpack.c.b16 %v595, %v591
  %v788 = vpack.c.b16 %v600, %v596
  %v789 = vpack.c.b16 %v601, %v597
  %v790 = vpack.c.b16 %v602, %v598
  %v791 = vpack.c.b16 %v603, %v599
  %v792 = vpack.c.b16 %v608, %v604
  %v793 = vpack.c.b16 %v609, %v605
  %v794 = vpack.c.b16 %v610, %v606
  %v795 = vpack.c.b16 %v611, %v607
  %v796 = vpack.c.b16 %v616, %v612
  %v797 = vpack.c.b16 %v617, %v613
  %v798 = vpack.c.b16 %v618, %v614
  %v799 = vpack.c.b16 %v619, %v615
  %v800 = vpack.c.b16 %v624, %v620
  %v801 = vpack.c.b16 %v625, %v621
  %v802 = vpack.c.b16 %v626, %v622
  %v803 = vpack.c.b16 %v627, %v623
  %v804 = vpack.c.b16 %v632, %v628
  %v805 = vpack.c.b16 %v633, %v629
  %v806 = vpack.c.b16 %v634, %v630
  %v807 = vpack.c.b16 %v635, %v631
  %v808 = vpack.c.b16 %v640, %v636
  %v809 = vpack.c.b16 %v641, %v637
  %v810 = vpack.c.b16 %v642, %v638
  %v811 = vpack.c.b16 %v643, %v639
  %v812 = vpack.c.b16 %v648, %v644
  %v813 = vpack.c.b16 %v649, %v645
  %v814 = vpack.c.b16 %v650, %v646
  %v815 = vpack.c.b16 %v651, %v647
  %v816 = vpack.c.b16 %v656, %v652
  %v817 = vpack.c.b16 %v657, %v653
  %v818 = vpack.c.b16 %v658, %v654
  %v819 = vpack.c.b16 %v659, %v655
  %v820 = vpack.c.b16 %v664, %v660
  %v821 = vpack.c.b16 %v665, %v661
  %v822 = vpack.c.b16 %v666, %v662
  %v823 = vpack.c.b16 %v667, %v663
  %v824 = vpack.c.b16 %v672, %v668
  %v825 = vpack.c.b16 %v673, %v669
  %v826 = vpack.c.b16 %v674, %v670
  %v827 = vpack.c.b16 %v675, %v671
  %v828 = vpack.c.b16 %v680, %v676
  %v829 = vpack.c.b16 %v681, %v677
  %v830 = vpack.c.b16 %v682, %v678
  %v831 = vpack.c.b16 %v683, %v679
  %v832 = vpack.c.b16 %v688, %v684
  %v833 = vpack.c.b16 %v689, %v685
  %v834 = vpack.c.b16 %v690, %v686
  %v835 = vpack.c.b16 %v691, %v687
  %v836 = vpack.c.b16 %v696, %v692
  %v837 = vpack.c.b16 %v697, %v693
  %v838 = vpack.c.b16 %v698, %v694
  %v839 = vpack.c.b16 %v699, %v695
  %v840 = vpack.c.b16 %v704, %v700
  %v841 = vpack.c.b16 %v705, %v701
  %v842 = vpack.c.b16 %v706, %v702
  %v843 = vpack.c.b16 %v707, %v703
  %vm980 = vcmask 261120
  %v982 = vsel %vm980, %v268, 0
  %v985 = vsel %vm980, %v273, 0
  %v988 = vsel %vm980, %v278, 0
  %v991 = vsel %vm980, %v283, 0
  %993 = vmatprep.subr.bf16.mxu0 %v709
  %994 = vmatpush1.bf16.msra.mxu0 %v708
  %995 = vmatprep.subr.bf16.mxu0 %v713
  %996 = vmatpush1.bf16.msra.mxu0 %v712
  %997 = vmatprep.subr.bf16.mxu0 %v717
  %998 = vmatpush1.bf16.msra.mxu0 %v716
  %999 = vmatprep.subr.bf16.mxu0 %v721
  %1000 = vmatpush1.bf16.msra.mxu0 %v720
  %1001 = vmatprep.subr.bf16.mxu0 %v725
  %1002 = vmatpush1.bf16.msra.mxu0 %v724
  %1003 = vmatprep.subr.bf16.mxu0 %v729
  %1004 = vmatpush1.bf16.msra.mxu0 %v728
  %1005 = vmatprep.subr.bf16.mxu0 %v733
  %1006 = vmatpush1.bf16.msra.mxu0 %v732
  %1007 = vmatprep.subr.bf16.mxu0 %v737
  %1008 = vmatpush1.bf16.msra.mxu0 %v736
  %1009 = vmatprep.subr.bf16.mxu0 %v741
  %1010 = vmatpush1.bf16.msra.mxu0 %v740
  %1011 = vmatprep.subr.bf16.mxu0 %v745
  %1012 = vmatpush1.bf16.msra.mxu0 %v744
  %1013 = vmatprep.subr.bf16.mxu0 %v749
  %1014 = vmatpush1.bf16.msra.mxu0 %v748
  %1015 = vmatprep.subr.bf16.mxu0 %v753
  %1016 = vmatpush1.bf16.msra.mxu0 %v752
  %1017 = vmatprep.subr.bf16.mxu0 %v757
  %1018 = vmatpush1.bf16.msra.mxu0 %v756
  %1019 = vmatprep.subr.bf16.mxu0 %v761
  %1020 = vmatpush1.bf16.msra.mxu0 %v760
  %1021 = vmatprep.subr.bf16.mxu0 %v765
  %1022 = vmatpush1.bf16.msra.mxu0 %v764
  %1023 = vmatprep.subr.bf16.mxu0 %v769
  %1024 = vmatpush1.bf16.msra.mxu0 %v768
  %1025 = vmatprep.mubr.bf16.mxu0 %v265
  %1026 = vmatmul.mubr.bf16.gmra.mrb[0].mxu0 %v264
  %v1027 = vpop.f32.mrb[0].mxu0
  %v1028 = vadd.f32 %v183, %v1027
  %v1029 = vpop.f32.mrb[0].mxu0
  %v1030 = vadd.f32 %v187, %v1029
  %v1031 = vpop.f32.mrb[0].mxu0
  %v1032 = vadd.f32 %v183, %v1031
  %v1033 = vpop.f32.mrb[0].mxu0
  %v1034 = vadd.f32 %v187, %v1033
  %1035 = vmatprep.mubr.bf16.mxu0 %v270
  %1036 = vmatmul.mubr.bf16.gmra.mrb[0].mxu0 %v269
  %v1037 = vpop.f32.mrb[0].mxu0
  %v1038 = vadd.f32 %v183, %v1037
  %v1039 = vpop.f32.mrb[0].mxu0
  %v1040 = vadd.f32 %v187, %v1039
  %v1041 = vpop.f32.mrb[0].mxu0
  %v1042 = vadd.f32 %v183, %v1041
  %v1043 = vpop.f32.mrb[0].mxu0
  %v1044 = vadd.f32 %v187, %v1043
  %1045 = vmatprep.mubr.bf16.mxu0 %v275
  %1046 = vmatmul.mubr.bf16.gmra.mrb[0].mxu0 %v274
  %v1047 = vpop.f32.mrb[0].mxu0
  %v1048 = vadd.f32 %v183, %v1047
  %v1049 = vpop.f32.mrb[0].mxu0
  %v1050 = vadd.f32 %v187, %v1049
  %v1051 = vpop.f32.mrb[0].mxu0
  %v1052 = vadd.f32 %v183, %v1051
  %v1053 = vpop.f32.mrb[0].mxu0
  %v1054 = vadd.f32 %v187, %v1053
  %1055 = vmatprep.mubr.bf16.mxu0 %v280
  %1056 = vmatmul.mubr.bf16.gmra.mrb[0].mxu0 %v279
  %v1057 = vpop.f32.mrb[0].mxu0
  %v1058 = vadd.f32 %v183, %v1057
  %v1059 = vpop.f32.mrb[0].mxu0
  %v1060 = vadd.f32 %v187, %v1059
  %v1061 = vpop.f32.mrb[0].mxu0
  %v1062 = vadd.f32 %v183, %v1061
  %v1063 = vpop.f32.mrb[0].mxu0
  %v1064 = vadd.f32 %v187, %v1063
  %1065 = vdwg.mxu0
  %1066 = vmatprep.subr.bf16.mxu0 %v773
  %1067 = vmatpush1.bf16.msra.mxu0 %v772
  %1068 = vmatprep.subr.bf16.mxu0 %v777
  %1069 = vmatpush1.bf16.msra.mxu0 %v776
  %1070 = vmatprep.subr.bf16.mxu0 %v781
  %1071 = vmatpush1.bf16.msra.mxu0 %v780
  %1072 = vmatprep.subr.bf16.mxu0 %v785
  %1073 = vmatpush1.bf16.msra.mxu0 %v784
  %1074 = vmatprep.subr.bf16.mxu0 %v789
  %1075 = vmatpush1.bf16.msra.mxu0 %v788
  %1076 = vmatprep.subr.bf16.mxu0 %v793
  %1077 = vmatpush1.bf16.msra.mxu0 %v792
  %1078 = vmatprep.subr.bf16.mxu0 %v797
  %1079 = vmatpush1.bf16.msra.mxu0 %v796
  %1080 = vmatprep.subr.bf16.mxu0 %v801
  %1081 = vmatpush1.bf16.msra.mxu0 %v800
  %1082 = vmatprep.subr.bf16.mxu0 %v805
  %1083 = vmatpush1.bf16.msra.mxu0 %v804
  %1084 = vmatprep.subr.bf16.mxu0 %v809
  %1085 = vmatpush1.bf16.msra.mxu0 %v808
  %1086 = vmatprep.subr.bf16.mxu0 %v813
  %1087 = vmatpush1.bf16.msra.mxu0 %v812
  %1088 = vmatprep.subr.bf16.mxu0 %v817
  %1089 = vmatpush1.bf16.msra.mxu0 %v816
  %1090 = vmatprep.subr.bf16.mxu0 %v821
  %1091 = vmatpush1.bf16.msra.mxu0 %v820
  %1092 = vmatprep.subr.bf16.mxu0 %v825
  %1093 = vmatpush1.bf16.msra.mxu0 %v824
  %1094 = vmatprep.subr.bf16.mxu0 %v829
  %1095 = vmatpush1.bf16.msra.mxu0 %v828
  %1096 = vmatprep.subr.bf16.mxu0 %v833
  %1097 = vmatpush1.bf16.msra.mxu0 %v832
  %1098 = vmatprep.mubr.bf16.mxu0 %v267
  %1099 = vmatmul.mubr.bf16.gmra.mrb[0].mxu0 %v266
  %v1100 = vpop.f32.mrb[0].mxu0
  %v1101 = vadd.f32 %v1028, %v1100
  %v1102 = vpop.f32.mrb[0].mxu0
  %v1103 = vadd.f32 %v1030, %v1102
  %v1104 = vpop.f32.mrb[0].mxu0
  %v1105 = vadd.f32 %v1032, %v1104
  %v1106 = vpop.f32.mrb[0].mxu0
  %v1107 = vadd.f32 %v1034, %v1106
  %1108 = vmatprep.mubr.bf16.mxu0 %v272
  %1109 = vmatmul.mubr.bf16.gmra.mrb[0].mxu0 %v271
  %v1110 = vpop.f32.mrb[0].mxu0
  %v1111 = vadd.f32 %v1038, %v1110
  %v1112 = vpop.f32.mrb[0].mxu0
  %v1113 = vadd.f32 %v1040, %v1112
  %v1114 = vpop.f32.mrb[0].mxu0
  %v1115 = vadd.f32 %v1042, %v1114
  %v1116 = vpop.f32.mrb[0].mxu0
  %v1117 = vadd.f32 %v1044, %v1116
  %1118 = vmatprep.mubr.bf16.mxu0 %v277
  %1119 = vmatmul.mubr.bf16.gmra.mrb[0].mxu0 %v276
  %v1120 = vpop.f32.mrb[0].mxu0
  %v1121 = vadd.f32 %v1048, %v1120
  %v1122 = vpop.f32.mrb[0].mxu0
  %v1123 = vadd.f32 %v1050, %v1122
  %v1124 = vpop.f32.mrb[0].mxu0
  %v1125 = vadd.f32 %v1052, %v1124
  %v1126 = vpop.f32.mrb[0].mxu0
  %v1127 = vadd.f32 %v1054, %v1126
  %1128 = vmatprep.mubr.bf16.mxu0 %v282
  %1129 = vmatmul.mubr.bf16.gmra.mrb[0].mxu0 %v281
  %v1130 = vpop.f32.mrb[0].mxu0
  %v1131 = vadd.f32 %v1058, %v1130
  %v1132 = vpop.f32.mrb[0].mxu0
  %v1133 = vadd.f32 %v1060, %v1132
  %v1134 = vpop.f32.mrb[0].mxu0
  %v1135 = vadd.f32 %v1062, %v1134
  %v1136 = vpop.f32.mrb[0].mxu0
  %v1137 = vadd.f32 %v1064, %v1136
  %1138 = vdwg.mxu0
  %1139 = vmatprep.subr.bf16.mxu0 %v837
  %1140 = vmatpush1.bf16.msra.mxu0 %v836
  %1141 = vmatprep.subr.bf16.mxu0 %v841
  %1142 = vmatpush1.bf16.msra.mxu0 %v840
  %1143 = vmatprep.subr.bf16.mxu0 0
  %1144 = vmatpush1.bf16.msra.mxu0 0
  %1145 = vmatprep.subr.bf16.mxu0 0
  %1146 = vmatpush1.bf16.msra.mxu0 0
  %1147 = vmatprep.subr.bf16.mxu0 0
  %1148 = vmatpush1.bf16.msra.mxu0 0
  %1149 = vmatprep.subr.bf16.mxu0 0
  %1150 = vmatpush1.bf16.msra.mxu0 0
  %1151 = vmatprep.subr.bf16.mxu0 0
  %1152 = vmatpush1.bf16.msra.mxu0 0
  %1153 = vmatprep.subr.bf16.mxu0 0
  %1154 = vmatpush1.bf16.msra.mxu0 0
  %1155 = vmatprep.subr.bf16.mxu0 0
  %1156 = vmatpush1.bf16.msra.mxu0 0
  %1157 = vmatprep.subr.bf16.mxu0 0
  %1158 = vmatpush1.bf16.msra.mxu0 0
  %1159 = vmatprep.subr.bf16.mxu0 0
  %1160 = vmatpush1.bf16.msra.mxu0 0
  %1161 = vmatprep.subr.bf16.mxu0 0
  %1162 = vmatpush1.bf16.msra.mxu0 0
  %1163 = vmatprep.subr.bf16.mxu0 0
  %1164 = vmatpush1.bf16.msra.mxu0 0
  %1165 = vmatprep.subr.bf16.mxu0 0
  %1166 = vmatpush1.bf16.msra.mxu0 0
  %1167 = vmatprep.subr.bf16.mxu0 0
  %1168 = vmatpush1.bf16.msra.mxu0 0
  %1169 = vmatprep.subr.bf16.mxu0 0
  %1170 = vmatpush1.bf16.msra.mxu0 0
  %1171 = vmatprep.mubr.bf16.mxu0 0
  %1172 = vmatmul.mubr.bf16.gmra.mrb[0].mxu0 %v982
  %v1173 = vpop.f32.mrb[0].mxu0
  %v1174 = vadd.f32 %v1101, %v1173
  %v1175 = vpop.f32.mrb[0].mxu0
  %v1176 = vadd.f32 %v1103, %v1175
  %v1177 = vpop.f32.mrb[0].mxu0
  %v1178 = vadd.f32 %v1105, %v1177
  %v1179 = vpop.f32.mrb[0].mxu0
  %v1180 = vadd.f32 %v1107, %v1179
  %1181 = vmatprep.mubr.bf16.mxu0 0
  %1182 = vmatmul.mubr.bf16.gmra.mrb[0].mxu0 %v985
  %v1183 = vpop.f32.mrb[0].mxu0
  %v1184 = vadd.f32 %v1111, %v1183
  %v1185 = vpop.f32.mrb[0].mxu0
  %v1186 = vadd.f32 %v1113, %v1185
  %v1187 = vpop.f32.mrb[0].mxu0
  %v1188 = vadd.f32 %v1115, %v1187
  %v1189 = vpop.f32.mrb[0].mxu0
  %v1190 = vadd.f32 %v1117, %v1189
  %1191 = vmatprep.mubr.bf16.mxu0 0
  %1192 = vmatmul.mubr.bf16.gmra.mrb[0].mxu0 %v988
  %v1193 = vpop.f32.mrb[0].mxu0
  %v1194 = vadd.f32 %v1121, %v1193
  %v1195 = vpop.f32.mrb[0].mxu0
  %v1196 = vadd.f32 %v1123, %v1195
  %v1197 = vpop.f32.mrb[0].mxu0
  %v1198 = vadd.f32 %v1125, %v1197
  %v1199 = vpop.f32.mrb[0].mxu0
  %v1200 = vadd.f32 %v1127, %v1199
  %1201 = vmatprep.mubr.bf16.mxu0 0
  %1202 = vmatmul.mubr.bf16.gmra.mrb[0].mxu0 %v991
  %v1203 = vpop.f32.mrb[0].mxu0
  %v1204 = vadd.f32 %v1131, %v1203
  %v1205 = vpop.f32.mrb[0].mxu0
  %v1206 = vadd.f32 %v1133, %v1205
  %v1207 = vpop.f32.mrb[0].mxu0
  %v1208 = vadd.f32 %v1135, %v1207
  %v1209 = vpop.f32.mrb[0].mxu0
  %v1210 = vadd.f32 %v1137, %v1209
  %1211 = vdwg.mxu0
  %1212 = vmatprep.subr.bf16.mxu0 %v711
  %1213 = vmatpush1.bf16.msra.mxu0 %v710
  %1214 = vmatprep.subr.bf16.mxu0 %v715
  %1215 = vmatpush1.bf16.msra.mxu0 %v714
  %1216 = vmatprep.subr.bf16.mxu0 %v719
  %1217 = vmatpush1.bf16.msra.mxu0 %v718
  %1218 = vmatprep.subr.bf16.mxu0 %v723
  %1219 = vmatpush1.bf16.msra.mxu0 %v722
  %1220 = vmatprep.subr.bf16.mxu0 %v727
  %1221 = vmatpush1.bf16.msra.mxu0 %v726
  %1222 = vmatprep.subr.bf16.mxu0 %v731
  %1223 = vmatpush1.bf16.msra.mxu0 %v730
  %1224 = vmatprep.subr.bf16.mxu0 %v735
  %1225 = vmatpush1.bf16.msra.mxu0 %v734
  %1226 = vmatprep.subr.bf16.mxu0 %v739
  %1227 = vmatpush1.bf16.msra.mxu0 %v738
  %1228 = vmatprep.subr.bf16.mxu0 %v743
  %1229 = vmatpush1.bf16.msra.mxu0 %v742
  %1230 = vmatprep.subr.bf16.mxu0 %v747
  %1231 = vmatpush1.bf16.msra.mxu0 %v746
  %1232 = vmatprep.subr.bf16.mxu0 %v751
  %1233 = vmatpush1.bf16.msra.mxu0 %v750
  %1234 = vmatprep.subr.bf16.mxu0 %v755
  %1235 = vmatpush1.bf16.msra.mxu0 %v754
  %1236 = vmatprep.subr.bf16.mxu0 %v759
  %1237 = vmatpush1.bf16.msra.mxu0 %v758
  %1238 = vmatprep.subr.bf16.mxu0 %v763
  %1239 = vmatpush1.bf16.msra.mxu0 %v762
  %1240 = vmatprep.subr.bf16.mxu0 %v767
  %1241 = vmatpush1.bf16.msra.mxu0 %v766
  %1242 = vmatprep.subr.bf16.mxu0 %v771
  %1243 = vmatpush1.bf16.msra.mxu0 %v770
  %1244 = vmatprep.mubr.bf16.mxu0 %v265
  %1245 = vmatmul.mubr.bf16.gmra.mrb[0].mxu0 %v264
  %v1246 = vpop.f32.mrb[0].mxu0
  %v1247 = vadd.f32 %v191, %v1246
  %v1248 = vpop.f32.mrb[0].mxu0
  %v1249 = vadd.f32 %v195, %v1248
  %v1250 = vpop.f32.mrb[0].mxu0
  %v1251 = vadd.f32 %v191, %v1250
  %v1252 = vpop.f32.mrb[0].mxu0
  %v1253 = vadd.f32 %v195, %v1252
  %1254 = vmatprep.mubr.bf16.mxu0 %v270
  %1255 = vmatmul.mubr.bf16.gmra.mrb[0].mxu0 %v269
  %v1256 = vpop.f32.mrb[0].mxu0
  %v1257 = vadd.f32 %v191, %v1256
  %v1258 = vpop.f32.mrb[0].mxu0
  %v1259 = vadd.f32 %v195, %v1258
  %v1260 = vpop.f32.mrb[0].mxu0
  %v1261 = vadd.f32 %v191, %v1260
  %v1262 = vpop.f32.mrb[0].mxu0
  %v1263 = vadd.f32 %v195, %v1262
  %1264 = vmatprep.mubr.bf16.mxu0 %v275
  %1265 = vmatmul.mubr.bf16.gmra.mrb[0].mxu0 %v274
  %v1266 = vpop.f32.mrb[0].mxu0
  %v1267 = vadd.f32 %v191, %v1266
  %v1268 = vpop.f32.mrb[0].mxu0
  %v1269 = vadd.f32 %v195, %v1268
  %v1270 = vpop.f32.mrb[0].mxu0
  %v1271 = vadd.f32 %v191, %v1270
  %v1272 = vpop.f32.mrb[0].mxu0
  %v1273 = vadd.f32 %v195, %v1272
  %1274 = vmatprep.mubr.bf16.mxu0 %v280
  %1275 = vmatmul.mubr.bf16.gmra.mrb[0].mxu0 %v279
  %v1276 = vpop.f32.mrb[0].mxu0
  %v1277 = vadd.f32 %v191, %v1276
  %v1278 = vpop.f32.mrb[0].mxu0
  %v1279 = vadd.f32 %v195, %v1278
  %v1280 = vpop.f32.mrb[0].mxu0
  %v1281 = vadd.f32 %v191, %v1280
  %v1282 = vpop.f32.mrb[0].mxu0
  %v1283 = vadd.f32 %v195, %v1282
  %1284 = vdwg.mxu0
  %1285 = vmatprep.subr.bf16.mxu0 %v775
  %1286 = vmatpush1.bf16.msra.mxu0 %v774
  %1287 = vmatprep.subr.bf16.mxu0 %v779
  %1288 = vmatpush1.bf16.msra.mxu0 %v778
  %1289 = vmatprep.subr.bf16.mxu0 %v783
  %1290 = vmatpush1.bf16.msra.mxu0 %v782
  %1291 = vmatprep.subr.bf16.mxu0 %v787
  %1292 = vmatpush1.bf16.msra.mxu0 %v786
  %1293 = vmatprep.subr.bf16.mxu0 %v791
  %1294 = vmatpush1.bf16.msra.mxu0 %v790
  %1295 = vmatprep.subr.bf16.mxu0 %v795
  %1296 = vmatpush1.bf16.msra.mxu0 %v794
  %1297 = vmatprep.subr.bf16.mxu0 %v799
  %1298 = vmatpush1.bf16.msra.mxu0 %v798
  %1299 = vmatprep.subr.bf16.mxu0 %v803
  %1300 = vmatpush1.bf16.msra.mxu0 %v802
  %1301 = vmatprep.subr.bf16.mxu0 %v807
  %1302 = vmatpush1.bf16.msra.mxu0 %v806
  %1303 = vmatprep.subr.bf16.mxu0 %v811
  %1304 = vmatpush1.bf16.msra.mxu0 %v810
  %1305 = vmatprep.subr.bf16.mxu0 %v815
  %1306 = vmatpush1.bf16.msra.mxu0 %v814
  %1307 = vmatprep.subr.bf16.mxu0 %v819
  %1308 = vmatpush1.bf16.msra.mxu0 %v818
  %1309 = vmatprep.subr.bf16.mxu0 %v823
  %1310 = vmatpush1.bf16.msra.mxu0 %v822
  %1311 = vmatprep.subr.bf16.mxu0 %v827
  %1312 = vmatpush1.bf16.msra.mxu0 %v826
  %1313 = vmatprep.subr.bf16.mxu0 %v831
  %1314 = vmatpush1.bf16.msra.mxu0 %v830
  %1315 = vmatprep.subr.bf16.mxu0 %v835
  %1316 = vmatpush1.bf16.msra.mxu0 %v834
  %1317 = vmatprep.mubr.bf16.mxu0 %v267
  %1318 = vmatmul.mubr.bf16.gmra.mrb[0].mxu0 %v266
  %v1319 = vpop.f32.mrb[0].mxu0
  %v1320 = vadd.f32 %v1247, %v1319
  %v1321 = vpop.f32.mrb[0].mxu0
  %v1322 = vadd.f32 %v1249, %v1321
  %v1323 = vpop.f32.mrb[0].mxu0
  %v1324 = vadd.f32 %v1251, %v1323
  %v1325 = vpop.f32.mrb[0].mxu0
  %v1326 = vadd.f32 %v1253, %v1325
  %1327 = vmatprep.mubr.bf16.mxu0 %v272
  %1328 = vmatmul.mubr.bf16.gmra.mrb[0].mxu0 %v271
  %v1329 = vpop.f32.mrb[0].mxu0
  %v1330 = vadd.f32 %v1257, %v1329
  %v1331 = vpop.f32.mrb[0].mxu0
  %v1332 = vadd.f32 %v1259, %v1331
  %v1333 = vpop.f32.mrb[0].mxu0
  %v1334 = vadd.f32 %v1261, %v1333
  %v1335 = vpop.f32.mrb[0].mxu0
  %v1336 = vadd.f32 %v1263, %v1335
  %1337 = vmatprep.mubr.bf16.mxu0 %v277
  %1338 = vmatmul.mubr.bf16.gmra.mrb[0].mxu0 %v276
  %v1339 = vpop.f32.mrb[0].mxu0
  %v1340 = vadd.f32 %v1267, %v1339
  %v1341 = vpop.f32.mrb[0].mxu0
  %v1342 = vadd.f32 %v1269, %v1341
  %v1343 = vpop.f32.mrb[0].mxu0
  %v1344 = vadd.f32 %v1271, %v1343
  %v1345 = vpop.f32.mrb[0].mxu0
  %v1346 = vadd.f32 %v1273, %v1345
  %1347 = vmatprep.mubr.bf16.mxu0 %v282
  %1348 = vmatmul.mubr.bf16.gmra.mrb[0].mxu0 %v281
  %v1349 = vpop.f32.mrb[0].mxu0
  %v1350 = vadd.f32 %v1277, %v1349
  %v1351 = vpop.f32.mrb[0].mxu0
  %v1352 = vadd.f32 %v1279, %v1351
  %v1353 = vpop.f32.mrb[0].mxu0
  %v1354 = vadd.f32 %v1281, %v1353
  %v1355 = vpop.f32.mrb[0].mxu0
  %v1356 = vadd.f32 %v1283, %v1355
  %1357 = vdwg.mxu0
  %1358 = vmatprep.subr.bf16.mxu0 %v839
  %1359 = vmatpush1.bf16.msra.mxu0 %v838
  %1360 = vmatprep.subr.bf16.mxu0 %v843
  %1361 = vmatpush1.bf16.msra.mxu0 %v842
  %1362 = vmatprep.subr.bf16.mxu0 0
  %1363 = vmatpush1.bf16.msra.mxu0 0
  %1364 = vmatprep.subr.bf16.mxu0 0
  %1365 = vmatpush1.bf16.msra.mxu0 0
  %1366 = vmatprep.subr.bf16.mxu0 0
  %1367 = vmatpush1.bf16.msra.mxu0 0
  %1368 = vmatprep.subr.bf16.mxu0 0
  %1369 = vmatpush1.bf16.msra.mxu0 0
  %1370 = vmatprep.subr.bf16.mxu0 0
  %1371 = vmatpush1.bf16.msra.mxu0 0
  %1372 = vmatprep.subr.bf16.mxu0 0
  %1373 = vmatpush1.bf16.msra.mxu0 0
  %1374 = vmatprep.subr.bf16.mxu0 0
  %1375 = vmatpush1.bf16.msra.mxu0 0
  %1376 = vmatprep.subr.bf16.mxu0 0
  %1377 = vmatpush1.bf16.msra.mxu0 0
  %1378 = vmatprep.subr.bf16.mxu0 0
  %1379 = vmatpush1.bf16.msra.mxu0 0
  %1380 = vmatprep.subr.bf16.mxu0 0
  %1381 = vmatpush1.bf16.msra.mxu0 0
  %1382 = vmatprep.subr.bf16.mxu0 0
  %1383 = vmatpush1.bf16.msra.mxu0 0
  %1384 = vmatprep.subr.bf16.mxu0 0
  %1385 = vmatpush1.bf16.msra.mxu0 0
  %1386 = vmatprep.subr.bf16.mxu0 0
  %1387 = vmatpush1.bf16.msra.mxu0 0
  %1388 = vmatprep.subr.bf16.mxu0 0
  %1389 = vmatpush1.bf16.msra.mxu0 0
  %1390 = vmatprep.mubr.bf16.mxu0 0
  %1391 = vmatmul.mubr.bf16.gmra.mrb[0].mxu0 %v982
  %v1392 = vpop.f32.mrb[0].mxu0
  %v1393 = vadd.f32 %v1320, %v1392
  %v1394 = vpop.f32.mrb[0].mxu0
  %v1395 = vadd.f32 %v1322, %v1394
  %v1396 = vpop.f32.mrb[0].mxu0
  %v1397 = vadd.f32 %v1324, %v1396
  %v1398 = vpop.f32.mrb[0].mxu0
  %v1399 = vadd.f32 %v1326, %v1398
  %1400 = vmatprep.mubr.bf16.mxu0 0
  %1401 = vmatmul.mubr.bf16.gmra.mrb[0].mxu0 %v985
  %v1402 = vpop.f32.mrb[0].mxu0
  %v1403 = vadd.f32 %v1330, %v1402
  %v1404 = vpop.f32.mrb[0].mxu0
  %v1405 = vadd.f32 %v1332, %v1404
  %v1406 = vpop.f32.mrb[0].mxu0
  %v1407 = vadd.f32 %v1334, %v1406
  %v1408 = vpop.f32.mrb[0].mxu0
  %v1409 = vadd.f32 %v1336, %v1408
  %1410 = vmatprep.mubr.bf16.mxu0 0
  %1411 = vmatmul.mubr.bf16.gmra.mrb[0].mxu0 %v988
  %v1412 = vpop.f32.mrb[0].mxu0
  %v1413 = vadd.f32 %v1340, %v1412
  %v1414 = vpop.f32.mrb[0].mxu0
  %v1415 = vadd.f32 %v1342, %v1414
  %v1416 = vpop.f32.mrb[0].mxu0
  %v1417 = vadd.f32 %v1344, %v1416
  %v1418 = vpop.f32.mrb[0].mxu0
  %v1419 = vadd.f32 %v1346, %v1418
  %1420 = vmatprep.mubr.bf16.mxu0 0
  %1421 = vmatmul.mubr.bf16.gmra.mrb[0].mxu0 %v991
  %v1422 = vpop.f32.mrb[0].mxu0
  %v1423 = vadd.f32 %v1350, %v1422
  %v1424 = vpop.f32.mrb[0].mxu0
  %v1425 = vadd.f32 %v1352, %v1424
  %v1426 = vpop.f32.mrb[0].mxu0
  %v1427 = vadd.f32 %v1354, %v1426
  %v1428 = vpop.f32.mrb[0].mxu0
  %v1429 = vadd.f32 %v1356, %v1428
  %1430 = vdwg.mxu0
  %1431 = vst [vmem:[#allocation2] sm:$0xff] %v1174
  %1432 = vst [vmem:[#allocation2 + $0x8] sm:$0xff] %v1176
  %1433 = vst [vmem:[#allocation2 + $0x10] sm:$0xff] %v1393
  %1434 = vst [vmem:[#allocation2 + $0x18] sm:$0xff] %v1395
  %1435 = vst [vmem:[#allocation2 + $0x20] sm:$0xff] %v1178
  %1436 = vst [vmem:[#allocation2 + $0x28] sm:$0xff] %v1180
  %1437 = vst [vmem:[#allocation2 + $0x30] sm:$0xff] %v1397
  %1438 = vst [vmem:[#allocation2 + $0x38] sm:$0xff] %v1399
  %1439 = vst [vmem:[#allocation2 + $0x40] sm:$0xff] %v1184
  %1440 = vst [vmem:[#allocation2 + $0x48] sm:$0xff] %v1186
  %1441 = vst [vmem:[#allocation2 + $0x50] sm:$0xff] %v1403
  %1442 = vst [vmem:[#allocation2 + $0x58] sm:$0xff] %v1405
  %1443 = vst [vmem:[#allocation2 + $0x60] sm:$0xff] %v1188
  %1444 = vst [vmem:[#allocation2 + $0x68] sm:$0xff] %v1190
  %1445 = vst [vmem:[#allocation2 + $0x70] sm:$0xff] %v1407
  %1446 = vst [vmem:[#allocation2 + $0x78] sm:$0xff] %v1409
  %1447 = vst [vmem:[#allocation2 + $0x80] sm:$0xff] %v1194
  %1448 = vst [vmem:[#allocation2 + $0x88] sm:$0xff] %v1196
  %1449 = vst [vmem:[#allocation2 + $0x90] sm:$0xff] %v1413
  %1450 = vst [vmem:[#allocation2 + $0x98] sm:$0xff] %v1415
  %1451 = vst [vmem:[#allocation2 + $0xa0] sm:$0xff] %v1198
  %1452 = vst [vmem:[#allocation2 + $0xa8] sm:$0xff] %v1200
  %1453 = vst [vmem:[#allocation2 + $0xb0] sm:$0xff] %v1417
  %1454 = vst [vmem:[#allocation2 + $0xb8] sm:$0xff] %v1419
  %1455 = vst [vmem:[#allocation2 + $0xc0] sm:$0xff] %v1204
  %1456 = vst [vmem:[#allocation2 + $0xc8] sm:$0xff] %v1206
  %1457 = vst [vmem:[#allocation2 + $0xd0] sm:$0xff] %v1423
  %1458 = vst [vmem:[#allocation2 + $0xd8] sm:$0xff] %v1425
  %1459 = vst [vmem:[#allocation2 + $0xe0] sm:$0xff] %v1208
  %1460 = vst [vmem:[#allocation2 + $0xe8] sm:$0xff] %v1210
  %1461 = vst [vmem:[#allocation2 + $0xf0] sm:$0xff] %v1427
  %1462 = vst [vmem:[#allocation2 + $0xf8] sm:$0xff] %v1429
  %1463 = vst [vmem:[#allocation3] sm:$0xff] 0.0
  %1464 = vst [vmem:[#allocation4] sm:$0xff] 0.0
  %v1465 = vld [vmem:[%s2] sm:$0xff]
  %v1466 = vld [vmem:[%s2 + $0x8] sm:$0xff]
  %v1467 = vld [vmem:[%s2 + $0x10] sm:$0xff]
  %v1468 = vld [vmem:[%s2 + $0x18] sm:$0xff]
  %v1469 = vld [vmem:[%s2 + $0x20] sm:$0xff]
  %v1470 = vld [vmem:[%s2 + $0x28] sm:$0xff]
  %v1471 = vld [vmem:[%s2 + $0x30] sm:$0xff]
  %v1472 = vld [vmem:[%s2 + $0x38] sm:$0xff]
  %v1473 = vld [vmem:[%s2 + $0x40] sm:$0xff]
  %v1474 = vld [vmem:[%s2 + $0x48] sm:$0xff]
  %v1475 = vld [vmem:[%s2 + $0x50] sm:$0xff]
  %v1476 = vld [vmem:[%s2 + $0x58] sm:$0xff]
  %v1477 = vld [vmem:[%s2 + $0x60] sm:$0xff]
  %v1478 = vld [vmem:[%s2 + $0x68] sm:$0xff]
  %v1479 = vld [vmem:[%s2 + $0x70] sm:$0xff]
  %v1480 = vld [vmem:[%s2 + $0x78] sm:$0xff]
  %v1481 = vld [vmem:[%s2 + $0x80] sm:$0xff]
  %v1482 = vld [vmem:[%s2 + $0x88] sm:$0xff]
  %v1483 = vld [vmem:[%s2 + $0x90] sm:$0xff]
  %v1484 = vld [vmem:[%s2 + $0x98] sm:$0xff]
  %v1485 = vld [vmem:[%s2 + $0xa0] sm:$0xff]
  %v1486 = vld [vmem:[%s2 + $0xa8] sm:$0xff]
  %v1487 = vld [vmem:[%s2 + $0xb0] sm:$0xff]
  %v1488 = vld [vmem:[%s2 + $0xb8] sm:$0xff]
  %v1489 = vld [vmem:[%s2 + $0xc0] sm:$0xff]
  %v1490 = vld [vmem:[%s2 + $0xc8] sm:$0xff]
  %v1491 = vld [vmem:[%s2 + $0xd0] sm:$0xff]
  %v1492 = vld [vmem:[%s2 + $0xd8] sm:$0xff]
  %v1493 = vld [vmem:[%s2 + $0xe0] sm:$0xff]
  %v1494 = vld [vmem:[%s2 + $0xe8] sm:$0xff]
  %v1495 = vld [vmem:[%s2 + $0xf0] sm:$0xff]
  %v1496 = vld [vmem:[%s2 + $0xf8] sm:$0xff]
  %v1497 = vld [vmem:[#allocation2] sm:$0xff]
  %v1498 = vld [vmem:[#allocation2 + $0x8] sm:$0xff]
  %v1499 = vld [vmem:[#allocation2 + $0x10] sm:$0xff]
  %v1500 = vld [vmem:[#allocation2 + $0x18] sm:$0xff]
  %v1501 = vld [vmem:[#allocation3] sm:$0xff]
  %v1502 = vpack.c.bf16 %v1501, %v1501
  %v1535 = vunpack.c.l.b16 %v1465
  %v1536 = vunpack.c.h.b16 %v1465
  %v1537 = vunpack.c.l.b16 %v1466
  %v1538 = vunpack.c.h.b16 %v1466
  %v1539 = vunpack.c.l.b16 %v1467
  %v1540 = vunpack.c.h.b16 %v1467
  %v1541 = vunpack.c.l.b16 %v1468
  %v1542 = vunpack.c.h.b16 %v1468
  %v1543 = vunpack.c.l.b16 %v1469
  %v1544 = vunpack.c.h.b16 %v1469
  %v1545 = vunpack.c.l.b16 %v1470
  %v1546 = vunpack.c.h.b16 %v1470
  %v1547 = vunpack.c.l.b16 %v1471
  %v1548 = vunpack.c.h.b16 %v1471
  %v1549 = vunpack.c.l.b16 %v1472
  %v1550 = vunpack.c.h.b16 %v1472
  %v1551 = vunpack.c.l.b16 %v1473
  %v1552 = vunpack.c.h.b16 %v1473
  %v1553 = vunpack.c.l.b16 %v1474
  %v1554 = vunpack.c.h.b16 %v1474
  %v1555 = vunpack.c.l.b16 %v1475
  %v1556 = vunpack.c.h.b16 %v1475
  %v1557 = vunpack.c.l.b16 %v1476
  %v1558 = vunpack.c.h.b16 %v1476
  %v1559 = vunpack.c.l.b16 %v1477
  %v1560 = vunpack.c.h.b16 %v1477
  %v1561 = vunpack.c.l.b16 %v1478
  %v1562 = vunpack.c.h.b16 %v1478
  %v1563 = vunpack.c.l.b16 %v1479
  %v1564 = vunpack.c.h.b16 %v1479
  %v1565 = vunpack.c.l.b16 %v1480
  %v1566 = vunpack.c.h.b16 %v1480
  %v1567 = vunpack.c.l.b16 %v1481
  %v1568 = vunpack.c.h.b16 %v1481
  %v1569 = vunpack.c.l.b16 %v1482
  %v1570 = vunpack.c.h.b16 %v1482
  %v1571 = vunpack.c.l.b16 %v1483
  %v1572 = vunpack.c.h.b16 %v1483
  %v1573 = vunpack.c.l.b16 %v1484
  %v1574 = vunpack.c.h.b16 %v1484
  %v1575 = vunpack.c.l.b16 %v1485
  %v1576 = vunpack.c.h.b16 %v1485
  %v1577 = vunpack.c.l.b16 %v1486
  %v1578 = vunpack.c.h.b16 %v1486
  %v1579 = vunpack.c.l.b16 %v1487
  %v1580 = vunpack.c.h.b16 %v1487
  %v1581 = vunpack.c.l.b16 %v1488
  %v1582 = vunpack.c.h.b16 %v1488
  %v1583 = vunpack.c.l.b16 %v1489
  %v1584 = vunpack.c.h.b16 %v1489
  %v1585 = vunpack.c.l.b16 %v1490
  %v1586 = vunpack.c.h.b16 %v1490
  %v1587 = vunpack.c.l.b16 %v1491
  %v1588 = vunpack.c.h.b16 %v1491
  %v1589 = vunpack.c.l.b16 %v1492
  %v1590 = vunpack.c.h.b16 %v1492
  %v1591 = vunpack.c.l.b16 %v1493
  %v1592 = vunpack.c.h.b16 %v1493
  %v1593 = vunpack.c.l.b16 %v1494
  %v1594 = vunpack.c.h.b16 %v1494
  %v1595 = vunpack.c.l.b16 %v1495
  %v1596 = vunpack.c.h.b16 %v1495
  %v1597 = vunpack.c.l.b16 %v1496
  %v1598 = vunpack.c.h.b16 %v1496
  %v1599 = vpack.c.b16 %v1539, %v1535
  %v1600 = vpack.c.b16 %v1540, %v1536
  %v1601 = vpack.c.b16 %v1541, %v1537
  %v1602 = vpack.c.b16 %v1542, %v1538
  %v1603 = vpack.c.b16 %v1547, %v1543
  %v1604 = vpack.c.b16 %v1548, %v1544
  %v1605 = vpack.c.b16 %v1549, %v1545
  %v1606 = vpack.c.b16 %v1550, %v1546
  %v1607 = vpack.c.b16 %v1555, %v1551
  %v1608 = vpack.c.b16 %v1556, %v1552
  %v1609 = vpack.c.b16 %v1557, %v1553
  %v1610 = vpack.c.b16 %v1558, %v1554
  %v1611 = vpack.c.b16 %v1563, %v1559
  %v1612 = vpack.c.b16 %v1564, %v1560
  %v1613 = vpack.c.b16 %v1565, %v1561
  %v1614 = vpack.c.b16 %v1566, %v1562
  %v1615 = vpack.c.b16 %v1571, %v1567
  %v1616 = vpack.c.b16 %v1572, %v1568
  %v1617 = vpack.c.b16 %v1573, %v1569
  %v1618 = vpack.c.b16 %v1574, %v1570
  %v1619 = vpack.c.b16 %v1579, %v1575
  %v1620 = vpack.c.b16 %v1580, %v1576
  %v1621 = vpack.c.b16 %v1581, %v1577
  %v1622 = vpack.c.b16 %v1582, %v1578
  %v1623 = vpack.c.b16 %v1587, %v1583
  %v1624 = vpack.c.b16 %v1588, %v1584
  %v1625 = vpack.c.b16 %v1589, %v1585
  %v1626 = vpack.c.b16 %v1590, %v1586
  %v1627 = vpack.c.b16 %v1595, %v1591
  %v1628 = vpack.c.b16 %v1596, %v1592
  %v1629 = vpack.c.b16 %v1597, %v1593
  %v1630 = vpack.c.b16 %v1598, %v1594
  %1663 = vmatprep.subr.bf16.mxu0 %v1600
  %1664 = vmatpush1.bf16.msra.mxu0 %v1599
  %1665 = vmatprep.subr.bf16.mxu0 %v1604
  %1666 = vmatpush1.bf16.msra.mxu0 %v1603
  %1667 = vmatprep.subr.bf16.mxu0 %v1608
  %1668 = vmatpush1.bf16.msra.mxu0 %v1607
  %1669 = vmatprep.subr.bf16.mxu0 %v1612
  %1670 = vmatpush1.bf16.msra.mxu0 %v1611
  %1671 = vmatprep.subr.bf16.mxu0 %v1616
  %1672 = vmatpush1.bf16.msra.mxu0 %v1615
  %1673 = vmatprep.subr.bf16.mxu0 %v1620
  %1674 = vmatpush1.bf16.msra.mxu0 %v1619
  %1675 = vmatprep.subr.bf16.mxu0 %v1624
  %1676 = vmatpush1.bf16.msra.mxu0 %v1623
  %1677 = vmatprep.subr.bf16.mxu0 %v1628
  %1678 = vmatpush1.bf16.msra.mxu0 %v1627
  %1679 = vmatprep.subr.bf16.mxu0 0
  %1680 = vmatpush1.bf16.msra.mxu0 0
  %1681 = vmatprep.subr.bf16.mxu0 0
  %1682 = vmatpush1.bf16.msra.mxu0 0
  %1683 = vmatprep.subr.bf16.mxu0 0
  %1684 = vmatpush1.bf16.msra.mxu0 0
  %1685 = vmatprep.subr.bf16.mxu0 0
  %1686 = vmatpush1.bf16.msra.mxu0 0
  %1687 = vmatprep.subr.bf16.mxu0 0
  %1688 = vmatpush1.bf16.msra.mxu0 0
  %1689 = vmatprep.subr.bf16.mxu0 0
  %1690 = vmatpush1.bf16.msra.mxu0 0
  %1691 = vmatprep.subr.bf16.mxu0 0
  %1692 = vmatpush1.bf16.msra.mxu0 0
  %1693 = vmatprep.subr.bf16.mxu0 0
  %1694 = vmatpush1.bf16.msra.mxu0 0
  %1695 = vmatprep.mubr.bf16.mxu0 0
  %1696 = vmatmul.mubr.bf16.gmra.mrb[0].mxu0 %v1502
  %v1697 = vpop.f32.mrb[0].mxu0
  %v1698 = vadd.f32 0.0, %v1697
  %v1699 = vpop.f32.mrb[0].mxu0
  %v1700 = vadd.f32 0.0, %v1699
  %v1701 = vpop.f32.mrb[0].mxu0
  %v1702 = vpop.f32.mrb[0].mxu0
  %1703 = vdwg.mxu0
  %1704 = vmatprep.subr.bf16.mxu0 %v1602
  %1705 = vmatpush1.bf16.msra.mxu0 %v1601
  %1706 = vmatprep.subr.bf16.mxu0 %v1606
  %1707 = vmatpush1.bf16.msra.mxu0 %v1605
  %1708 = vmatprep.subr.bf16.mxu0 %v1610
  %1709 = vmatpush1.bf16.msra.mxu0 %v1609
  %1710 = vmatprep.subr.bf16.mxu0 %v1614
  %1711 = vmatpush1.bf16.msra.mxu0 %v1613
  %1712 = vmatprep.subr.bf16.mxu0 %v1618
  %1713 = vmatpush1.bf16.msra.mxu0 %v1617
  %1714 = vmatprep.subr.bf16.mxu0 %v1622
  %1715 = vmatpush1.bf16.msra.mxu0 %v1621
  %1716 = vmatprep.subr.bf16.mxu0 %v1626
  %1717 = vmatpush1.bf16.msra.mxu0 %v1625
  %1718 = vmatprep.subr.bf16.mxu0 %v1630
  %1719 = vmatpush1.bf16.msra.mxu0 %v1629
  %1720 = vmatprep.subr.bf16.mxu0 0
  %1721 = vmatpush1.bf16.msra.mxu0 0
  %1722 = vmatprep.subr.bf16.mxu0 0
  %1723 = vmatpush1.bf16.msra.mxu0 0
  %1724 = vmatprep.subr.bf16.mxu0 0
  %1725 = vmatpush1.bf16.msra.mxu0 0
  %1726 = vmatprep.subr.bf16.mxu0 0
  %1727 = vmatpush1.bf16.msra.mxu0 0
  %1728 = vmatprep.subr.bf16.mxu0 0
  %1729 = vmatpush1.bf16.msra.mxu0 0
  %1730 = vmatprep.subr.bf16.mxu0 0
  %1731 = vmatpush1.bf16.msra.mxu0 0
  %1732 = vmatprep.subr.bf16.mxu0 0
  %1733 = vmatpush1.bf16.msra.mxu0 0
  %1734 = vmatprep.subr.bf16.mxu0 0
  %1735 = vmatpush1.bf16.msra.mxu0 0
  %1736 = vmatprep.mubr.bf16.mxu0 0
  %1737 = vmatmul.mubr.bf16.gmra.mrb[0].mxu0 %v1502
  %v1738 = vpop.f32.mrb[0].mxu0
  %v1739 = vadd.f32 0.0, %v1738
  %v1740 = vpop.f32.mrb[0].mxu0
  %v1741 = vadd.f32 0.0, %v1740
  %v1742 = vpop.f32.mrb[0].mxu0
  %v1743 = vpop.f32.mrb[0].mxu0
  %1744 = vdwg.mxu0
  %v1745 = vadd.f32 %v1497, %v1698
  %v1746 = vadd.f32 %v1498, %v1700
  %v1747 = vadd.f32 %v1499, %v1739
  %v1748 = vadd.f32 %v1500, %v1741
  %v1749 = vxor.u32 %v1745, 2147483648
  %v1750 = vmul.f32 %v1749, 1.442695
  %v1751 = vpow.pop %v1750
  %v1752 = vadd.f32 %v1751, 1.0
  %v1753 = vrcp.pop %v1752
  %v1754 = vmul.f32 1.0, %v1753
  %v1755 = vxor.u32 %v1746, 2147483648
  %v1756 = vmul.f32 %v1755, 1.442695
  %v1757 = vpow.pop %v1756
  %v1758 = vadd.f32 %v1757, 1.0
  %v1759 = vrcp.pop %v1758
  %v1760 = vmul.f32 1.0, %v1759
  %v1761 = vtanh.pop %v1747
  %v1762 = vxor.u32 %v1748, 2147483648
  %v1763 = vmul.f32 %v1762, 1.442695
  %v1764 = vpow.pop %v1763
  %v1765 = vadd.f32 %v1764, 1.0
  %v1766 = vrcp.pop %v1765
  %v1767 = vmul.f32 1.0, %v1766
  %v1768 = vld [vmem:[#allocation4] sm:$0xff]
  %v1769 = vmul.f32 %v1760, %v1768
  %v1770 = vmul.f32 %v1754, %v1761
  %v1771 = vadd.f32 %v1769, %v1770
  %v1772 = vtanh.pop %v1771
  %v1773 = vmul.f32 %v1767, %v1772
  %1774 = vst [vmem:[#allocation4] sm:$0xff] %v1771
  %1775 = vst [vmem:[#allocation3] sm:$0xff] %v1773
  %v1776 = vpack.c.bf16 %v1773, %v1773
  %1777 = vst [vmem:[%s4] sm:$0xf] %v1776
  %s1778 = scalar_lea.vmem [#allocation2], 32
  %v1779 = vld [vmem:[%s1778] sm:$0xff]
  %v1780 = vld [vmem:[%s1778 + $0x8] sm:$0xff]
  %v1781 = vld [vmem:[%s1778 + $0x10] sm:$0xff]
  %v1782 = vld [vmem:[%s1778 + $0x18] sm:$0xff]
  %v1783 = vld [vmem:[#allocation3] sm:$0xff]
  %v1784 = vpack.c.bf16 %v1783, %v1783
  %1785 = vmatprep.subr.bf16.mxu0 %v1600
  %1786 = vmatpush1.bf16.msra.mxu0 %v1599
  %1787 = vmatprep.subr.bf16.mxu0 %v1604
  %1788 = vmatpush1.bf16.msra.mxu0 %v1603
  %1789 = vmatprep.subr.bf16.mxu0 %v1608
  %1790 = vmatpush1.bf16.msra.mxu0 %v1607
  %1791 = vmatprep.subr.bf16.mxu0 %v1612
  %1792 = vmatpush1.bf16.msra.mxu0 %v1611
  %1793 = vmatprep.subr.bf16.mxu0 %v1616
  %1794 = vmatpush1.bf16.msra.mxu0 %v1615
  %1795 = vmatprep.subr.bf16.mxu0 %v1620
  %1796 = vmatpush1.bf16.msra.mxu0 %v1619
  %1797 = vmatprep.subr.bf16.mxu0 %v1624
  %1798 = vmatpush1.bf16.msra.mxu0 %v1623
  %1799 = vmatprep.subr.bf16.mxu0 %v1628
  %1800 = vmatpush1.bf16.msra.mxu0 %v1627
  %1801 = vmatprep.subr.bf16.mxu0 0
  %1802 = vmatpush1.bf16.msra.mxu0 0
  %1803 = vmatprep.subr.bf16.mxu0 0
  %1804 = vmatpush1.bf16.msra.mxu0 0
  %1805 = vmatprep.subr.bf16.mxu0 0
  %1806 = vmatpush1.bf16.msra.mxu0 0
  %1807 = vmatprep.subr.bf16.mxu0 0
  %1808 = vmatpush1.bf16.msra.mxu0 0
  %1809 = vmatprep.subr.bf16.mxu0 0
  %1810 = vmatpush1.bf16.msra.mxu0 0
  %1811 = vmatprep.subr.bf16.mxu0 0
  %1812 = vmatpush1.bf16.msra.mxu0 0
  %1813 = vmatprep.subr.bf16.mxu0 0
  %1814 = vmatpush1.bf16.msra.mxu0 0
  %1815 = vmatprep.subr.bf16.mxu0 0
  %1816 = vmatpush1.bf16.msra.mxu0 0
  %1817 = vmatprep.mubr.bf16.mxu0 0
  %1818 = vmatmul.mubr.bf16.gmra.mrb[0].mxu0 %v1784
  %v1819 = vpop.f32.mrb[0].mxu0
  %v1820 = vadd.f32 0.0, %v1819
  %v1821 = vpop.f32.mrb[0].mxu0
  %v1822 = vadd.f32 0.0, %v1821
  %v1823 = vpop.f32.mrb[0].mxu0
  %v1824 = vpop.f32.mrb[0].mxu0
  %1825 = vdwg.mxu0
  %1826 = vmatprep.subr.bf16.mxu0 %v1602
  %1827 = vmatpush1.bf16.msra.mxu0 %v1601
  %1828 = vmatprep.subr.bf16.mxu0 %v1606
  %1829 = vmatpush1.bf16.msra.mxu0 %v1605
  %1830 = vmatprep.subr.bf16.mxu0 %v1610
  %1831 = vmatpush1.bf16.msra.mxu0 %v1609
  %1832 = vmatprep.subr.bf16.mxu0 %v1614
  %1833 = vmatpush1.bf16.msra.mxu0 %v1613
  %1834 = vmatprep.subr.bf16.mxu0 %v1618
  %1835 = vmatpush1.bf16.msra.mxu0 %v1617
  %1836 = vmatprep.subr.bf16.mxu0 %v1622
  %1837 = vmatpush1.bf16.msra.mxu0 %v1621
  %1838 = vmatprep.subr.bf16.mxu0 %v1626
  %1839 = vmatpush1.bf16.msra.mxu0 %v1625
  %1840 = vmatprep.subr.bf16.mxu0 %v1630
  %1841 = vmatpush1.bf16.msra.mxu0 %v1629
  %1842 = vmatprep.subr.bf16.mxu0 0
  %1843 = vmatpush1.bf16.msra.mxu0 0
  %1844 = vmatprep.subr.bf16.mxu0 0
  %1845 = vmatpush1.bf16.msra.mxu0 0
  %1846 = vmatprep.subr.bf16.mxu0 0
  %1847 = vmatpush1.bf16.msra.mxu0 0
  %1848 = vmatprep.subr.bf16.mxu0 0
  %1849 = vmatpush1.bf16.msra.mxu0 0
  %1850 = vmatprep.subr.bf16.mxu0 0
  %1851 = vmatpush1.bf16.msra.mxu0 0
  %1852 = vmatprep.subr.bf16.mxu0 0
  %1853 = vmatpush1.bf16.msra.mxu0 0
  %1854 = vmatprep.subr.bf16.mxu0 0
  %1855 = vmatpush1.bf16.msra.mxu0 0
  %1856 = vmatprep.subr.bf16.mxu0 0
  %1857 = vmatpush1.bf16.msra.mxu0 0
  %1858 = vmatprep.mubr.bf16.mxu0 0
  %1859 = vmatmul.mubr.bf16.gmra.mrb[0].mxu0 %v1784
  %v1860 = vpop.f32.mrb[0].mxu0
  %v1861 = vadd.f32 0.0, %v1860
  %v1862 = vpop.f32.mrb[0].mxu0
  %v1863 = vadd.f32 0.0, %v1862
  %v1864 = vpop.f32.mrb[0].mxu0
  %v1865 = vpop.f32.mrb[0].mxu0
  %1866 = vdwg.mxu0
  %v1867 = vadd.f32 %v1779, %v1820
  %v1868 = vadd.f32 %v1780, %v1822
  %v1869 = vadd.f32 %v1781, %v1861
  %v1870 = vadd.f32 %v1782, %v1863
  %v1871 = vxor.u32 %v1867, 2147483648
  %v1872 = vmul.f32 %v1871, 1.442695
  %v1873 = vpow.pop %v1872
  %v1874 = vadd.f32 %v1873, 1.0
  %v1875 = vrcp.pop %v1874
  %v1876 = vmul.f32 1.0, %v1875
  %v1877 = vxor.u32 %v1868, 2147483648
  %v1878 = vmul.f32 %v1877, 1.442695
  %v1879 = vpow.pop %v1878
  %v1880 = vadd.f32 %v1879, 1.0
  %v1881 = vrcp.pop %v1880
  %v1882 = vmul.f32 1.0, %v1881
  %v1883 = vtanh.pop %v1869
  %v1884 = vxor.u32 %v1870, 2147483648
  %v1885 = vmul.f32 %v1884, 1.442695
  %v1886 = vpow.pop %v1885
  %v1887 = vadd.f32 %v1886, 1.0
  %v1888 = vrcp.pop %v1887
  %v1889 = vmul.f32 1.0, %v1888
  %v1890 = vld [vmem:[#allocation4] sm:$0xff]
  %v1891 = vmul.f32 %v1882, %v1890
  %v1892 = vmul.f32 %v1876, %v1883
  %v1893 = vadd.f32 %v1891, %v1892
  %v1894 = vtanh.pop %v1893
  %v1895 = vmul.f32 %v1889, %v1894
  %1896 = vst [vmem:[#allocation4] sm:$0xff] %v1893
  %1897 = vst [vmem:[#allocation3] sm:$0xff] %v1895
  %v1898 = vpack.c.bf16 %v1895, %v1895
  %s1899 = scalar_lea.vmem %s4, 4
  %1900 = vst [vmem:[%s1899] sm:$0xf] %v1898
  %s1901 = scalar_lea.vmem [#allocation2], 64
  %v1902 = vld [vmem:[%s1901] sm:$0xff]
  %v1903 = vld [vmem:[%s1901 + $0x8] sm:$0xff]
  %v1904 = vld [vmem:[%s1901 + $0x10] sm:$0xff]
  %v1905 = vld [vmem:[%s1901 + $0x18] sm:$0xff]
  %v1906 = vld [vmem:[#allocation3] sm:$0xff]
  %v1907 = vpack.c.bf16 %v1906, %v1906
  %1908 = vmatprep.subr.bf16.mxu0 %v1600
  %1909 = vmatpush1.bf16.msra.mxu0 %v1599
  %1910 = vmatprep.subr.bf16.mxu0 %v1604
  %1911 = vmatpush1.bf16.msra.mxu0 %v1603
  %1912 = vmatprep.subr.bf16.mxu0 %v1608
  %1913 = vmatpush1.bf16.msra.mxu0 %v1607
  %1914 = vmatprep.subr.bf16.mxu0 %v1612
  %1915 = vmatpush1.bf16.msra.mxu0 %v1611
  %1916 = vmatprep.subr.bf16.mxu0 %v1616
  %1917 = vmatpush1.bf16.msra.mxu0 %v1615
  %1918 = vmatprep.subr.bf16.mxu0 %v1620
  %1919 = vmatpush1.bf16.msra.mxu0 %v1619
  %1920 = vmatprep.subr.bf16.mxu0 %v1624
  %1921 = vmatpush1.bf16.msra.mxu0 %v1623
  %1922 = vmatprep.subr.bf16.mxu0 %v1628
  %1923 = vmatpush1.bf16.msra.mxu0 %v1627
  %1924 = vmatprep.subr.bf16.mxu0 0
  %1925 = vmatpush1.bf16.msra.mxu0 0
  %1926 = vmatprep.subr.bf16.mxu0 0
  %1927 = vmatpush1.bf16.msra.mxu0 0
  %1928 = vmatprep.subr.bf16.mxu0 0
  %1929 = vmatpush1.bf16.msra.mxu0 0
  %1930 = vmatprep.subr.bf16.mxu0 0
  %1931 = vmatpush1.bf16.msra.mxu0 0
  %1932 = vmatprep.subr.bf16.mxu0 0
  %1933 = vmatpush1.bf16.msra.mxu0 0
  %1934 = vmatprep.subr.bf16.mxu0 0
  %1935 = vmatpush1.bf16.msra.mxu0 0
  %1936 = vmatprep.subr.bf16.mxu0 0
  %1937 = vmatpush1.bf16.msra.mxu0 0
  %1938 = vmatprep.subr.bf16.mxu0 0
  %1939 = vmatpush1.bf16.msra.mxu0 0
  %1940 = vmatprep.mubr.bf16.mxu0 0
  %1941 = vmatmul.mubr.bf16.gmra.mrb[0].mxu0 %v1907
  %v1942 = vpop.f32.mrb[0].mxu0
  %v1943 = vadd.f32 0.0, %v1942
  %v1944 = vpop.f32.mrb[0].mxu0
  %v1945 = vadd.f32 0.0, %v1944
  %v1946 = vpop.f32.mrb[0].mxu0
  %v1947 = vpop.f32.mrb[0].mxu0
  %1948 = vdwg.mxu0
  %1949 = vmatprep.subr.bf16.mxu0 %v1602
  %1950 = vmatpush1.bf16.msra.mxu0 %v1601
  %1951 = vmatprep.subr.bf16.mxu0 %v1606
  %1952 = vmatpush1.bf16.msra.mxu0 %v1605
  %1953 = vmatprep.subr.bf16.mxu0 %v1610
  %1954 = vmatpush1.bf16.msra.mxu0 %v1609
  %1955 = vmatprep.subr.bf16.mxu0 %v1614
  %1956 = vmatpush1.bf16.msra.mxu0 %v1613
  %1957 = vmatprep.subr.bf16.mxu0 %v1618
  %1958 = vmatpush1.bf16.msra.mxu0 %v1617
  %1959 = vmatprep.subr.bf16.mxu0 %v1622
  %1960 = vmatpush1.bf16.msra.mxu0 %v1621
  %1961 = vmatprep.subr.bf16.mxu0 %v1626
  %1962 = vmatpush1.bf16.msra.mxu0 %v1625
  %1963 = vmatprep.subr.bf16.mxu0 %v1630
  %1964 = vmatpush1.bf16.msra.mxu0 %v1629
  %1965 = vmatprep.subr.bf16.mxu0 0
  %1966 = vmatpush1.bf16.msra.mxu0 0
  %1967 = vmatprep.subr.bf16.mxu0 0
  %1968 = vmatpush1.bf16.msra.mxu0 0
  %1969 = vmatprep.subr.bf16.mxu0 0
  %1970 = vmatpush1.bf16.msra.mxu0 0
  %1971 = vmatprep.subr.bf16.mxu0 0
  %1972 = vmatpush1.bf16.msra.mxu0 0
  %1973 = vmatprep.subr.bf16.mxu0 0
  %1974 = vmatpush1.bf16.msra.mxu0 0
  %1975 = vmatprep.subr.bf16.mxu0 0
  %1976 = vmatpush1.bf16.msra.mxu0 0
  %1977 = vmatprep.subr.bf16.mxu0 0
  %1978 = vmatpush1.bf16.msra.mxu0 0
  %1979 = vmatprep.subr.bf16.mxu0 0
  %1980 = vmatpush1.bf16.msra.mxu0 0
  %1981 = vmatprep.mubr.bf16.mxu0 0
  %1982 = vmatmul.mubr.bf16.gmra.mrb[0].mxu0 %v1907
  %v1983 = vpop.f32.mrb[0].mxu0
  %v1984 = vadd.f32 0.0, %v1983
  %v1985 = vpop.f32.mrb[0].mxu0
  %v1986 = vadd.f32 0.0, %v1985
  %v1987 = vpop.f32.mrb[0].mxu0
  %v1988 = vpop.f32.mrb[0].mxu0
  %1989 = vdwg.mxu0
  %v1990 = vadd.f32 %v1902, %v1943
  %v1991 = vadd.f32 %v1903, %v1945
  %v1992 = vadd.f32 %v1904, %v1984
  %v1993 = vadd.f32 %v1905, %v1986
  %v1994 = vxor.u32 %v1990, 2147483648
  %v1995 = vmul.f32 %v1994, 1.442695
  %v1996 = vpow.pop %v1995
  %v1997 = vadd.f32 %v1996, 1.0
  %v1998 = vrcp.pop %v1997
  %v1999 = vmul.f32 1.0, %v1998
  %v2000 = vxor.u32 %v1991, 2147483648
  %v2001 = vmul.f32 %v2000, 1.442695
  %v2002 = vpow.pop %v2001
  %v2003 = vadd.f32 %v2002, 1.0
  %v2004 = vrcp.pop %v2003
  %v2005 = vmul.f32 1.0, %v2004
  %v2006 = vtanh.pop %v1992
  %v2007 = vxor.u32 %v1993, 2147483648
  %v2008 = vmul.f32 %v2007, 1.442695
  %v2009 = vpow.pop %v2008
  %v2010 = vadd.f32 %v2009, 1.0
  %v2011 = vrcp.pop %v2010
  %v2012 = vmul.f32 1.0, %v2011
  %v2013 = vld [vmem:[#allocation4] sm:$0xff]
  %v2014 = vmul.f32 %v2005, %v2013
  %v2015 = vmul.f32 %v1999, %v2006
  %v2016 = vadd.f32 %v2014, %v2015
  %v2017 = vtanh.pop %v2016
  %v2018 = vmul.f32 %v2012, %v2017
  %2019 = vst [vmem:[#allocation4] sm:$0xff] %v2016
  %2020 = vst [vmem:[#allocation3] sm:$0xff] %v2018
  %v2021 = vpack.c.bf16 %v2018, %v2018
  %s2022 = scalar_lea.vmem %s4, 8
  %2023 = vst [vmem:[%s2022] sm:$0xf] %v2021
  %s2024 = scalar_lea.vmem [#allocation2], 96
  %v2025 = vld [vmem:[%s2024] sm:$0xff]
  %v2026 = vld [vmem:[%s2024 + $0x8] sm:$0xff]
  %v2027 = vld [vmem:[%s2024 + $0x10] sm:$0xff]
  %v2028 = vld [vmem:[%s2024 + $0x18] sm:$0xff]
  %v2029 = vld [vmem:[#allocation3] sm:$0xff]
  %v2030 = vpack.c.bf16 %v2029, %v2029
  %2031 = vmatprep.subr.bf16.mxu0 %v1600
  %2032 = vmatpush1.bf16.msra.mxu0 %v1599
  %2033 = vmatprep.subr.bf16.mxu0 %v1604
  %2034 = vmatpush1.bf16.msra.mxu0 %v1603
  %2035 = vmatprep.subr.bf16.mxu0 %v1608
  %2036 = vmatpush1.bf16.msra.mxu0 %v1607
  %2037 = vmatprep.subr.bf16.mxu0 %v1612
  %2038 = vmatpush1.bf16.msra.mxu0 %v1611
  %2039 = vmatprep.subr.bf16.mxu0 %v1616
  %2040 = vmatpush1.bf16.msra.mxu0 %v1615
  %2041 = vmatprep.subr.bf16.mxu0 %v1620
  %2042 = vmatpush1.bf16.msra.mxu0 %v1619
  %2043 = vmatprep.subr.bf16.mxu0 %v1624
  %2044 = vmatpush1.bf16.msra.mxu0 %v1623
  %2045 = vmatprep.subr.bf16.mxu0 %v1628
  %2046 = vmatpush1.bf16.msra.mxu0 %v1627
  %2047 = vmatprep.subr.bf16.mxu0 0
  %2048 = vmatpush1.bf16.msra.mxu0 0
  %2049 = vmatprep.subr.bf16.mxu0 0
  %2050 = vmatpush1.bf16.msra.mxu0 0
  %2051 = vmatprep.subr.bf16.mxu0 0
  %2052 = vmatpush1.bf16.msra.mxu0 0
  %2053 = vmatprep.subr.bf16.mxu0 0
  %2054 = vmatpush1.bf16.msra.mxu0 0
  %2055 = vmatprep.subr.bf16.mxu0 0
  %2056 = vmatpush1.bf16.msra.mxu0 0
  %2057 = vmatprep.subr.bf16.mxu0 0
  %2058 = vmatpush1.bf16.msra.mxu0 0
  %2059 = vmatprep.subr.bf16.mxu0 0
  %2060 = vmatpush1.bf16.msra.mxu0 0
  %2061 = vmatprep.subr.bf16.mxu0 0
  %2062 = vmatpush1.bf16.msra.mxu0 0
  %2063 = vmatprep.mubr.bf16.mxu0 0
  %2064 = vmatmul.mubr.bf16.gmra.mrb[0].mxu0 %v2030
  %v2065 = vpop.f32.mrb[0].mxu0
  %v2066 = vadd.f32 0.0, %v2065
  %v2067 = vpop.f32.mrb[0].mxu0
  %v2068 = vadd.f32 0.0, %v2067
  %v2069 = vpop.f32.mrb[0].mxu0
  %v2070 = vpop.f32.mrb[0].mxu0
  %2071 = vdwg.mxu0
  %2072 = vmatprep.subr.bf16.mxu0 %v1602
  %2073 = vmatpush1.bf16.msra.mxu0 %v1601
  %2074 = vmatprep.subr.bf16.mxu0 %v1606
  %2075 = vmatpush1.bf16.msra.mxu0 %v1605
  %2076 = vmatprep.subr.bf16.mxu0 %v1610
  %2077 = vmatpush1.bf16.msra.mxu0 %v1609
  %2078 = vmatprep.subr.bf16.mxu0 %v1614
  %2079 = vmatpush1.bf16.msra.mxu0 %v1613
  %2080 = vmatprep.subr.bf16.mxu0 %v1618
  %2081 = vmatpush1.bf16.msra.mxu0 %v1617
  %2082 = vmatprep.subr.bf16.mxu0 %v1622
  %2083 = vmatpush1.bf16.msra.mxu0 %v1621
  %2084 = vmatprep.subr.bf16.mxu0 %v1626
  %2085 = vmatpush1.bf16.msra.mxu0 %v1625
  %2086 = vmatprep.subr.bf16.mxu0 %v1630
  %2087 = vmatpush1.bf16.msra.mxu0 %v1629
  %2088 = vmatprep.subr.bf16.mxu0 0
  %2089 = vmatpush1.bf16.msra.mxu0 0
  %2090 = vmatprep.subr.bf16.mxu0 0
  %2091 = vmatpush1.bf16.msra.mxu0 0
  %2092 = vmatprep.subr.bf16.mxu0 0
  %2093 = vmatpush1.bf16.msra.mxu0 0
  %2094 = vmatprep.subr.bf16.mxu0 0
  %2095 = vmatpush1.bf16.msra.mxu0 0
  %2096 = vmatprep.subr.bf16.mxu0 0
  %2097 = vmatpush1.bf16.msra.mxu0 0
  %2098 = vmatprep.subr.bf16.mxu0 0
  %2099 = vmatpush1.bf16.msra.mxu0 0
  %2100 = vmatprep.subr.bf16.mxu0 0
  %2101 = vmatpush1.bf16.msra.mxu0 0
  %2102 = vmatprep.subr.bf16.mxu0 0
  %2103 = vmatpush1.bf16.msra.mxu0 0
  %2104 = vmatprep.mubr.bf16.mxu0 0
  %2105 = vmatmul.mubr.bf16.gmra.mrb[0].mxu0 %v2030
  %v2106 = vpop.f32.mrb[0].mxu0
  %v2107 = vadd.f32 0.0, %v2106
  %v2108 = vpop.f32.mrb[0].mxu0
  %v2109 = vadd.f32 0.0, %v2108
  %v2110 = vpop.f32.mrb[0].mxu0
  %v2111 = vpop.f32.mrb[0].mxu0
  %2112 = vdwg.mxu0
  %v2113 = vadd.f32 %v2025, %v2066
  %v2114 = vadd.f32 %v2026, %v2068
  %v2115 = vadd.f32 %v2027, %v2107
  %v2116 = vadd.f32 %v2028, %v2109
  %v2117 = vxor.u32 %v2113, 2147483648
  %v2118 = vmul.f32 %v2117, 1.442695
  %v2119 = vpow.pop %v2118
  %v2120 = vadd.f32 %v2119, 1.0
  %v2121 = vrcp.pop %v2120
  %v2122 = vmul.f32 1.0, %v2121
  %v2123 = vxor.u32 %v2114, 2147483648
  %v2124 = vmul.f32 %v2123, 1.442695
  %v2125 = vpow.pop %v2124
  %v2126 = vadd.f32 %v2125, 1.0
  %v2127 = vrcp.pop %v2126
  %v2128 = vmul.f32 1.0, %v2127
  %v2129 = vtanh.pop %v2115
  %v2130 = vxor.u32 %v2116, 2147483648
  %v2131 = vmul.f32 %v2130, 1.442695
  %v2132 = vpow.pop %v2131
  %v2133 = vadd.f32 %v2132, 1.0
  %v2134 = vrcp.pop %v2133
  %v2135 = vmul.f32 1.0, %v2134
  %v2136 = vld [vmem:[#allocation4] sm:$0xff]
  %v2137 = vmul.f32 %v2128, %v2136
  %v2138 = vmul.f32 %v2122, %v2129
  %v2139 = vadd.f32 %v2137, %v2138
  %v2140 = vtanh.pop %v2139
  %v2141 = vmul.f32 %v2135, %v2140
  %2142 = vst [vmem:[#allocation4] sm:$0xff] %v2139
  %2143 = vst [vmem:[#allocation3] sm:$0xff] %v2141
  %v2144 = vpack.c.bf16 %v2141, %v2141
  %s2145 = scalar_lea.vmem %s4, 12
  %2146 = vst [vmem:[%s2145] sm:$0xf] %v2144
  %s2147 = scalar_lea.vmem [#allocation2], 128
  %v2148 = vld [vmem:[%s2147] sm:$0xff]
  %v2149 = vld [vmem:[%s2147 + $0x8] sm:$0xff]
  %v2150 = vld [vmem:[%s2147 + $0x10] sm:$0xff]
  %v2151 = vld [vmem:[%s2147 + $0x18] sm:$0xff]
  %v2152 = vld [vmem:[#allocation3] sm:$0xff]
  %v2153 = vpack.c.bf16 %v2152, %v2152
  %2154 = vmatprep.subr.bf16.mxu0 %v1600
  %2155 = vmatpush1.bf16.msra.mxu0 %v1599
  %2156 = vmatprep.subr.bf16.mxu0 %v1604
  %2157 = vmatpush1.bf16.msra.mxu0 %v1603
  %2158 = vmatprep.subr.bf16.mxu0 %v1608
  %2159 = vmatpush1.bf16.msra.mxu0 %v1607
  %2160 = vmatprep.subr.bf16.mxu0 %v1612
  %2161 = vmatpush1.bf16.msra.mxu0 %v1611
  %2162 = vmatprep.subr.bf16.mxu0 %v1616
  %2163 = vmatpush1.bf16.msra.mxu0 %v1615
  %2164 = vmatprep.subr.bf16.mxu0 %v1620
  %2165 = vmatpush1.bf16.msra.mxu0 %v1619
  %2166 = vmatprep.subr.bf16.mxu0 %v1624
  %2167 = vmatpush1.bf16.msra.mxu0 %v1623
  %2168 = vmatprep.subr.bf16.mxu0 %v1628
  %2169 = vmatpush1.bf16.msra.mxu0 %v1627
  %2170 = vmatprep.subr.bf16.mxu0 0
  %2171 = vmatpush1.bf16.msra.mxu0 0
  %2172 = vmatprep.subr.bf16.mxu0 0
  %2173 = vmatpush1.bf16.msra.mxu0 0
  %2174 = vmatprep.subr.bf16.mxu0 0
  %2175 = vmatpush1.bf16.msra.mxu0 0
  %2176 = vmatprep.subr.bf16.mxu0 0
  %2177 = vmatpush1.bf16.msra.mxu0 0
  %2178 = vmatprep.subr.bf16.mxu0 0
  %2179 = vmatpush1.bf16.msra.mxu0 0
  %2180 = vmatprep.subr.bf16.mxu0 0
  %2181 = vmatpush1.bf16.msra.mxu0 0
  %2182 = vmatprep.subr.bf16.mxu0 0
  %2183 = vmatpush1.bf16.msra.mxu0 0
  %2184 = vmatprep.subr.bf16.mxu0 0
  %2185 = vmatpush1.bf16.msra.mxu0 0
  %2186 = vmatprep.mubr.bf16.mxu0 0
  %2187 = vmatmul.mubr.bf16.gmra.mrb[0].mxu0 %v2153
  %v2188 = vpop.f32.mrb[0].mxu0
  %v2189 = vadd.f32 0.0, %v2188
  %v2190 = vpop.f32.mrb[0].mxu0
  %v2191 = vadd.f32 0.0, %v2190
  %v2192 = vpop.f32.mrb[0].mxu0
  %v2193 = vpop.f32.mrb[0].mxu0
  %2194 = vdwg.mxu0
  %2195 = vmatprep.subr.bf16.mxu0 %v1602
  %2196 = vmatpush1.bf16.msra.mxu0 %v1601
  %2197 = vmatprep.subr.bf16.mxu0 %v1606
  %2198 = vmatpush1.bf16.msra.mxu0 %v1605
  %2199 = vmatprep.subr.bf16.mxu0 %v1610
  %2200 = vmatpush1.bf16.msra.mxu0 %v1609
  %2201 = vmatprep.subr.bf16.mxu0 %v1614
  %2202 = vmatpush1.bf16.msra.mxu0 %v1613
  %2203 = vmatprep.subr.bf16.mxu0 %v1618
  %2204 = vmatpush1.bf16.msra.mxu0 %v1617
  %2205 = vmatprep.subr.bf16.mxu0 %v1622
  %2206 = vmatpush1.bf16.msra.mxu0 %v1621
  %2207 = vmatprep.subr.bf16.mxu0 %v1626
  %2208 = vmatpush1.bf16.msra.mxu0 %v1625
  %2209 = vmatprep.subr.bf16.mxu0 %v1630
  %2210 = vmatpush1.bf16.msra.mxu0 %v1629
  %2211 = vmatprep.subr.bf16.mxu0 0
  %2212 = vmatpush1.bf16.msra.mxu0 0
  %2213 = vmatprep.subr.bf16.mxu0 0
  %2214 = vmatpush1.bf16.msra.mxu0 0
  %2215 = vmatprep.subr.bf16.mxu0 0
  %2216 = vmatpush1.bf16.msra.mxu0 0
  %2217 = vmatprep.subr.bf16.mxu0 0
  %2218 = vmatpush1.bf16.msra.mxu0 0
  %2219 = vmatprep.subr.bf16.mxu0 0
  %2220 = vmatpush1.bf16.msra.mxu0 0
  %2221 = vmatprep.subr.bf16.mxu0 0
  %2222 = vmatpush1.bf16.msra.mxu0 0
  %2223 = vmatprep.subr.bf16.mxu0 0
  %2224 = vmatpush1.bf16.msra.mxu0 0
  %2225 = vmatprep.subr.bf16.mxu0 0
  %2226 = vmatpush1.bf16.msra.mxu0 0
  %2227 = vmatprep.mubr.bf16.mxu0 0
  %2228 = vmatmul.mubr.bf16.gmra.mrb[0].mxu0 %v2153
  %v2229 = vpop.f32.mrb[0].mxu0
  %v2230 = vadd.f32 0.0, %v2229
  %v2231 = vpop.f32.mrb[0].mxu0
  %v2232 = vadd.f32 0.0, %v2231
  %v2233 = vpop.f32.mrb[0].mxu0
  %v2234 = vpop.f32.mrb[0].mxu0
  %2235 = vdwg.mxu0
  %v2236 = vadd.f32 %v2148, %v2189
  %v2237 = vadd.f32 %v2149, %v2191
  %v2238 = vadd.f32 %v2150, %v2230
  %v2239 = vadd.f32 %v2151, %v2232
  %v2240 = vxor.u32 %v2236, 2147483648
  %v2241 = vmul.f32 %v2240, 1.442695
  %v2242 = vpow.pop %v2241
  %v2243 = vadd.f32 %v2242, 1.0
  %v2244 = vrcp.pop %v2243
  %v2245 = vmul.f32 1.0, %v2244
  %v2246 = vxor.u32 %v2237, 2147483648
  %v2247 = vmul.f32 %v2246, 1.442695
  %v2248 = vpow.pop %v2247
  %v2249 = vadd.f32 %v2248, 1.0
  %v2250 = vrcp.pop %v2249
  %v2251 = vmul.f32 1.0, %v2250
  %v2252 = vtanh.pop %v2238
  %v2253 = vxor.u32 %v2239, 2147483648
  %v2254 = vmul.f32 %v2253, 1.442695
  %v2255 = vpow.pop %v2254
  %v2256 = vadd.f32 %v2255, 1.0
  %v2257 = vrcp.pop %v2256
  %v2258 = vmul.f32 1.0, %v2257
  %v2259 = vld [vmem:[#allocation4] sm:$0xff]
  %v2260 = vmul.f32 %v2251, %v2259
  %v2261 = vmul.f32 %v2245, %v2252
  %v2262 = vadd.f32 %v2260, %v2261
  %v2263 = vtanh.pop %v2262
  %v2264 = vmul.f32 %v2258, %v2263
  %2265 = vst [vmem:[#allocation4] sm:$0xff] %v2262
  %2266 = vst [vmem:[#allocation3] sm:$0xff] %v2264
  %v2267 = vpack.c.bf16 %v2264, %v2264
  %s2268 = scalar_lea.vmem %s4, 16
  %2269 = vst [vmem:[%s2268] sm:$0xf] %v2267
  %s2270 = scalar_lea.vmem [#allocation2], 160
  %v2271 = vld [vmem:[%s2270] sm:$0xff]
  %v2272 = vld [vmem:[%s2270 + $0x8] sm:$0xff]
  %v2273 = vld [vmem:[%s2270 + $0x10] sm:$0xff]
  %v2274 = vld [vmem:[%s2270 + $0x18] sm:$0xff]
  %v2275 = vld [vmem:[#allocation3] sm:$0xff]
  %v2276 = vpack.c.bf16 %v2275, %v2275
  %2277 = vmatprep.subr.bf16.mxu0 %v1600
  %2278 = vmatpush1.bf16.msra.mxu0 %v1599
  %2279 = vmatprep.subr.bf16.mxu0 %v1604
  %2280 = vmatpush1.bf16.msra.mxu0 %v1603
  %2281 = vmatprep.subr.bf16.mxu0 %v1608
  %2282 = vmatpush1.bf16.msra.mxu0 %v1607
  %2283 = vmatprep.subr.bf16.mxu0 %v1612
  %2284 = vmatpush1.bf16.msra.mxu0 %v1611
  %2285 = vmatprep.subr.bf16.mxu0 %v1616
  %2286 = vmatpush1.bf16.msra.mxu0 %v1615
  %2287 = vmatprep.subr.bf16.mxu0 %v1620
  %2288 = vmatpush1.bf16.msra.mxu0 %v1619
  %2289 = vmatprep.subr.bf16.mxu0 %v1624
  %2290 = vmatpush1.bf16.msra.mxu0 %v1623
  %2291 = vmatprep.subr.bf16.mxu0 %v1628
  %2292 = vmatpush1.bf16.msra.mxu0 %v1627
  %2293 = vmatprep.subr.bf16.mxu0 0
  %2294 = vmatpush1.bf16.msra.mxu0 0
  %2295 = vmatprep.subr.bf16.mxu0 0
  %2296 = vmatpush1.bf16.msra.mxu0 0
  %2297 = vmatprep.subr.bf16.mxu0 0
  %2298 = vmatpush1.bf16.msra.mxu0 0
  %2299 = vmatprep.subr.bf16.mxu0 0
  %2300 = vmatpush1.bf16.msra.mxu0 0
  %2301 = vmatprep.subr.bf16.mxu0 0
  %2302 = vmatpush1.bf16.msra.mxu0 0
  %2303 = vmatprep.subr.bf16.mxu0 0
  %2304 = vmatpush1.bf16.msra.mxu0 0
  %2305 = vmatprep.subr.bf16.mxu0 0
  %2306 = vmatpush1.bf16.msra.mxu0 0
  %2307 = vmatprep.subr.bf16.mxu0 0
  %2308 = vmatpush1.bf16.msra.mxu0 0
  %2309 = vmatprep.mubr.bf16.mxu0 0
  %2310 = vmatmul.mubr.bf16.gmra.mrb[0].mxu0 %v2276
  %v2311 = vpop.f32.mrb[0].mxu0
  %v2312 = vadd.f32 0.0, %v2311
  %v2313 = vpop.f32.mrb[0].mxu0
  %v2314 = vadd.f32 0.0, %v2313
  %v2315 = vpop.f32.mrb[0].mxu0
  %v2316 = vpop.f32.mrb[0].mxu0
  %2317 = vdwg.mxu0
  %2318 = vmatprep.subr.bf16.mxu0 %v1602
  %2319 = vmatpush1.bf16.msra.mxu0 %v1601
  %2320 = vmatprep.subr.bf16.mxu0 %v1606
  %2321 = vmatpush1.bf16.msra.mxu0 %v1605
  %2322 = vmatprep.subr.bf16.mxu0 %v1610
  %2323 = vmatpush1.bf16.msra.mxu0 %v1609
  %2324 = vmatprep.subr.bf16.mxu0 %v1614
  %2325 = vmatpush1.bf16.msra.mxu0 %v1613
  %2326 = vmatprep.subr.bf16.mxu0 %v1618
  %2327 = vmatpush1.bf16.msra.mxu0 %v1617
  %2328 = vmatprep.subr.bf16.mxu0 %v1622
  %2329 = vmatpush1.bf16.msra.mxu0 %v1621
  %2330 = vmatprep.subr.bf16.mxu0 %v1626
  %2331 = vmatpush1.bf16.msra.mxu0 %v1625
  %2332 = vmatprep.subr.bf16.mxu0 %v1630
  %2333 = vmatpush1.bf16.msra.mxu0 %v1629
  %2334 = vmatprep.subr.bf16.mxu0 0
  %2335 = vmatpush1.bf16.msra.mxu0 0
  %2336 = vmatprep.subr.bf16.mxu0 0
  %2337 = vmatpush1.bf16.msra.mxu0 0
  %2338 = vmatprep.subr.bf16.mxu0 0
  %2339 = vmatpush1.bf16.msra.mxu0 0
  %2340 = vmatprep.subr.bf16.mxu0 0
  %2341 = vmatpush1.bf16.msra.mxu0 0
  %2342 = vmatprep.subr.bf16.mxu0 0
  %2343 = vmatpush1.bf16.msra.mxu0 0
  %2344 = vmatprep.subr.bf16.mxu0 0
  %2345 = vmatpush1.bf16.msra.mxu0 0
  %2346 = vmatprep.subr.bf16.mxu0 0
  %2347 = vmatpush1.bf16.msra.mxu0 0
  %2348 = vmatprep.subr.bf16.mxu0 0
  %2349 = vmatpush1.bf16.msra.mxu0 0
  %2350 = vmatprep.mubr.bf16.mxu0 0
  %2351 = vmatmul.mubr.bf16.gmra.mrb[0].mxu0 %v2276
  %v2352 = vpop.f32.mrb[0].mxu0
  %v2353 = vadd.f32 0.0, %v2352
  %v2354 = vpop.f32.mrb[0].mxu0
  %v2355 = vadd.f32 0.0, %v2354
  %v2356 = vpop.f32.mrb[0].mxu0
  %v2357 = vpop.f32.mrb[0].mxu0
  %2358 = vdwg.mxu0
  %v2359 = vadd.f32 %v2271, %v2312
  %v2360 = vadd.f32 %v2272, %v2314
  %v2361 = vadd.f32 %v2273, %v2353
  %v2362 = vadd.f32 %v2274, %v2355
  %v2363 = vxor.u32 %v2359, 2147483648
  %v2364 = vmul.f32 %v2363, 1.442695
  %v2365 = vpow.pop %v2364
  %v2366 = vadd.f32 %v2365, 1.0
  %v2367 = vrcp.pop %v2366
  %v2368 = vmul.f32 1.0, %v2367
  %v2369 = vxor.u32 %v2360, 2147483648
  %v2370 = vmul.f32 %v2369, 1.442695
  %v2371 = vpow.pop %v2370
  %v2372 = vadd.f32 %v2371, 1.0
  %v2373 = vrcp.pop %v2372
  %v2374 = vmul.f32 1.0, %v2373
  %v2375 = vtanh.pop %v2361
  %v2376 = vxor.u32 %v2362, 2147483648
  %v2377 = vmul.f32 %v2376, 1.442695
  %v2378 = vpow.pop %v2377
  %v2379 = vadd.f32 %v2378, 1.0
  %v2380 = vrcp.pop %v2379
  %v2381 = vmul.f32 1.0, %v2380
  %v2382 = vld [vmem:[#allocation4] sm:$0xff]
  %v2383 = vmul.f32 %v2374, %v2382
  %v2384 = vmul.f32 %v2368, %v2375
  %v2385 = vadd.f32 %v2383, %v2384
  %v2386 = vtanh.pop %v2385
  %v2387 = vmul.f32 %v2381, %v2386
  %2388 = vst [vmem:[#allocation4] sm:$0xff] %v2385
  %2389 = vst [vmem:[#allocation3] sm:$0xff] %v2387
  %v2390 = vpack.c.bf16 %v2387, %v2387
  %s2391 = scalar_lea.vmem %s4, 20
  %2392 = vst [vmem:[%s2391] sm:$0xf] %v2390
  %s2393 = scalar_lea.vmem [#allocation2], 192
  %v2394 = vld [vmem:[%s2393] sm:$0xff]
  %v2395 = vld [vmem:[%s2393 + $0x8] sm:$0xff]
  %v2396 = vld [vmem:[%s2393 + $0x10] sm:$0xff]
  %v2397 = vld [vmem:[%s2393 + $0x18] sm:$0xff]
  %v2398 = vld [vmem:[#allocation3] sm:$0xff]
  %v2399 = vpack.c.bf16 %v2398, %v2398
  %2400 = vmatprep.subr.bf16.mxu0 %v1600
  %2401 = vmatpush1.bf16.msra.mxu0 %v1599
  %2402 = vmatprep.subr.bf16.mxu0 %v1604
  %2403 = vmatpush1.bf16.msra.mxu0 %v1603
  %2404 = vmatprep.subr.bf16.mxu0 %v1608
  %2405 = vmatpush1.bf16.msra.mxu0 %v1607
  %2406 = vmatprep.subr.bf16.mxu0 %v1612
  %2407 = vmatpush1.bf16.msra.mxu0 %v1611
  %2408 = vmatprep.subr.bf16.mxu0 %v1616
  %2409 = vmatpush1.bf16.msra.mxu0 %v1615
  %2410 = vmatprep.subr.bf16.mxu0 %v1620
  %2411 = vmatpush1.bf16.msra.mxu0 %v1619
  %2412 = vmatprep.subr.bf16.mxu0 %v1624
  %2413 = vmatpush1.bf16.msra.mxu0 %v1623
  %2414 = vmatprep.subr.bf16.mxu0 %v1628
  %2415 = vmatpush1.bf16.msra.mxu0 %v1627
  %2416 = vmatprep.subr.bf16.mxu0 0
  %2417 = vmatpush1.bf16.msra.mxu0 0
  %2418 = vmatprep.subr.bf16.mxu0 0
  %2419 = vmatpush1.bf16.msra.mxu0 0
  %2420 = vmatprep.subr.bf16.mxu0 0
  %2421 = vmatpush1.bf16.msra.mxu0 0
  %2422 = vmatprep.subr.bf16.mxu0 0
  %2423 = vmatpush1.bf16.msra.mxu0 0
  %2424 = vmatprep.subr.bf16.mxu0 0
  %2425 = vmatpush1.bf16.msra.mxu0 0
  %2426 = vmatprep.subr.bf16.mxu0 0
  %2427 = vmatpush1.bf16.msra.mxu0 0
  %2428 = vmatprep.subr.bf16.mxu0 0
  %2429 = vmatpush1.bf16.msra.mxu0 0
  %2430 = vmatprep.subr.bf16.mxu0 0
  %2431 = vmatpush1.bf16.msra.mxu0 0
  %2432 = vmatprep.mubr.bf16.mxu0 0
  %2433 = vmatmul.mubr.bf16.gmra.mrb[0].mxu0 %v2399
  %v2434 = vpop.f32.mrb[0].mxu0
  %v2435 = vadd.f32 0.0, %v2434
  %v2436 = vpop.f32.mrb[0].mxu0
  %v2437 = vadd.f32 0.0, %v2436
  %v2438 = vpop.f32.mrb[0].mxu0
  %v2439 = vpop.f32.mrb[0].mxu0
  %2440 = vdwg.mxu0
  %2441 = vmatprep.subr.bf16.mxu0 %v1602
  %2442 = vmatpush1.bf16.msra.mxu0 %v1601
  %2443 = vmatprep.subr.bf16.mxu0 %v1606
  %2444 = vmatpush1.bf16.msra.mxu0 %v1605
  %2445 = vmatprep.subr.bf16.mxu0 %v1610
  %2446 = vmatpush1.bf16.msra.mxu0 %v1609
  %2447 = vmatprep.subr.bf16.mxu0 %v1614
  %2448 = vmatpush1.bf16.msra.mxu0 %v1613
  %2449 = vmatprep.subr.bf16.mxu0 %v1618
  %2450 = vmatpush1.bf16.msra.mxu0 %v1617
  %2451 = vmatprep.subr.bf16.mxu0 %v1622
  %2452 = vmatpush1.bf16.msra.mxu0 %v1621
  %2453 = vmatprep.subr.bf16.mxu0 %v1626
  %2454 = vmatpush1.bf16.msra.mxu0 %v1625
  %2455 = vmatprep.subr.bf16.mxu0 %v1630
  %2456 = vmatpush1.bf16.msra.mxu0 %v1629
  %2457 = vmatprep.subr.bf16.mxu0 0
  %2458 = vmatpush1.bf16.msra.mxu0 0
  %2459 = vmatprep.subr.bf16.mxu0 0
  %2460 = vmatpush1.bf16.msra.mxu0 0
  %2461 = vmatprep.subr.bf16.mxu0 0
  %2462 = vmatpush1.bf16.msra.mxu0 0
  %2463 = vmatprep.subr.bf16.mxu0 0
  %2464 = vmatpush1.bf16.msra.mxu0 0
  %2465 = vmatprep.subr.bf16.mxu0 0
  %2466 = vmatpush1.bf16.msra.mxu0 0
  %2467 = vmatprep.subr.bf16.mxu0 0
  %2468 = vmatpush1.bf16.msra.mxu0 0
  %2469 = vmatprep.subr.bf16.mxu0 0
  %2470 = vmatpush1.bf16.msra.mxu0 0
  %2471 = vmatprep.subr.bf16.mxu0 0
  %2472 = vmatpush1.bf16.msra.mxu0 0
  %2473 = vmatprep.mubr.bf16.mxu0 0
  %2474 = vmatmul.mubr.bf16.gmra.mrb[0].mxu0 %v2399
  %v2475 = vpop.f32.mrb[0].mxu0
  %v2476 = vadd.f32 0.0, %v2475
  %v2477 = vpop.f32.mrb[0].mxu0
  %v2478 = vadd.f32 0.0, %v2477
  %v2479 = vpop.f32.mrb[0].mxu0
  %v2480 = vpop.f32.mrb[0].mxu0
  %2481 = vdwg.mxu0
  %v2482 = vadd.f32 %v2394, %v2435
  %v2483 = vadd.f32 %v2395, %v2437
  %v2484 = vadd.f32 %v2396, %v2476
  %v2485 = vadd.f32 %v2397, %v2478
  %v2486 = vxor.u32 %v2482, 2147483648
  %v2487 = vmul.f32 %v2486, 1.442695
  %v2488 = vpow.pop %v2487
  %v2489 = vadd.f32 %v2488, 1.0
  %v2490 = vrcp.pop %v2489
  %v2491 = vmul.f32 1.0, %v2490
  %v2492 = vxor.u32 %v2483, 2147483648
  %v2493 = vmul.f32 %v2492, 1.442695
  %v2494 = vpow.pop %v2493
  %v2495 = vadd.f32 %v2494, 1.0
  %v2496 = vrcp.pop %v2495
  %v2497 = vmul.f32 1.0, %v2496
  %v2498 = vtanh.pop %v2484
  %v2499 = vxor.u32 %v2485, 2147483648
  %v2500 = vmul.f32 %v2499, 1.442695
  %v2501 = vpow.pop %v2500
  %v2502 = vadd.f32 %v2501, 1.0
  %v2503 = vrcp.pop %v2502
  %v2504 = vmul.f32 1.0, %v2503
  %v2505 = vld [vmem:[#allocation4] sm:$0xff]
  %v2506 = vmul.f32 %v2497, %v2505
  %v2507 = vmul.f32 %v2491, %v2498
  %v2508 = vadd.f32 %v2506, %v2507
  %v2509 = vtanh.pop %v2508
  %v2510 = vmul.f32 %v2504, %v2509
  %2511 = vst [vmem:[#allocation4] sm:$0xff] %v2508
  %2512 = vst [vmem:[#allocation3] sm:$0xff] %v2510
  %v2513 = vpack.c.bf16 %v2510, %v2510
  %s2514 = scalar_lea.vmem %s4, 24
  %2515 = vst [vmem:[%s2514] sm:$0xf] %v2513
  %s2516 = scalar_lea.vmem [#allocation2], 224
  %v2517 = vld [vmem:[%s2516] sm:$0xff]
  %v2518 = vld [vmem:[%s2516 + $0x8] sm:$0xff]
  %v2519 = vld [vmem:[%s2516 + $0x10] sm:$0xff]
  %v2520 = vld [vmem:[%s2516 + $0x18] sm:$0xff]
  %v2521 = vld [vmem:[#allocation3] sm:$0xff]
  %v2522 = vpack.c.bf16 %v2521, %v2521
  %2523 = vmatprep.subr.bf16.mxu0 %v1600
  %2524 = vmatpush1.bf16.msra.mxu0 %v1599
  %2525 = vmatprep.subr.bf16.mxu0 %v1604
  %2526 = vmatpush1.bf16.msra.mxu0 %v1603
  %2527 = vmatprep.subr.bf16.mxu0 %v1608
  %2528 = vmatpush1.bf16.msra.mxu0 %v1607
  %2529 = vmatprep.subr.bf16.mxu0 %v1612
  %2530 = vmatpush1.bf16.msra.mxu0 %v1611
  %2531 = vmatprep.subr.bf16.mxu0 %v1616
  %2532 = vmatpush1.bf16.msra.mxu0 %v1615
  %2533 = vmatprep.subr.bf16.mxu0 %v1620
  %2534 = vmatpush1.bf16.msra.mxu0 %v1619
  %2535 = vmatprep.subr.bf16.mxu0 %v1624
  %2536 = vmatpush1.bf16.msra.mxu0 %v1623
  %2537 = vmatprep.subr.bf16.mxu0 %v1628
  %2538 = vmatpush1.bf16.msra.mxu0 %v1627
  %2539 = vmatprep.subr.bf16.mxu0 0
  %2540 = vmatpush1.bf16.msra.mxu0 0
  %2541 = vmatprep.subr.bf16.mxu0 0
  %2542 = vmatpush1.bf16.msra.mxu0 0
  %2543 = vmatprep.subr.bf16.mxu0 0
  %2544 = vmatpush1.bf16.msra.mxu0 0
  %2545 = vmatprep.subr.bf16.mxu0 0
  %2546 = vmatpush1.bf16.msra.mxu0 0
  %2547 = vmatprep.subr.bf16.mxu0 0
  %2548 = vmatpush1.bf16.msra.mxu0 0
  %2549 = vmatprep.subr.bf16.mxu0 0
  %2550 = vmatpush1.bf16.msra.mxu0 0
  %2551 = vmatprep.subr.bf16.mxu0 0
  %2552 = vmatpush1.bf16.msra.mxu0 0
  %2553 = vmatprep.subr.bf16.mxu0 0
  %2554 = vmatpush1.bf16.msra.mxu0 0
  %2555 = vmatprep.mubr.bf16.mxu0 0
  %2556 = vmatmul.mubr.bf16.gmra.mrb[0].mxu0 %v2522
  %v2557 = vpop.f32.mrb[0].mxu0
  %v2558 = vadd.f32 0.0, %v2557
  %v2559 = vpop.f32.mrb[0].mxu0
  %v2560 = vadd.f32 0.0, %v2559
  %v2561 = vpop.f32.mrb[0].mxu0
  %v2562 = vpop.f32.mrb[0].mxu0
  %2563 = vdwg.mxu0
  %2564 = vmatprep.subr.bf16.mxu0 %v1602
  %2565 = vmatpush1.bf16.msra.mxu0 %v1601
  %2566 = vmatprep.subr.bf16.mxu0 %v1606
  %2567 = vmatpush1.bf16.msra.mxu0 %v1605
  %2568 = vmatprep.subr.bf16.mxu0 %v1610
  %2569 = vmatpush1.bf16.msra.mxu0 %v1609
  %2570 = vmatprep.subr.bf16.mxu0 %v1614
  %2571 = vmatpush1.bf16.msra.mxu0 %v1613
  %2572 = vmatprep.subr.bf16.mxu0 %v1618
  %2573 = vmatpush1.bf16.msra.mxu0 %v1617
  %2574 = vmatprep.subr.bf16.mxu0 %v1622
  %2575 = vmatpush1.bf16.msra.mxu0 %v1621
  %2576 = vmatprep.subr.bf16.mxu0 %v1626
  %2577 = vmatpush1.bf16.msra.mxu0 %v1625
  %2578 = vmatprep.subr.bf16.mxu0 %v1630
  %2579 = vmatpush1.bf16.msra.mxu0 %v1629
  %2580 = vmatprep.subr.bf16.mxu0 0
  %2581 = vmatpush1.bf16.msra.mxu0 0
  %2582 = vmatprep.subr.bf16.mxu0 0
  %2583 = vmatpush1.bf16.msra.mxu0 0
  %2584 = vmatprep.subr.bf16.mxu0 0
  %2585 = vmatpush1.bf16.msra.mxu0 0
  %2586 = vmatprep.subr.bf16.mxu0 0
  %2587 = vmatpush1.bf16.msra.mxu0 0
  %2588 = vmatprep.subr.bf16.mxu0 0
  %2589 = vmatpush1.bf16.msra.mxu0 0
  %2590 = vmatprep.subr.bf16.mxu0 0
  %2591 = vmatpush1.bf16.msra.mxu0 0
  %2592 = vmatprep.subr.bf16.mxu0 0
  %2593 = vmatpush1.bf16.msra.mxu0 0
  %2594 = vmatprep.subr.bf16.mxu0 0
  %2595 = vmatpush1.bf16.msra.mxu0 0
  %2596 = vmatprep.mubr.bf16.mxu0 0
  %2597 = vmatmul.mubr.bf16.gmra.mrb[0].mxu0 %v2522
  %v2598 = vpop.f32.mrb[0].mxu0
  %v2599 = vadd.f32 0.0, %v2598
  %v2600 = vpop.f32.mrb[0].mxu0
  %v2601 = vadd.f32 0.0, %v2600
  %v2602 = vpop.f32.mrb[0].mxu0
  %v2603 = vpop.f32.mrb[0].mxu0
  %2604 = vdwg.mxu0
  %v2605 = vadd.f32 %v2517, %v2558
  %v2606 = vadd.f32 %v2518, %v2560
  %v2607 = vadd.f32 %v2519, %v2599
  %v2608 = vadd.f32 %v2520, %v2601
  %v2609 = vxor.u32 %v2605, 2147483648
  %v2610 = vmul.f32 %v2609, 1.442695
  %v2611 = vpow.pop %v2610
  %v2612 = vadd.f32 %v2611, 1.0
  %v2613 = vrcp.pop %v2612
  %v2614 = vmul.f32 1.0, %v2613
  %v2615 = vxor.u32 %v2606, 2147483648
  %v2616 = vmul.f32 %v2615, 1.442695
  %v2617 = vpow.pop %v2616
  %v2618 = vadd.f32 %v2617, 1.0
  %v2619 = vrcp.pop %v2618
  %v2620 = vmul.f32 1.0, %v2619
  %v2621 = vtanh.pop %v2607
  %v2622 = vxor.u32 %v2608, 2147483648
  %v2623 = vmul.f32 %v2622, 1.442695
  %v2624 = vpow.pop %v2623
  %v2625 = vadd.f32 %v2624, 1.0
  %v2626 = vrcp.pop %v2625
  %v2627 = vmul.f32 1.0, %v2626
  %v2628 = vld [vmem:[#allocation4] sm:$0xff]
  %v2629 = vmul.f32 %v2620, %v2628
  %v2630 = vmul.f32 %v2614, %v2621
  %v2631 = vadd.f32 %v2629, %v2630
  %v2632 = vtanh.pop %v2631
  %v2633 = vmul.f32 %v2627, %v2632
  %2634 = vst [vmem:[#allocation4] sm:$0xff] %v2631
  %2635 = vst [vmem:[#allocation3] sm:$0xff] %v2633
  %v2636 = vpack.c.bf16 %v2633, %v2633
  %s2637 = scalar_lea.vmem %s4, 28
  %2638 = vst [vmem:[%s2637] sm:$0xf] %v2636
  // Predicated region
  $region18: #{eernn_forward.2} parent=0 // pred_check
    _
  $region19: #{eernn_forward.2} parent=0 // pred_check_branch
    %2640 = sbr.rel (0) target = $region21
  $region20: #{eernn_forward.2} parent=0 // pred_region
    _
  $region21: #{eernn_forward.2} parent=0 // pred_fallthru
    _
  // Predicated region
  $region22: #{eernn_forward.2} parent=0 // pred_check
    _
  $region23: #{eernn_forward.2} parent=0 // pred_check_branch
    %2642 = sbr.rel (0) target = $region25
  $region24: #{eernn_forward.2} parent=0 // pred_region
    _
  $region25: #{eernn_forward.2} parent=0 // pred_fallthru
    _

</llo_original>
